<compile_context>
chip_gen: v5e
topology: v5e:2x2
jax: 0.10.0
libtpu: 0.0.40
codegen_flags: <defaults>
</compile_context>

<pallas_src>
import functools

import jax
import jax.numpy as jnp
from jax.experimental import pallas as pl
from jax.experimental.pallas import tpu as pltpu


_LANES = 128


def _pick_tile_p(P, C, F, in_bytes, requested, vmem_budget_bytes):
    """Pick a lane-dense spatial tile that fits the per-generation VMEM budget."""
    # Per-column (per spatial position) VMEM footprint inside one grid step:
    per_col = (
        2 * 2 * C * in_bytes       # two streams x double-buffered input blocks
        + 2 * C * (in_bytes + 2)   # in-kernel (2C, tP) stack + bf16 copy
        + F * 4                    # transient (F, tP) f32 ReLU intermediate
    )
    # Fixed-size residents: (F, 128) f32 accumulator output block (x2 bufs)
    # and the tiny block-diagonal weight (x2 bufs).
    fixed = 2 * F * _LANES * 4 + 2 * F * 2 * C * 2
    budget_cols = max((vmem_budget_bytes - fixed) // per_col, _LANES)

    tp = min(int(requested), int(budget_cols))
    if P % _LANES == 0:
        cap = P
    elif P > _LANES:
        cap = (P // _LANES) * _LANES        # ragged tail handled by in-kernel mask
    else:
        return P                            # tiny-P: single full-extent block
    tp = min(tp, cap)
    tp = max((tp // _LANES) * _LANES, _LANES)
    return tp


def _fused_backbone_pool_kernel(s_ref, t_ref, w_ref, acc_ref, *, true_p, tile_p):
    """Grid = (batch, P-tiles); the P-tile axis is the reduction axis.

    s_ref, t_ref : (C, tP)        activations, channels-first, lane-dense tile
    w_ref        : (Fs+Ft, 2C)    bf16 block-diagonal fused backbone weight
    acc_ref      : (Fs+Ft, 128)   f32 lane-dense pooled-sum accumulator (output)
    """
    p = pl.program_id(1)

    @pl.when(p == 0)
    def _init():
        acc_ref[...] = jnp.zeros_like(acc_ref)

    # Stack the two stream tiles along sublanes -> one (2C, tP) tile in VMEM.
    xs = s_ref[...]
    xt = t_ref[...]
    if xs.dtype != jnp.bfloat16:
        xs = xs.astype(jnp.bfloat16)
        xt = xt.astype(jnp.bfloat16)
    x = jnp.concatenate([xs, xt], axis=0)                       # (2C, tP)

    # Mask the ragged P tail in-kernel (only emitted if P % tP != 0) instead
    # of an HBM padding pass in the wrapper.  Bias-free conv + ReLU => zeroed
    # columns add nothing to the pooled sum.
    if true_p % tile_p != 0:
        valid = true_p - p * tile_p
        lane = jax.lax.broadcasted_iota(jnp.int32, x.shape, dimension=1)
        x = jnp.where(lane < valid, x, jnp.zeros_like(x))

    # One fused block-diagonal MXU matmul covers both streams: (F, tP) f32.
    feat = jnp.maximum(
        jnp.dot(w_ref[...], x, preferred_element_type=jnp.float32), 0.0)

    f = feat.shape[0]
    if tile_p % _LANES == 0:
        # Two-stage reduction, stage 1: vreg-aligned lane-group partial sums
        # (pure VPU adds; no per-step XLU cross-lane reduce).
        partial = feat[:, 0:_LANES]
        for g in range(1, tile_p // _LANES):
            partial = partial + feat[:, g * _LANES:(g + 1) * _LANES]
        acc_ref[...] += partial
    else:
        # Tiny-P fallback (tile narrower than one lane group).
        pad = jnp.zeros((f, _LANES - tile_p), feat.dtype)
        acc_ref[...] += jnp.concatenate([feat, pad], axis=-1)


def two_stream_stack_fuse(spacial_input, temporal_input,
                          w_spacial, w_temporal, fc_w, fc_b,
                          *, tile_p=8192, vmem_budget_bytes=28 * 1024 * 1024):
    """spacial_input / temporal_input : (N, C, D, H, W)  (PyTorch layout)
    w_spacial : (C, Fs)   w_temporal : (C, Ft)
    fc_w      : (Fs+Ft, K)   fc_b    : (K,)
    returns   : (N, K) logits
    """
    N, C, D, H, W = spacial_input.shape
    P = D * H * W
    Fs = w_spacial.shape[1]
    Ft = w_temporal.shape[1]
    F = Fs + Ft
    in_bytes = jnp.dtype(spacial_input.dtype).itemsize

    tP = _pick_tile_p(P, C, F, in_bytes, tile_p, vmem_budget_bytes)
    n_p = pl.cdiv(P, tP)

    # NCDHW -> (N, C, P): a free reshape; no transpose / cast / pad HBM pass.
    s_ncp = spacial_input.reshape(N, C, P)
    t_ncp = temporal_input.reshape(N, C, P)

    # Block-diagonal fused backbone weight (tiny; built once in XLA):
    #   [ wsT  0  ]
    #   [  0  wtT ]
    w_bd = jnp.zeros((F, 2 * C), dtype=jnp.bfloat16)
    w_bd = w_bd.at[:Fs, :C].set(w_spacial.T.astype(jnp.bfloat16))
    w_bd = w_bd.at[Fs:, C:].set(w_temporal.T.astype(jnp.bfloat16))

    kernel = functools.partial(_fused_backbone_pool_kernel,
                               true_p=P, tile_p=tP)

    # NOTE: the weight block is constant across the grid; it is only ~4 KB so
    # the default double buffer is negligible (pl.Buffered(1) not needed).
    partial_sums = pl.pallas_call(
        kernel,
        out_shape=jax.ShapeDtypeStruct((N, F, _LANES), jnp.float32),
        grid=(N, n_p),
        in_specs=[
            pl.BlockSpec((None, C, tP), lambda n, p: (n, 0, p)),   # spacial tile
            pl.BlockSpec((None, C, tP), lambda n, p: (n, 0, p)),   # temporal tile
            pl.BlockSpec((F, 2 * C), lambda n, p: (0, 0)),         # fused weight
        ],
        out_specs=pl.BlockSpec((None, F, _LANES), lambda n, p: (n, 0, 0)),
        compiler_params=pltpu.CompilerParams(
            dimension_semantics=("parallel", "arbitrary"),
            vmem_limit_bytes=48 * 1024 * 1024),
    )(s_ncp, t_ncp, w_bd)

    # Two-stage reduction, stage 2 (tiny XLA ops): 128 -> 1 lane reduce, with
    # AdaptiveAvgPool3d's division by P folded into the fc weight.
    pooled_sum = partial_sums.sum(axis=-1)                       # (N, Fs+Ft)
    return pooled_sum @ (fc_w * (1.0 / float(P))) + fc_b


def _reference(spacial_input, temporal_input, w_spacial, w_temporal, fc_w, fc_b):
    """Pure-JAX f32 reference of the (intended) forward pass."""
    def backbone(x, w):
        xl = jnp.transpose(x, (0, 2, 3, 4, 1))                   # N D H W C
        return jnp.maximum(jnp.einsum('ndhwc,cf->ndhwf', xl, w), 0.0)

    fs = backbone(spacial_input, w_spacial)
    ft = backbone(temporal_input, w_temporal)
    cat = jnp.concatenate([fs, ft], axis=-1)                     # N D H W (Fs+Ft)
    pooled = jnp.mean(cat, axis=(1, 2, 3))                       # N, Fs+Ft
    return pooled @ fc_w + fc_b


if __name__ == "__main__":
    # Small shapes consistent with the module: batch=2, in-channels=4,
    # clip depth=8, spatial 16x16 (P = 2048 -> one lane-dense 2048 tile),
    # backbone feature dims Fs=Ft=128 (stand-ins for r3d_18's 512),
    # num_classes=8.
    N, C, D, H, W = 2, 4, 8, 16, 16
    Fs, Ft, K = 128, 128, 8

    key = jax.random.PRNGKey(0)
    ks = jax.random.split(key, 6)
    spacial = jax.random.normal(ks[0], (N, C, D, H, W), dtype=jnp.float32)
    temporal = jax.random.normal(ks[1], (N, C, D, H, W), dtype=jnp.float32)
    w_spacial = 0.1 * jax.random.normal(ks[2], (C, Fs), dtype=jnp.float32)
    w_temporal = 0.1 * jax.random.normal(ks[3], (C, Ft), dtype=jnp.float32)
    fc_w = 0.1 * jax.random.normal(ks[4], (Fs + Ft, K), dtype=jnp.float32)
    fc_b = 0.1 * jax.random.normal(ks[5], (K,), dtype=jnp.float32)

    out = two_stream_stack_fuse(spacial, temporal, w_spacial, w_temporal,
                                fc_w, fc_b, tile_p=8192)
    out = jax.block_until_ready(out)

    ref = _reference(spacial, temporal, w_spacial, w_temporal, fc_w, fc_b)
    assert out.shape == (N, K)
    # bf16 backbone matmul in the kernel vs f32 reference -> modest tolerance.
    assert jnp.allclose(out, ref, rtol=1e-2, atol=1e-2), (out, ref)

    print("KERNEL_OK")
</pallas_src>

<mosaic_0001>
module attributes {stable_mosaic.version = 11 : i64} {
  func.func @_fused_backbone_pool_kernel(%arg0: i32, %arg1: i32, %arg2: memref<1x4x2048xf32, #tpu.memory_space<vmem>>, %arg3: memref<1x4x2048xf32, #tpu.memory_space<vmem>>, %arg4: memref<256x8xbf16, #tpu.memory_space<vmem>>, %arg5: memref<1x256x128xf32, #tpu.memory_space<vmem>>) attributes {dimension_semantics = [#tpu.dimension_semantics<parallel>, #tpu.dimension_semantics<arbitrary>], iteration_bounds = array<i64: 2, 1>, scalar_prefetch = 0 : i64, scratch_operands = 0 : i64, tpu.core_type = #tpu.core_type<tc>, window_params = [{transform_indices = @transform_0, window_bounds = array<i64: 1, 4, 2048>}, {transform_indices = @transform_1, window_bounds = array<i64: 1, 4, 2048>}, {pipeline_mode = #tpu.pipeline_mode<synchronous>, transform_indices = @transform_2, window_bounds = array<i64: 256, 8>}, {transform_indices = @transform_3, window_bounds = array<i64: 1, 256, 128>}]} {
    %c0_i32 = arith.constant 0 : i32
    %0 = arith.cmpi eq, %arg1, %c0_i32 : i32
    %1 = arith.extui %0 : i1 to i32
    %c0_i32_0 = arith.constant 0 : i32
    %2 = arith.cmpi ne, %1, %c0_i32_0 : i32
    scf.if %2 {
      %cst_15 = arith.constant 0.000000e+00 : f32
      %51 = vector.broadcast %cst_15 : f32 to vector<256x128xf32>
      %c0_16 = arith.constant 0 : index
      %c0_17 = arith.constant 0 : index
      %c0_18 = arith.constant 0 : index
      %52 = vector.load %arg5[%c0_16, %c0_17, %c0_18] : memref<1x256x128xf32, #tpu.memory_space<vmem>>, vector<1x256x128xf32>
      %53 = vector.shape_cast %52 : vector<1x256x128xf32> to vector<256x128xf32>
      %54 = vector.shape_cast %51 : vector<256x128xf32> to vector<1x256x128xf32>
      tpu.vector_store %arg5[%c0_16, %c0_17, %c0_18], %54 {strides = array<i32>} : memref<1x256x128xf32, #tpu.memory_space<vmem>>, vector<1x256x128xf32>,
    } else {
    }
    %c0 = arith.constant 0 : index
    %c0_1 = arith.constant 0 : index
    %c0_2 = arith.constant 0 : index
    %3 = vector.load %arg2[%c0, %c0_1, %c0_2] : memref<1x4x2048xf32, #tpu.memory_space<vmem>>, vector<1x4x2048xf32>
    %4 = vector.shape_cast %3 : vector<1x4x2048xf32> to vector<4x2048xf32>
    %c0_3 = arith.constant 0 : index
    %c0_4 = arith.constant 0 : index
    %c0_5 = arith.constant 0 : index
    %5 = vector.load %arg3[%c0_3, %c0_4, %c0_5] : memref<1x4x2048xf32, #tpu.memory_space<vmem>>, vector<1x4x2048xf32>
    %6 = vector.shape_cast %5 : vector<1x4x2048xf32> to vector<4x2048xf32>
    %7 = arith.truncf %4 : vector<4x2048xf32> to vector<4x2048xbf16>
    %8 = arith.truncf %6 : vector<4x2048xf32> to vector<4x2048xbf16>
    %9 = tpu.concatenate %7, %8 in 0 : vector<4x2048xbf16>, vector<4x2048xbf16> -> vector<8x2048xbf16>
    %c0_6 = arith.constant 0 : index
    %c0_7 = arith.constant 0 : index
    %10 = vector.load %arg4[%c0_6, %c0_7] : memref<256x8xbf16, #tpu.memory_space<vmem>>, vector<256x8xbf16>
    %cst = arith.constant dense<0.000000e+00> : vector<256x2048xf32>
    %11 = tpu.matmul %10, %9, %cst {dimension_numbers = #tpu.dot_dimension_numbers<[1], [0], [0], [1], [0, 0, 1, 1], [], []>} : vector<256x8xbf16>, vector<8x2048xbf16>, vector<256x2048xf32> -> vector<256x2048xf32>
    %cst_8 = arith.constant 0.000000e+00 : f32
    %12 = vector.broadcast %cst_8 : f32 to vector<256x2048xf32>
    %13 = arith.maximumf %11, %12 : vector<256x2048xf32>
    %14 = vector.extract_strided_slice %13 {offsets = [0, 0], sizes = [256, 128], strides = [1, 1]} : vector<256x2048xf32> to vector<256x128xf32>
    %15 = vector.extract_strided_slice %13 {offsets = [0, 128], sizes = [256, 128], strides = [1, 1]} : vector<256x2048xf32> to vector<256x128xf32>
    %16 = arith.addf %14, %15 : vector<256x128xf32>
    %17 = vector.extract_strided_slice %13 {offsets = [0, 256], sizes = [256, 128], strides = [1, 1]} : vector<256x2048xf32> to vector<256x128xf32>
    %18 = arith.addf %16, %17 : vector<256x128xf32>
    %19 = vector.extract_strided_slice %13 {offsets = [0, 384], sizes = [256, 128], strides = [1, 1]} : vector<256x2048xf32> to vector<256x128xf32>
    %20 = arith.addf %18, %19 : vector<256x128xf32>
    %21 = vector.extract_strided_slice %13 {offsets = [0, 512], sizes = [256, 128], strides = [1, 1]} : vector<256x2048xf32> to vector<256x128xf32>
    %22 = arith.addf %20, %21 : vector<256x128xf32>
    %23 = vector.extract_strided_slice %13 {offsets = [0, 640], sizes = [256, 128], strides = [1, 1]} : vector<256x2048xf32> to vector<256x128xf32>
    %24 = arith.addf %22, %23 : vector<256x128xf32>
    %25 = vector.extract_strided_slice %13 {offsets = [0, 768], sizes = [256, 128], strides = [1, 1]} : vector<256x2048xf32> to vector<256x128xf32>
    %26 = arith.addf %24, %25 : vector<256x128xf32>
    %27 = vector.extract_strided_slice %13 {offsets = [0, 896], sizes = [256, 128], strides = [1, 1]} : vector<256x2048xf32> to vector<256x128xf32>
    %28 = arith.addf %26, %27 : vector<256x128xf32>
    %29 = vector.extract_strided_slice %13 {offsets = [0, 1024], sizes = [256, 128], strides = [1, 1]} : vector<256x2048xf32> to vector<256x128xf32>
    %30 = arith.addf %28, %29 : vector<256x128xf32>
    %31 = vector.extract_strided_slice %13 {offsets = [0, 1152], sizes = [256, 128], strides = [1, 1]} : vector<256x2048xf32> to vector<256x128xf32>
    %32 = arith.addf %30, %31 : vector<256x128xf32>
    %33 = vector.extract_strided_slice %13 {offsets = [0, 1280], sizes = [256, 128], strides = [1, 1]} : vector<256x2048xf32> to vector<256x128xf32>
    %34 = arith.addf %32, %33 : vector<256x128xf32>
    %35 = vector.extract_strided_slice %13 {offsets = [0, 1408], sizes = [256, 128], strides = [1, 1]} : vector<256x2048xf32> to vector<256x128xf32>
    %36 = arith.addf %34, %35 : vector<256x128xf32>
    %37 = vector.extract_strided_slice %13 {offsets = [0, 1536], sizes = [256, 128], strides = [1, 1]} : vector<256x2048xf32> to vector<256x128xf32>
    %38 = arith.addf %36, %37 : vector<256x128xf32>
    %39 = vector.extract_strided_slice %13 {offsets = [0, 1664], sizes = [256, 128], strides = [1, 1]} : vector<256x2048xf32> to vector<256x128xf32>
    %40 = arith.addf %38, %39 : vector<256x128xf32>
    %41 = vector.extract_strided_slice %13 {offsets = [0, 1792], sizes = [256, 128], strides = [1, 1]} : vector<256x2048xf32> to vector<256x128xf32>
    %42 = arith.addf %40, %41 : vector<256x128xf32>
    %43 = vector.extract_strided_slice %13 {offsets = [0, 1920], sizes = [256, 128], strides = [1, 1]} : vector<256x2048xf32> to vector<256x128xf32>
    %44 = arith.addf %42, %43 : vector<256x128xf32>
    %c0_9 = arith.constant 0 : index
    %c0_10 = arith.constant 0 : index
    %c0_11 = arith.constant 0 : index
    %45 = vector.load %arg5[%c0_9, %c0_10, %c0_11] : memref<1x256x128xf32, #tpu.memory_space<vmem>>, vector<1x256x128xf32>
    %46 = vector.shape_cast %45 : vector<1x256x128xf32> to vector<256x128xf32>
    %47 = arith.addf %46, %44 : vector<256x128xf32>
    %c0_12 = arith.constant 0 : index
    %c0_13 = arith.constant 0 : index
    %c0_14 = arith.constant 0 : index
    %48 = vector.load %arg5[%c0_12, %c0_13, %c0_14] : memref<1x256x128xf32, #tpu.memory_space<vmem>>, vector<1x256x128xf32>
    %49 = vector.shape_cast %48 : vector<1x256x128xf32> to vector<256x128xf32>
    %50 = vector.shape_cast %47 : vector<256x128xf32> to vector<1x256x128xf32>
    tpu.vector_store %arg5[%c0_12, %c0_13, %c0_14], %50 {strides = array<i32>} : memref<1x256x128xf32, #tpu.memory_space<vmem>>, vector<1x256x128xf32>,
    return
  }
  func.func @transform_0(%arg0: i32, %arg1: i32) -> (i32, i32, i32) {
    %c0_i32 = arith.constant 0 : i32
    %c0_i32_0 = arith.constant 0 : i32
    return %arg0, %c0_i32, %arg1 : i32, i32, i32
  }
  func.func @transform_1(%arg0: i32, %arg1: i32) -> (i32, i32, i32) {
    %c0_i32 = arith.constant 0 : i32
    %c0_i32_0 = arith.constant 0 : i32
    return %arg0, %c0_i32, %arg1 : i32, i32, i32
  }
  func.func @transform_2(%arg0: i32, %arg1: i32) -> (i32, i32) {
    %c0_i32 = arith.constant 0 : i32
    %c0_i32_0 = arith.constant 0 : i32
    %c0_i32_1 = arith.constant 0 : i32
    return %c0_i32, %c0_i32_0 : i32, i32
  }
  func.func @transform_3(%arg0: i32, %arg1: i32) -> (i32, i32, i32) {
    %c0_i32 = arith.constant 0 : i32
    %c0_i32_0 = arith.constant 0 : i32
    %c0_i32_1 = arith.constant 0 : i32
    return %arg0, %c0_i32, %c0_i32_0 : i32, i32, i32
  }
}

</mosaic_0001>

<llo_original>
// kernel: tpu_custom_call.1
$region0: #{tpu_custom_call.1}
  #allocation0 [shape = 'u32[]', space=smem, size = 0x4, offset = 0x4, fixed_abs, tag = 'smem constant byte address 0x4 - core index']
  #allocation1 [shape = 'u32[72,128]{1,0:T(1,128)}', space=vmem, size = 0x9000, scoped, tag = 'internal scratch']
  %s0 = inlined_call_operand.vmem [shape: f32[2,4,2048], index: 0, kind: input, shape index: {}]
  %s1 = inlined_call_operand.hbm [shape: f32[2,4,2048], index: 1, kind: input, shape index: {}]
  %s2 = inlined_call_operand.vmem [shape: bf16[256,8], index: 2, kind: input, shape index: {}]
  %s3 = inlined_call_operand.hbm [shape: f32[2,256,128], index: 3, kind: output, shape index: {}]
  %s4 = sld [smem:[#allocation0]]
  $region53: #{tpu_custom_call.1} parent=0
    _
  %s6 = ssub.s32 1, %s4
  %s7 = scalar_select 0, %s6, %s4
  $region1: #{tpu_custom_call.1} parent=0
    #allocation2 [shape = 'u8[65536]{0}', space=vmem, size = 0x10000, scoped, tag = 'input window, operand 1']
    #allocation3 [shape = 's32[2]{0}', space=sflag, size = 0x8, scoped, tag = 'scoped memory for tpu_custom_call.1']
    #allocation4 [shape = 's32[2]{0}', space=sflag, size = 0x8, scoped, tag = 'scoped memory for tpu_custom_call.1']
    #allocation5 [shape = 'u8[262144]{0}', space=vmem, size = 0x40000, scoped, tag = 'output window, operand 0']
    %8 = vsyncpa [#allocation3], 0
    %s9 = scalar_lea.sflag [#allocation3], 1
    %10 = vsyncpa %s9, 0
    %11 = vsyncpa [#allocation4], 0
    %s12 = scalar_lea.sflag [#allocation4], 1
    %13 = vsyncpa %s12, 0
    loop: start=0, step=1, limit=4
    $region2: #{tpu_custom_call.1} parent=1 // loop_pre_header
      _
    $region3: #{tpu_custom_call.1} parent=1 // loop_header
      %s15 = sphi 0, %s19
      %p16 = scmp.ge.s32.totalorder %s15, 4
      %s22 = sphi 0, %s34
      %s23 = sphi 0, %s30
      %s24 = sphi 0, %s22
      %s25 = sphi 0, %s23
      %s26 = sphi 0, %s24
      %s27 = sphi 0, %s25
      %s39 = sphi 0, %s41
      %s42 = sphi 0, %s39
      %s43 = sphi 0, %s42
      %s59 = sphi 0, %s43
      %s67 = sphi 0, %s69
      %s70 = sphi 0, %s67
      %s71 = sphi 0, %s70
      %s87 = sphi 0, %s71
      %s91 = sphi 0, %s91
      %s93 = sphi 0, %s91
      %s94 = sphi 0, %s93
      %s108 = sphi 0, %s94
      %s114 = sphi 0, %s116
      %s117 = sphi 0, %s114
      %s118 = sphi 0, %s117
      %s134 = sphi 0, %s118
    $region4: #{tpu_custom_call.1} parent=1 // loop_header_branch
      %18 = sbr.rel (%p16) target = $region8
    $region5: #{tpu_custom_call.1} parent=1 // loop_body
      %s20 = ssub.s32 %s15, 1
      %s21 = ssub.s32 %s15, 2
      %s28 = sadd.s32 1, %s23
      %p29 = scmp.ge.s32.totalorder %s28, 1
      %s30 = scalar_select %p29, 0, %s28
      %s31 = sadd.s32 1, %s22
      %s32 = scalar_select %p29, %s31, %s22
      %p33 = scmp.ge.s32.totalorder %s32, 2
      %s34 = scalar_select %p33, 0, %s32
      %s35 = ssub.s32 %s22, %s34
      %s36 = ssub.s32 %s23, %s30
      %s37 = sor.u32 %s35, %s36
      %p38 = scmp.eq.s32.totalorder %s37, 0
      %s40 = sadd.s32 %s39, 1
      %s41 = scalar_select %p38, %s39, %s40
      %p44 = pneg %p38
      %p45 = scmp.eq.s32.totalorder %s15, 1
      %p46 = por %p44, %p45
      %p47 = scmp.ne.s32.totalorder %s39, %s42
      %p48 = scmp.eq.s32.totalorder %s15, 0
      %p49 = por %p47, %p48
      %p50 = scmp.ne.s32.totalorder %s39, %s42
      %p51 = scmp.eq.s32.totalorder %s20, 1
      %p52 = por %p50, %p51
      %p53 = scmp.ne.s32.totalorder %s42, %s43
      %p54 = scmp.eq.s32.totalorder %s20, 0
      %p55 = por %p53, %p54
      %p56 = scmp.ne.s32.totalorder %s42, %s43
      %p57 = scmp.eq.s32.totalorder %s21, 1
      %p58 = por %p56, %p57
      %p60 = scmp.ne.s32.totalorder %s43, %s59
      %p61 = scmp.eq.s32.totalorder %s21, 0
      %p62 = por %p60, %p61
      %s63 = ssub.s32 %s22, %s34
      %s64 = ssub.s32 %s23, %s30
      %s65 = sor.u32 %s63, %s64
      %p66 = scmp.eq.s32.totalorder %s65, 0
      %s68 = sadd.s32 %s67, 1
      %s69 = scalar_select %p66, %s67, %s68
      %p72 = pneg %p66
      %p73 = scmp.eq.s32.totalorder %s15, 1
      %p74 = por %p72, %p73
      %p75 = scmp.ne.s32.totalorder %s67, %s70
      %p76 = scmp.eq.s32.totalorder %s15, 0
      %p77 = por %p75, %p76
      %p78 = scmp.ne.s32.totalorder %s67, %s70
      %p79 = scmp.eq.s32.totalorder %s20, 1
      %p80 = por %p78, %p79
      %p81 = scmp.ne.s32.totalorder %s70, %s71
      %p82 = scmp.eq.s32.totalorder %s20, 0
      %p83 = por %p81, %p82
      %p84 = scmp.ne.s32.totalorder %s70, %s71
      %p85 = scmp.eq.s32.totalorder %s21, 1
      %p86 = por %p84, %p85
      %p88 = scmp.ne.s32.totalorder %s71, %s87
      %p89 = scmp.eq.s32.totalorder %s21, 0
      %p90 = por %p88, %p89
      %s92 = sadd.s32 %s91, 1
      %p95 = scmp.eq.s32.totalorder %s15, 1
      %p96 = scmp.ne.s32.totalorder %s91, %s93
      %p97 = scmp.eq.s32.totalorder %s15, 0
      %p98 = por %p96, %p97
      %p99 = scmp.ne.s32.totalorder %s91, %s93
      %p100 = scmp.eq.s32.totalorder %s20, 1
      %p101 = por %p99, %p100
      %p102 = scmp.ne.s32.totalorder %s93, %s94
      %p103 = scmp.eq.s32.totalorder %s20, 0
      %p104 = por %p102, %p103
      %p105 = scmp.ne.s32.totalorder %s93, %s94
      %p106 = scmp.eq.s32.totalorder %s21, 1
      %p107 = por %p105, %p106
      %p109 = scmp.ne.s32.totalorder %s94, %s108
      %p110 = scmp.eq.s32.totalorder %s21, 0
      %p111 = por %p109, %p110
      %s112 = ssub.s32 %s22, %s34
      %p113 = scmp.eq.s32.totalorder %s112, 0
      %s115 = sadd.s32 %s114, 1
      %s116 = scalar_select %p113, %s114, %s115
      %p119 = pneg %p113
      %p120 = scmp.eq.s32.totalorder %s15, 1
      %p121 = por %p119, %p120
      %p122 = scmp.ne.s32.totalorder %s114, %s117
      %p123 = scmp.eq.s32.totalorder %s15, 0
      %p124 = por %p122, %p123
      %p125 = scmp.ne.s32.totalorder %s114, %s117
      %p126 = scmp.eq.s32.totalorder %s20, 1
      %p127 = por %p125, %p126
      %p128 = scmp.ne.s32.totalorder %s117, %s118
      %p129 = scmp.eq.s32.totalorder %s20, 0
      %p130 = por %p128, %p129
      %p131 = scmp.ne.s32.totalorder %s117, %s118
      %p132 = scmp.eq.s32.totalorder %s21, 1
      %p133 = por %p131, %p132
      %p135 = scmp.ne.s32.totalorder %s118, %s134
      %p136 = scmp.eq.s32.totalorder %s21, 0
      %p137 = por %p135, %p136
      %p138 = scmp.le.s32.totalorder 1, %s15
      %p139 = scmp.lt.s32.totalorder %s15, 3
      %p140 = pnand %p138, %p139
      %p141 = pneg %p140
      // Predicated region
      $region9: #{tpu_custom_call.1} parent=5 // pred_check
        _
      $region10: #{tpu_custom_call.1} parent=5 // pred_check_branch
        %143 = sbr.rel (%p140) target = $region12
      $region11: #{tpu_custom_call.1} parent=5 // pred_region
        %s144 = ssub.s32 %s15, 1
        // Predicated region
        $region13: #{tpu_custom_call.1} parent=11 // pred_check
          %p145 = pneg %p104
        $region14: #{tpu_custom_call.1} parent=11 // pred_check_branch
          %147 = sbr.rel (%p145) target = $region16
        $region15: #{tpu_custom_call.1} parent=11 // pred_region
          _
        $region16: #{tpu_custom_call.1} parent=11 // pred_fallthru
          _
      $region12: #{tpu_custom_call.1} parent=5 // pred_fallthru
        _
      %p148 = scmp.lt.s32.totalorder %s15, 2
      // Predicated region
      $region17: #{tpu_custom_call.1} parent=5 // pred_check
        %p149 = pneg %p148
      $region18: #{tpu_custom_call.1} parent=5 // pred_check_branch
        %151 = sbr.rel (%p149) target = $region20
      $region19: #{tpu_custom_call.1} parent=5 // pred_region
        // Predicated region
        $region21: #{tpu_custom_call.1} parent=19 // pred_check
          %p152 = pneg %p49
        $region22: #{tpu_custom_call.1} parent=19 // pred_check_branch
          %154 = sbr.rel (%p152) target = $region24
        $region23: #{tpu_custom_call.1} parent=19 // pred_region
          %s155 = smul.u32 16, %s23
          %p156 = scmp.lt.s32.totalorder %s22, 1
          %s157 = scalar_select %p156, %s22, 1
          %p158 = scmp.lt.s32.totalorder %s155, 15
          %s159 = scalar_select %p158, %s155, 15
          %s160 = smul.addr %s157, 16
          %s161 = sadd.s32 %s159, %s160
          %s162 = smul.addr %s161, 4
          %s163 = scalar_lea.vmem %s0, %s162
          %s164 = smul.u32 16, %s23
        $region24: #{tpu_custom_call.1} parent=19 // pred_fallthru
          _
        // Predicated region
        $region25: #{tpu_custom_call.1} parent=19 // pred_check
          %p165 = pneg %p77
        $region26: #{tpu_custom_call.1} parent=19 // pred_check_branch
          %167 = sbr.rel (%p165) target = $region28
        $region27: #{tpu_custom_call.1} parent=19 // pred_region
          %s168 = sand.u32 %s67, 1
          %s169 = scalar_lea.sflag [#allocation3], %s168
          %s170 = sand.u32 %s67, 1
          %s171 = smul.addr %s170, 64
          %s172 = scalar_lea.vmem [#allocation2], %s171
          %s173 = smul.u32 16, %s23
          %175 = vsyncadd %s169, 0
          %s176 = smul.addr %s22, 16
          %s177 = sadd.s32 %s173, %s176
          %s178 = smul.addr %s177, 4
          %s179 = scalar_lea.hbm %s1, %s178
          %s181 = sshll.u32 %s179, 4
          %s182 = int_to_ptr.hbm [resolvable:$true] %s181
          %s183 = sshll.u32 %s172, 4
          %s184 = int_to_ptr.vmem [resolvable:$true] %s183
          %186 = dma.hbm_to_vmem [thread:$0]  %s182, 1024, %s184, %s169
        $region28: #{tpu_custom_call.1} parent=19 // pred_fallthru
          _
      $region20: #{tpu_custom_call.1} parent=5 // pred_fallthru
        _
      %p187 = scmp.le.s32.totalorder 1, %s15
      %p188 = scmp.lt.s32.totalorder %s15, 3
      %p189 = pnand %p187, %p188
      %p190 = pneg %p189
      // Predicated region
      $region29: #{tpu_custom_call.1} parent=5 // pred_check
        _
      $region30: #{tpu_custom_call.1} parent=5 // pred_check_branch
        %192 = sbr.rel (%p189) target = $region32
      $region31: #{tpu_custom_call.1} parent=5 // pred_region
        %s193 = ssub.s32 %s15, 1
        %s194 = sand.u32 %s70, 1
        %s195 = scalar_lea.sflag [#allocation3], %s194
        %s196 = sand.u32 %s70, 1
        %s197 = smul.addr %s196, 64
        %s198 = scalar_lea.vmem [#allocation2], %s197
        // Predicated region
        $region33: #{tpu_custom_call.1} parent=31 // pred_check
          %p199 = pneg %p83
        $region34: #{tpu_custom_call.1} parent=31 // pred_check_branch
          %201 = sbr.rel (%p199) target = $region36
        $region35: #{tpu_custom_call.1} parent=31 // pred_region
          %203 = dma.done %s195, 1024
        $region36: #{tpu_custom_call.1} parent=31 // pred_fallthru
          _
        %s204 = smul.u32 16, %s25
        %p205 = scmp.lt.s32.totalorder %s24, 1
        %s206 = scalar_select %p205, %s24, 1
        %p207 = scmp.lt.s32.totalorder %s204, 15
        %s208 = scalar_select %p207, %s204, 15
        %s209 = smul.addr %s206, 16
        %s210 = sadd.s32 %s208, %s209
        %s211 = smul.addr %s210, 4
        %s212 = scalar_lea.vmem %s0, %s211
        %p213 = pneg %p55
        %p214 = pneg %p52
        %s215 = sand.u32 %s70, 1
        %s216 = scalar_lea.sflag [#allocation3], %s215
        %s217 = sand.u32 %s70, 1
        %s218 = smul.addr %s217, 64
        %s219 = scalar_lea.vmem [#allocation2], %s218
        %p220 = pneg %p83
        %p221 = pneg %p80
        %p222 = pneg %p104
        %p223 = pneg %p101
        %p224 = pneg %p130
        %p225 = pneg %p127
        %s226 = sand.u32 %s117, 1
        %s227 = scalar_lea.sflag [#allocation4], %s226
        %s228 = sand.u32 %s117, 1
        %s229 = smul.addr %s228, 256
        %s230 = scalar_lea.vmem [#allocation5], %s229
        %s231 = smul.u32 16, %s25
        %p232 = scmp.lt.s32.totalorder %s24, 1
        %s233 = scalar_select %p232, %s24, 1
        %p234 = scmp.lt.s32.totalorder %s231, 15
        %s235 = scalar_select %p234, %s231, 15
        %s236 = smul.addr %s233, 16
        %s237 = sadd.s32 %s235, %s236
        %s238 = smul.addr %s237, 4
        %s239 = scalar_lea.vmem %s0, %s238
        %s240 = smul.u32 16, %s25
        %s241 = smul.u32 16, %s25
        %p243 = scmp.eq.s32.totalorder %s25, 0
        // Predicated region
        $region37: #{tpu_custom_call.1} parent=31 // pred_check
          %p244 = pneg %p243
        $region38: #{tpu_custom_call.1} parent=31 // pred_check_branch
          %246 = sbr.rel (%p244) target = $region40
        $region39: #{tpu_custom_call.1} parent=31 // pred_region
          %247 = vst [vmem:[%s230] sm:$0xff] 0.0
          %248 = vst [vmem:[%s230 + $0x8] sm:$0xff] 0.0
          %249 = vst [vmem:[%s230 + $0x10] sm:$0xff] 0.0
          %250 = vst [vmem:[%s230 + $0x18] sm:$0xff] 0.0
          %251 = vst [vmem:[%s230 + $0x20] sm:$0xff] 0.0
          %252 = vst [vmem:[%s230 + $0x28] sm:$0xff] 0.0
          %253 = vst [vmem:[%s230 + $0x30] sm:$0xff] 0.0
          %254 = vst [vmem:[%s230 + $0x38] sm:$0xff] 0.0
          %255 = vst [vmem:[%s230 + $0x40] sm:$0xff] 0.0
          %256 = vst [vmem:[%s230 + $0x48] sm:$0xff] 0.0
          %257 = vst [vmem:[%s230 + $0x50] sm:$0xff] 0.0
          %258 = vst [vmem:[%s230 + $0x58] sm:$0xff] 0.0
          %259 = vst [vmem:[%s230 + $0x60] sm:$0xff] 0.0
          %260 = vst [vmem:[%s230 + $0x68] sm:$0xff] 0.0
          %261 = vst [vmem:[%s230 + $0x70] sm:$0xff] 0.0
          %262 = vst [vmem:[%s230 + $0x78] sm:$0xff] 0.0
          %263 = vst [vmem:[%s230 + $0x80] sm:$0xff] 0.0
          %264 = vst [vmem:[%s230 + $0x88] sm:$0xff] 0.0
          %265 = vst [vmem:[%s230 + $0x90] sm:$0xff] 0.0
          %266 = vst [vmem:[%s230 + $0x98] sm:$0xff] 0.0
          %267 = vst [vmem:[%s230 + $0xa0] sm:$0xff] 0.0
          %268 = vst [vmem:[%s230 + $0xa8] sm:$0xff] 0.0
          %269 = vst [vmem:[%s230 + $0xb0] sm:$0xff] 0.0
          %270 = vst [vmem:[%s230 + $0xb8] sm:$0xff] 0.0
          %271 = vst [vmem:[%s230 + $0xc0] sm:$0xff] 0.0
          %272 = vst [vmem:[%s230 + $0xc8] sm:$0xff] 0.0
          %273 = vst [vmem:[%s230 + $0xd0] sm:$0xff] 0.0
          %274 = vst [vmem:[%s230 + $0xd8] sm:$0xff] 0.0
          %275 = vst [vmem:[%s230 + $0xe0] sm:$0xff] 0.0
          %276 = vst [vmem:[%s230 + $0xe8] sm:$0xff] 0.0
          %277 = vst [vmem:[%s230 + $0xf0] sm:$0xff] 0.0
          %278 = vst [vmem:[%s230 + $0xf8] sm:$0xff] 0.0
        $region40: #{tpu_custom_call.1} parent=31 // pred_fallthru
          _
        %v279 = vld [vmem:[%s239] sm:$0xff]
        %v280 = vld [vmem:[%s239 + $0x8] sm:$0xff]
        %v281 = vld [vmem:[%s239 + $0x10] sm:$0xff]
        %v282 = vld [vmem:[%s239 + $0x18] sm:$0xff]
        %v283 = vld [vmem:[%s239 + $0x20] sm:$0xff]
        %v284 = vld [vmem:[%s239 + $0x28] sm:$0xff]
        %v285 = vld [vmem:[%s239 + $0x30] sm:$0xff]
        %v286 = vld [vmem:[%s239 + $0x38] sm:$0xff]
        %v287 = vld [vmem:[%s198] sm:$0xff]
        %v288 = vld [vmem:[%s198 + $0x8] sm:$0xff]
        %v289 = vld [vmem:[%s198 + $0x10] sm:$0xff]
        %v290 = vld [vmem:[%s198 + $0x18] sm:$0xff]
        %v291 = vld [vmem:[%s198 + $0x20] sm:$0xff]
        %v292 = vld [vmem:[%s198 + $0x28] sm:$0xff]
        %v293 = vld [vmem:[%s198 + $0x30] sm:$0xff]
        %v294 = vld [vmem:[%s198 + $0x38] sm:$0xff]
        %303 = vst [vmem:[#allocation1] ss:$2 sm:$0xff] %v279
        %s304 = scalar_lea.vmem [#allocation1], 16
        %305 = vst [vmem:[%s304] ss:$2 sm:$0xff] %v280
        %s306 = scalar_lea.vmem [#allocation1], 32
        %307 = vst [vmem:[%s306] ss:$2 sm:$0xff] %v281
        %s308 = scalar_lea.vmem [#allocation1], 48
        %309 = vst [vmem:[%s308] ss:$2 sm:$0xff] %v282
        %v310 = vld.sshfl [vmem:[#allocation1] sm:$0xff pattern:$0x75316420]
        %v311 = vld.sshfl [vmem:[#allocation1 + $0x8] sm:$0xff pattern:$0x75316420]
        %v312 = vld.sshfl [vmem:[#allocation1 + $0x10] sm:$0xff pattern:$0x75316420]
        %v313 = vld.sshfl [vmem:[#allocation1 + $0x18] sm:$0xff pattern:$0x75316420]
        %v314 = vld.sshfl [vmem:[#allocation1 + $0x20] sm:$0xff pattern:$0x75316420]
        %v315 = vld.sshfl [vmem:[#allocation1 + $0x28] sm:$0xff pattern:$0x75316420]
        %v316 = vld.sshfl [vmem:[#allocation1 + $0x30] sm:$0xff pattern:$0x75316420]
        %v317 = vld.sshfl [vmem:[#allocation1 + $0x38] sm:$0xff pattern:$0x75316420]
        %318 = vst [vmem:[#allocation1] ss:$2 sm:$0xff] %v283
        %319 = vst [vmem:[%s304] ss:$2 sm:$0xff] %v284
        %320 = vst [vmem:[%s306] ss:$2 sm:$0xff] %v285
        %321 = vst [vmem:[%s308] ss:$2 sm:$0xff] %v286
        %v322 = vld.sshfl [vmem:[#allocation1] sm:$0xff pattern:$0x75316420]
        %v323 = vld.sshfl [vmem:[#allocation1 + $0x8] sm:$0xff pattern:$0x75316420]
        %v324 = vld.sshfl [vmem:[#allocation1 + $0x10] sm:$0xff pattern:$0x75316420]
        %v325 = vld.sshfl [vmem:[#allocation1 + $0x18] sm:$0xff pattern:$0x75316420]
        %v326 = vld.sshfl [vmem:[#allocation1 + $0x20] sm:$0xff pattern:$0x75316420]
        %v327 = vld.sshfl [vmem:[#allocation1 + $0x28] sm:$0xff pattern:$0x75316420]
        %v328 = vld.sshfl [vmem:[#allocation1 + $0x30] sm:$0xff pattern:$0x75316420]
        %v329 = vld.sshfl [vmem:[#allocation1 + $0x38] sm:$0xff pattern:$0x75316420]
        %v346 = vpack.c.bf16 %v311, %v310
        %v347 = vpack.c.bf16 %v313, %v312
        %v348 = vpack.c.bf16 %v315, %v314
        %v349 = vpack.c.bf16 %v317, %v316
        %v350 = vpack.c.bf16 %v323, %v322
        %v351 = vpack.c.bf16 %v325, %v324
        %v352 = vpack.c.bf16 %v327, %v326
        %v353 = vpack.c.bf16 %v329, %v328
        %362 = vst [vmem:[#allocation1] ss:$2 sm:$0xff] %v287
        %s363 = scalar_lea.vmem [#allocation1], 16
        %364 = vst [vmem:[%s363] ss:$2 sm:$0xff] %v288
        %s365 = scalar_lea.vmem [#allocation1], 32
        %366 = vst [vmem:[%s365] ss:$2 sm:$0xff] %v289
        %s367 = scalar_lea.vmem [#allocation1], 48
        %368 = vst [vmem:[%s367] ss:$2 sm:$0xff] %v290
        %v369 = vld.sshfl [vmem:[#allocation1] sm:$0xff pattern:$0x75316420]
        %v370 = vld.sshfl [vmem:[#allocation1 + $0x8] sm:$0xff pattern:$0x75316420]
        %v371 = vld.sshfl [vmem:[#allocation1 + $0x10] sm:$0xff pattern:$0x75316420]
        %v372 = vld.sshfl [vmem:[#allocation1 + $0x18] sm:$0xff pattern:$0x75316420]
        %v373 = vld.sshfl [vmem:[#allocation1 + $0x20] sm:$0xff pattern:$0x75316420]
        %v374 = vld.sshfl [vmem:[#allocation1 + $0x28] sm:$0xff pattern:$0x75316420]
        %v375 = vld.sshfl [vmem:[#allocation1 + $0x30] sm:$0xff pattern:$0x75316420]
        %v376 = vld.sshfl [vmem:[#allocation1 + $0x38] sm:$0xff pattern:$0x75316420]
        %377 = vst [vmem:[#allocation1] ss:$2 sm:$0xff] %v291
        %378 = vst [vmem:[%s363] ss:$2 sm:$0xff] %v292
        %379 = vst [vmem:[%s365] ss:$2 sm:$0xff] %v293
        %380 = vst [vmem:[%s367] ss:$2 sm:$0xff] %v294
        %v381 = vld.sshfl [vmem:[#allocation1] sm:$0xff pattern:$0x75316420]
        %v382 = vld.sshfl [vmem:[#allocation1 + $0x8] sm:$0xff pattern:$0x75316420]
        %v383 = vld.sshfl [vmem:[#allocation1 + $0x10] sm:$0xff pattern:$0x75316420]
        %v384 = vld.sshfl [vmem:[#allocation1 + $0x18] sm:$0xff pattern:$0x75316420]
        %v385 = vld.sshfl [vmem:[#allocation1 + $0x20] sm:$0xff pattern:$0x75316420]
        %v386 = vld.sshfl [vmem:[#allocation1 + $0x28] sm:$0xff pattern:$0x75316420]
        %v387 = vld.sshfl [vmem:[#allocation1 + $0x30] sm:$0xff pattern:$0x75316420]
        %v388 = vld.sshfl [vmem:[#allocation1 + $0x38] sm:$0xff pattern:$0x75316420]
        %v405 = vpack.c.bf16 %v370, %v369
        %v406 = vpack.c.bf16 %v372, %v371
        %v407 = vpack.c.bf16 %v374, %v373
        %v408 = vpack.c.bf16 %v376, %v375
        %v409 = vpack.c.bf16 %v382, %v381
        %v410 = vpack.c.bf16 %v384, %v383
        %v411 = vpack.c.bf16 %v386, %v385
        %v412 = vpack.c.bf16 %v388, %v387
        %v421 = vunpack.c.l.b16 %v346
        %v422 = vunpack.c.h.b16 %v346
        %v423 = vunpack.c.l.b16 %v347
        %v424 = vunpack.c.h.b16 %v347
        %v425 = vunpack.c.l.b16 %v348
        %v426 = vunpack.c.h.b16 %v348
        %v427 = vunpack.c.l.b16 %v349
        %v428 = vunpack.c.h.b16 %v349
        %v429 = vunpack.c.l.b16 %v350
        %v430 = vunpack.c.h.b16 %v350
        %v431 = vunpack.c.l.b16 %v351
        %v432 = vunpack.c.h.b16 %v351
        %v433 = vunpack.c.l.b16 %v352
        %v434 = vunpack.c.h.b16 %v352
        %v435 = vunpack.c.l.b16 %v353
        %v436 = vunpack.c.h.b16 %v353
        %v437 = vpack.c.b16 %v421, %v421
        %v438 = vpack.c.b16 %v422, %v422
        %v439 = vpack.c.b16 %v423, %v423
        %v440 = vpack.c.b16 %v424, %v424
        %v441 = vpack.c.b16 %v425, %v425
        %v442 = vpack.c.b16 %v426, %v426
        %v443 = vpack.c.b16 %v427, %v427
        %v444 = vpack.c.b16 %v428, %v428
        %v445 = vpack.c.b16 %v429, %v429
        %v446 = vpack.c.b16 %v430, %v430
        %v447 = vpack.c.b16 %v431, %v431
        %v448 = vpack.c.b16 %v432, %v432
        %v449 = vpack.c.b16 %v433, %v433
        %v450 = vpack.c.b16 %v434, %v434
        %v451 = vpack.c.b16 %v435, %v435
        %v452 = vpack.c.b16 %v436, %v436
        %v461 = vunpack.c.l.b16 %v405
        %v462 = vunpack.c.h.b16 %v405
        %v463 = vunpack.c.l.b16 %v406
        %v464 = vunpack.c.h.b16 %v406
        %v465 = vunpack.c.l.b16 %v407
        %v466 = vunpack.c.h.b16 %v407
        %v467 = vunpack.c.l.b16 %v408
        %v468 = vunpack.c.h.b16 %v408
        %v469 = vunpack.c.l.b16 %v409
        %v470 = vunpack.c.h.b16 %v409
        %v471 = vunpack.c.l.b16 %v410
        %v472 = vunpack.c.h.b16 %v410
        %v473 = vunpack.c.l.b16 %v411
        %v474 = vunpack.c.h.b16 %v411
        %v475 = vunpack.c.l.b16 %v412
        %v476 = vunpack.c.h.b16 %v412
        %v477 = vpack.c.b16 %v461, %v461
        %v478 = vpack.c.b16 %v462, %v462
        %v479 = vpack.c.b16 %v463, %v463
        %v480 = vpack.c.b16 %v464, %v464
        %v481 = vpack.c.b16 %v465, %v465
        %v482 = vpack.c.b16 %v466, %v466
        %v483 = vpack.c.b16 %v467, %v467
        %v484 = vpack.c.b16 %v468, %v468
        %v485 = vpack.c.b16 %v469, %v469
        %v486 = vpack.c.b16 %v470, %v470
        %v487 = vpack.c.b16 %v471, %v471
        %v488 = vpack.c.b16 %v472, %v472
        %v489 = vpack.c.b16 %v473, %v473
        %v490 = vpack.c.b16 %v474, %v474
        %v491 = vpack.c.b16 %v475, %v475
        %v492 = vpack.c.b16 %v476, %v476
        %v493 = vrot.slane %v477, 6
        %v494 = vrot.slane %v478, 6
        %v495 = vrot.slane %v479, 6
        %v496 = vrot.slane %v480, 6
        %v497 = vrot.slane %v481, 6
        %v498 = vrot.slane %v482, 6
        %v499 = vrot.slane %v483, 6
        %v500 = vrot.slane %v484, 6
        %v501 = vrot.slane %v485, 6
        %v502 = vrot.slane %v486, 6
        %v503 = vrot.slane %v487, 6
        %v504 = vrot.slane %v488, 6
        %v505 = vrot.slane %v489, 6
        %v506 = vrot.slane %v490, 6
        %v507 = vrot.slane %v491, 6
        %v508 = vrot.slane %v492, 6
        %vm509 = vcmask 1041408
        %v512 = vsel %vm509, %v437, %v493
        %v515 = vsel %vm509, %v438, %v494
        %v518 = vsel %vm509, %v439, %v495
        %v521 = vsel %vm509, %v440, %v496
        %v524 = vsel %vm509, %v441, %v497
        %v527 = vsel %vm509, %v442, %v498
        %v530 = vsel %vm509, %v443, %v499
        %v533 = vsel %vm509, %v444, %v500
        %v536 = vsel %vm509, %v445, %v501
        %v539 = vsel %vm509, %v446, %v502
        %v542 = vsel %vm509, %v447, %v503
        %v545 = vsel %vm509, %v448, %v504
        %v548 = vsel %vm509, %v449, %v505
        %v551 = vsel %vm509, %v450, %v506
        %v554 = vsel %vm509, %v451, %v507
        %v557 = vsel %vm509, %v452, %v508
        %v558 = vld [vmem:[%s2] sm:$0xf]
        %v559 = vld [vmem:[%s2 + $0x4] sm:$0xf]
        %v560 = vld [vmem:[%s2 + $0x8] sm:$0xf]
        %v561 = vld [vmem:[%s2 + $0xc] sm:$0xf]
        %v562 = vld [vmem:[%s2 + $0x10] sm:$0xf]
        %v563 = vld [vmem:[%s2 + $0x14] sm:$0xf]
        %v564 = vld [vmem:[%s2 + $0x18] sm:$0xf]
        %v565 = vld [vmem:[%s2 + $0x1c] sm:$0xf]
        %v566 = vld [vmem:[%s2 + $0x20] sm:$0xf]
        %v567 = vld [vmem:[%s2 + $0x24] sm:$0xf]
        %v568 = vld [vmem:[%s2 + $0x28] sm:$0xf]
        %v569 = vld [vmem:[%s2 + $0x2c] sm:$0xf]
        %v570 = vld [vmem:[%s2 + $0x30] sm:$0xf]
        %v571 = vld [vmem:[%s2 + $0x34] sm:$0xf]
        %v572 = vld [vmem:[%s2 + $0x38] sm:$0xf]
        %v573 = vld [vmem:[%s2 + $0x3c] sm:$0xf]
        %v574 = vld [vmem:[%s2 + $0x40] sm:$0xf]
        %v575 = vld [vmem:[%s2 + $0x44] sm:$0xf]
        %v576 = vld [vmem:[%s2 + $0x48] sm:$0xf]
        %v577 = vld [vmem:[%s2 + $0x4c] sm:$0xf]
        %v578 = vld [vmem:[%s2 + $0x50] sm:$0xf]
        %v579 = vld [vmem:[%s2 + $0x54] sm:$0xf]
        %v580 = vld [vmem:[%s2 + $0x58] sm:$0xf]
        %v581 = vld [vmem:[%s2 + $0x5c] sm:$0xf]
        %v582 = vld [vmem:[%s2 + $0x60] sm:$0xf]
        %v583 = vld [vmem:[%s2 + $0x64] sm:$0xf]
        %v584 = vld [vmem:[%s2 + $0x68] sm:$0xf]
        %v585 = vld [vmem:[%s2 + $0x6c] sm:$0xf]
        %v586 = vld [vmem:[%s2 + $0x70] sm:$0xf]
        %v587 = vld [vmem:[%s2 + $0x74] sm:$0xf]
        %v588 = vld [vmem:[%s2 + $0x78] sm:$0xf]
        %v589 = vld [vmem:[%s2 + $0x7c] sm:$0xf]
        %v622 = vunpack.c.l.b16 %v558
        %v623 = vunpack.c.l.b16 %v559
        %v624 = vunpack.c.l.b16 %v560
        %v625 = vunpack.c.l.b16 %v561
        %v626 = vunpack.c.l.b16 %v562
        %v627 = vunpack.c.l.b16 %v563
        %v628 = vunpack.c.l.b16 %v564
        %v629 = vunpack.c.l.b16 %v565
        %v630 = vunpack.c.l.b16 %v566
        %v631 = vunpack.c.l.b16 %v567
        %v632 = vunpack.c.l.b16 %v568
        %v633 = vunpack.c.l.b16 %v569
        %v634 = vunpack.c.l.b16 %v570
        %v635 = vunpack.c.l.b16 %v571
        %v636 = vunpack.c.l.b16 %v572
        %v637 = vunpack.c.l.b16 %v573
        %v638 = vunpack.c.l.b16 %v574
        %v639 = vunpack.c.l.b16 %v575
        %v640 = vunpack.c.l.b16 %v576
        %v641 = vunpack.c.l.b16 %v577
        %v642 = vunpack.c.l.b16 %v578
        %v643 = vunpack.c.l.b16 %v579
        %v644 = vunpack.c.l.b16 %v580
        %v645 = vunpack.c.l.b16 %v581
        %v646 = vunpack.c.l.b16 %v582
        %v647 = vunpack.c.l.b16 %v583
        %v648 = vunpack.c.l.b16 %v584
        %v649 = vunpack.c.l.b16 %v585
        %v650 = vunpack.c.l.b16 %v586
        %v651 = vunpack.c.l.b16 %v587
        %v652 = vunpack.c.l.b16 %v588
        %v653 = vunpack.c.l.b16 %v589
        %v654 = vpack.c.b16 %v623, %v622
        %v655 = vpack.c.b16 %v625, %v624
        %v656 = vpack.c.b16 %v627, %v626
        %v657 = vpack.c.b16 %v629, %v628
        %v658 = vpack.c.b16 %v631, %v630
        %v659 = vpack.c.b16 %v633, %v632
        %v660 = vpack.c.b16 %v635, %v634
        %v661 = vpack.c.b16 %v637, %v636
        %v662 = vpack.c.b16 %v639, %v638
        %v663 = vpack.c.b16 %v641, %v640
        %v664 = vpack.c.b16 %v643, %v642
        %v665 = vpack.c.b16 %v645, %v644
        %v666 = vpack.c.b16 %v647, %v646
        %v667 = vpack.c.b16 %v649, %v648
        %v668 = vpack.c.b16 %v651, %v650
        %v669 = vpack.c.b16 %v653, %v652
        %vm670 = vcmask 64512
        %v672 = vsel %vm670, %v654, 0
        %v675 = vsel %vm670, %v655, 0
        %v678 = vsel %vm670, %v656, 0
        %v681 = vsel %vm670, %v657, 0
        %v684 = vsel %vm670, %v658, 0
        %v687 = vsel %vm670, %v659, 0
        %v690 = vsel %vm670, %v660, 0
        %v693 = vsel %vm670, %v661, 0
        %v696 = vsel %vm670, %v662, 0
        %v699 = vsel %vm670, %v663, 0
        %v702 = vsel %vm670, %v664, 0
        %v705 = vsel %vm670, %v665, 0
        %v708 = vsel %vm670, %v666, 0
        %v711 = vsel %vm670, %v667, 0
        %v714 = vsel %vm670, %v668, 0
        %v717 = vsel %vm670, %v669, 0
        %vm719 = vcmask 1043456
        %v720 = vsel %vm719, %v512, 0
        %v722 = vsel %vm719, %v515, 0
        %v724 = vsel %vm719, %v518, 0
        %v726 = vsel %vm719, %v521, 0
        %v728 = vsel %vm719, %v524, 0
        %v730 = vsel %vm719, %v527, 0
        %v732 = vsel %vm719, %v530, 0
        %v734 = vsel %vm719, %v533, 0
        %v736 = vsel %vm719, %v536, 0
        %v738 = vsel %vm719, %v539, 0
        %v740 = vsel %vm719, %v542, 0
        %v742 = vsel %vm719, %v545, 0
        %v744 = vsel %vm719, %v548, 0
        %v746 = vsel %vm719, %v551, 0
        %v748 = vsel %vm719, %v554, 0
        %v750 = vsel %vm719, %v557, 0
        %752 = vmatpush.bf16.msra.mxu0 0
        %753 = vmatpush.bf16.msra.mxu0 0
        %754 = vmatpush.bf16.msra.mxu0 0
        %755 = vmatpush.bf16.msra.mxu0 0
        %756 = vmatpush.bf16.msra.mxu0 0
        %757 = vmatpush.bf16.msra.mxu0 0
        %758 = vmatpush.bf16.msra.mxu0 0
        %759 = vmatpush.bf16.msra.mxu0 %v720
        %760 = vmatmul.bf16.gmra.mxu0 %v672
        %v761 = vpop.f32.mrf.mxu0
        %v762 = vadd.f32 0.0, %v761
        %v763 = vpop.f32.mrf.mxu0
        %v764 = vadd.f32 0.0, %v763
        %765 = vmatmul.bf16.gmra.mxu0 %v675
        %v766 = vpop.f32.mrf.mxu0
        %v767 = vadd.f32 0.0, %v766
        %v768 = vpop.f32.mrf.mxu0
        %v769 = vadd.f32 0.0, %v768
        %770 = vmatmul.bf16.gmra.mxu0 %v678
        %v771 = vpop.f32.mrf.mxu0
        %v772 = vadd.f32 0.0, %v771
        %v773 = vpop.f32.mrf.mxu0
        %v774 = vadd.f32 0.0, %v773
        %775 = vmatmul.bf16.gmra.mxu0 %v681
        %v776 = vpop.f32.mrf.mxu0
        %v777 = vadd.f32 0.0, %v776
        %v778 = vpop.f32.mrf.mxu0
        %v779 = vadd.f32 0.0, %v778
        %780 = vmatmul.bf16.gmra.mxu0 %v684
        %v781 = vpop.f32.mrf.mxu0
        %v782 = vadd.f32 0.0, %v781
        %v783 = vpop.f32.mrf.mxu0
        %v784 = vadd.f32 0.0, %v783
        %785 = vmatmul.bf16.gmra.mxu0 %v687
        %v786 = vpop.f32.mrf.mxu0
        %v787 = vadd.f32 0.0, %v786
        %v788 = vpop.f32.mrf.mxu0
        %v789 = vadd.f32 0.0, %v788
        %790 = vmatmul.bf16.gmra.mxu0 %v690
        %v791 = vpop.f32.mrf.mxu0
        %v792 = vadd.f32 0.0, %v791
        %v793 = vpop.f32.mrf.mxu0
        %v794 = vadd.f32 0.0, %v793
        %795 = vmatmul.bf16.gmra.mxu0 %v693
        %v796 = vpop.f32.mrf.mxu0
        %v797 = vadd.f32 0.0, %v796
        %v798 = vpop.f32.mrf.mxu0
        %v799 = vadd.f32 0.0, %v798
        %800 = vmatmul.bf16.gmra.mxu0 %v696
        %v801 = vpop.f32.mrf.mxu0
        %v802 = vadd.f32 0.0, %v801
        %v803 = vpop.f32.mrf.mxu0
        %v804 = vadd.f32 0.0, %v803
        %805 = vmatmul.bf16.gmra.mxu0 %v699
        %v806 = vpop.f32.mrf.mxu0
        %v807 = vadd.f32 0.0, %v806
        %v808 = vpop.f32.mrf.mxu0
        %v809 = vadd.f32 0.0, %v808
        %810 = vmatmul.bf16.gmra.mxu0 %v702
        %v811 = vpop.f32.mrf.mxu0
        %v812 = vadd.f32 0.0, %v811
        %v813 = vpop.f32.mrf.mxu0
        %v814 = vadd.f32 0.0, %v813
        %815 = vmatmul.bf16.gmra.mxu0 %v705
        %v816 = vpop.f32.mrf.mxu0
        %v817 = vadd.f32 0.0, %v816
        %v818 = vpop.f32.mrf.mxu0
        %v819 = vadd.f32 0.0, %v818
        %820 = vmatmul.bf16.gmra.mxu0 %v708
        %v821 = vpop.f32.mrf.mxu0
        %v822 = vadd.f32 0.0, %v821
        %v823 = vpop.f32.mrf.mxu0
        %v824 = vadd.f32 0.0, %v823
        %825 = vmatmul.bf16.gmra.mxu0 %v711
        %v826 = vpop.f32.mrf.mxu0
        %v827 = vadd.f32 0.0, %v826
        %v828 = vpop.f32.mrf.mxu0
        %v829 = vadd.f32 0.0, %v828
        %830 = vmatmul.bf16.gmra.mxu0 %v714
        %v831 = vpop.f32.mrf.mxu0
        %v832 = vadd.f32 0.0, %v831
        %v833 = vpop.f32.mrf.mxu0
        %v834 = vadd.f32 0.0, %v833
        %835 = vmatmul.bf16.gmra.mxu0 %v717
        %v836 = vpop.f32.mrf.mxu0
        %v837 = vadd.f32 0.0, %v836
        %v838 = vpop.f32.mrf.mxu0
        %v839 = vadd.f32 0.0, %v838
        %840 = vdwg.mxu0
        %841 = vmatpush.bf16.msra.mxu0 0
        %842 = vmatpush.bf16.msra.mxu0 0
        %843 = vmatpush.bf16.msra.mxu0 0
        %844 = vmatpush.bf16.msra.mxu0 0
        %845 = vmatpush.bf16.msra.mxu0 0
        %846 = vmatpush.bf16.msra.mxu0 0
        %847 = vmatpush.bf16.msra.mxu0 0
        %848 = vmatpush.bf16.msra.mxu0 %v722
        %849 = vmatmul.bf16.gmra.mxu0 %v672
        %v850 = vpop.f32.mrf.mxu0
        %v851 = vadd.f32 0.0, %v850
        %v852 = vpop.f32.mrf.mxu0
        %v853 = vadd.f32 0.0, %v852
        %854 = vmatmul.bf16.gmra.mxu0 %v675
        %v855 = vpop.f32.mrf.mxu0
        %v856 = vadd.f32 0.0, %v855
        %v857 = vpop.f32.mrf.mxu0
        %v858 = vadd.f32 0.0, %v857
        %859 = vmatmul.bf16.gmra.mxu0 %v678
        %v860 = vpop.f32.mrf.mxu0
        %v861 = vadd.f32 0.0, %v860
        %v862 = vpop.f32.mrf.mxu0
        %v863 = vadd.f32 0.0, %v862
        %864 = vmatmul.bf16.gmra.mxu0 %v681
        %v865 = vpop.f32.mrf.mxu0
        %v866 = vadd.f32 0.0, %v865
        %v867 = vpop.f32.mrf.mxu0
        %v868 = vadd.f32 0.0, %v867
        %869 = vmatmul.bf16.gmra.mxu0 %v684
        %v870 = vpop.f32.mrf.mxu0
        %v871 = vadd.f32 0.0, %v870
        %v872 = vpop.f32.mrf.mxu0
        %v873 = vadd.f32 0.0, %v872
        %874 = vmatmul.bf16.gmra.mxu0 %v687
        %v875 = vpop.f32.mrf.mxu0
        %v876 = vadd.f32 0.0, %v875
        %v877 = vpop.f32.mrf.mxu0
        %v878 = vadd.f32 0.0, %v877
        %879 = vmatmul.bf16.gmra.mxu0 %v690
        %v880 = vpop.f32.mrf.mxu0
        %v881 = vadd.f32 0.0, %v880
        %v882 = vpop.f32.mrf.mxu0
        %v883 = vadd.f32 0.0, %v882
        %884 = vmatmul.bf16.gmra.mxu0 %v693
        %v885 = vpop.f32.mrf.mxu0
        %v886 = vadd.f32 0.0, %v885
        %v887 = vpop.f32.mrf.mxu0
        %v888 = vadd.f32 0.0, %v887
        %889 = vmatmul.bf16.gmra.mxu0 %v696
        %v890 = vpop.f32.mrf.mxu0
        %v891 = vadd.f32 0.0, %v890
        %v892 = vpop.f32.mrf.mxu0
        %v893 = vadd.f32 0.0, %v892
        %894 = vmatmul.bf16.gmra.mxu0 %v699
        %v895 = vpop.f32.mrf.mxu0
        %v896 = vadd.f32 0.0, %v895
        %v897 = vpop.f32.mrf.mxu0
        %v898 = vadd.f32 0.0, %v897
        %899 = vmatmul.bf16.gmra.mxu0 %v702
        %v900 = vpop.f32.mrf.mxu0
        %v901 = vadd.f32 0.0, %v900
        %v902 = vpop.f32.mrf.mxu0
        %v903 = vadd.f32 0.0, %v902
        %904 = vmatmul.bf16.gmra.mxu0 %v705
        %v905 = vpop.f32.mrf.mxu0
        %v906 = vadd.f32 0.0, %v905
        %v907 = vpop.f32.mrf.mxu0
        %v908 = vadd.f32 0.0, %v907
        %909 = vmatmul.bf16.gmra.mxu0 %v708
        %v910 = vpop.f32.mrf.mxu0
        %v911 = vadd.f32 0.0, %v910
        %v912 = vpop.f32.mrf.mxu0
        %v913 = vadd.f32 0.0, %v912
        %914 = vmatmul.bf16.gmra.mxu0 %v711
        %v915 = vpop.f32.mrf.mxu0
        %v916 = vadd.f32 0.0, %v915
        %v917 = vpop.f32.mrf.mxu0
        %v918 = vadd.f32 0.0, %v917
        %919 = vmatmul.bf16.gmra.mxu0 %v714
        %v920 = vpop.f32.mrf.mxu0
        %v921 = vadd.f32 0.0, %v920
        %v922 = vpop.f32.mrf.mxu0
        %v923 = vadd.f32 0.0, %v922
        %924 = vmatmul.bf16.gmra.mxu0 %v717
        %v925 = vpop.f32.mrf.mxu0
        %v926 = vadd.f32 0.0, %v925
        %v927 = vpop.f32.mrf.mxu0
        %v928 = vadd.f32 0.0, %v927
        %929 = vdwg.mxu0
        %930 = vmatpush.bf16.msra.mxu0 0
        %931 = vmatpush.bf16.msra.mxu0 0
        %932 = vmatpush.bf16.msra.mxu0 0
        %933 = vmatpush.bf16.msra.mxu0 0
        %934 = vmatpush.bf16.msra.mxu0 0
        %935 = vmatpush.bf16.msra.mxu0 0
        %936 = vmatpush.bf16.msra.mxu0 0
        %937 = vmatpush.bf16.msra.mxu0 %v724
        %938 = vmatmul.bf16.gmra.mxu0 %v672
        %v939 = vpop.f32.mrf.mxu0
        %v940 = vadd.f32 0.0, %v939
        %v941 = vpop.f32.mrf.mxu0
        %v942 = vadd.f32 0.0, %v941
        %943 = vmatmul.bf16.gmra.mxu0 %v675
        %v944 = vpop.f32.mrf.mxu0
        %v945 = vadd.f32 0.0, %v944
        %v946 = vpop.f32.mrf.mxu0
        %v947 = vadd.f32 0.0, %v946
        %948 = vmatmul.bf16.gmra.mxu0 %v678
        %v949 = vpop.f32.mrf.mxu0
        %v950 = vadd.f32 0.0, %v949
        %v951 = vpop.f32.mrf.mxu0
        %v952 = vadd.f32 0.0, %v951
        %953 = vmatmul.bf16.gmra.mxu0 %v681
        %v954 = vpop.f32.mrf.mxu0
        %v955 = vadd.f32 0.0, %v954
        %v956 = vpop.f32.mrf.mxu0
        %v957 = vadd.f32 0.0, %v956
        %958 = vmatmul.bf16.gmra.mxu0 %v684
        %v959 = vpop.f32.mrf.mxu0
        %v960 = vadd.f32 0.0, %v959
        %v961 = vpop.f32.mrf.mxu0
        %v962 = vadd.f32 0.0, %v961
        %963 = vmatmul.bf16.gmra.mxu0 %v687
        %v964 = vpop.f32.mrf.mxu0
        %v965 = vadd.f32 0.0, %v964
        %v966 = vpop.f32.mrf.mxu0
        %v967 = vadd.f32 0.0, %v966
        %968 = vmatmul.bf16.gmra.mxu0 %v690
        %v969 = vpop.f32.mrf.mxu0
        %v970 = vadd.f32 0.0, %v969
        %v971 = vpop.f32.mrf.mxu0
        %v972 = vadd.f32 0.0, %v971
        %973 = vmatmul.bf16.gmra.mxu0 %v693
        %v974 = vpop.f32.mrf.mxu0
        %v975 = vadd.f32 0.0, %v974
        %v976 = vpop.f32.mrf.mxu0
        %v977 = vadd.f32 0.0, %v976
        %978 = vmatmul.bf16.gmra.mxu0 %v696
        %v979 = vpop.f32.mrf.mxu0
        %v980 = vadd.f32 0.0, %v979
        %v981 = vpop.f32.mrf.mxu0
        %v982 = vadd.f32 0.0, %v981
        %983 = vmatmul.bf16.gmra.mxu0 %v699
        %v984 = vpop.f32.mrf.mxu0
        %v985 = vadd.f32 0.0, %v984
        %v986 = vpop.f32.mrf.mxu0
        %v987 = vadd.f32 0.0, %v986
        %988 = vmatmul.bf16.gmra.mxu0 %v702
        %v989 = vpop.f32.mrf.mxu0
        %v990 = vadd.f32 0.0, %v989
        %v991 = vpop.f32.mrf.mxu0
        %v992 = vadd.f32 0.0, %v991
        %993 = vmatmul.bf16.gmra.mxu0 %v705
        %v994 = vpop.f32.mrf.mxu0
        %v995 = vadd.f32 0.0, %v994
        %v996 = vpop.f32.mrf.mxu0
        %v997 = vadd.f32 0.0, %v996
        %998 = vmatmul.bf16.gmra.mxu0 %v708
        %v999 = vpop.f32.mrf.mxu0
        %v1000 = vadd.f32 0.0, %v999
        %v1001 = vpop.f32.mrf.mxu0
        %v1002 = vadd.f32 0.0, %v1001
        %1003 = vmatmul.bf16.gmra.mxu0 %v711
        %v1004 = vpop.f32.mrf.mxu0
        %v1005 = vadd.f32 0.0, %v1004
        %v1006 = vpop.f32.mrf.mxu0
        %v1007 = vadd.f32 0.0, %v1006
        %1008 = vmatmul.bf16.gmra.mxu0 %v714
        %v1009 = vpop.f32.mrf.mxu0
        %v1010 = vadd.f32 0.0, %v1009
        %v1011 = vpop.f32.mrf.mxu0
        %v1012 = vadd.f32 0.0, %v1011
        %1013 = vmatmul.bf16.gmra.mxu0 %v717
        %v1014 = vpop.f32.mrf.mxu0
        %v1015 = vadd.f32 0.0, %v1014
        %v1016 = vpop.f32.mrf.mxu0
        %v1017 = vadd.f32 0.0, %v1016
        %1018 = vdwg.mxu0
        %1019 = vmatpush.bf16.msra.mxu0 0
        %1020 = vmatpush.bf16.msra.mxu0 0
        %1021 = vmatpush.bf16.msra.mxu0 0
        %1022 = vmatpush.bf16.msra.mxu0 0
        %1023 = vmatpush.bf16.msra.mxu0 0
        %1024 = vmatpush.bf16.msra.mxu0 0
        %1025 = vmatpush.bf16.msra.mxu0 0
        %1026 = vmatpush.bf16.msra.mxu0 %v726
        %1027 = vmatmul.bf16.gmra.mxu0 %v672
        %v1028 = vpop.f32.mrf.mxu0
        %v1029 = vadd.f32 0.0, %v1028
        %v1030 = vpop.f32.mrf.mxu0
        %v1031 = vadd.f32 0.0, %v1030
        %1032 = vmatmul.bf16.gmra.mxu0 %v675
        %v1033 = vpop.f32.mrf.mxu0
        %v1034 = vadd.f32 0.0, %v1033
        %v1035 = vpop.f32.mrf.mxu0
        %v1036 = vadd.f32 0.0, %v1035
        %1037 = vmatmul.bf16.gmra.mxu0 %v678
        %v1038 = vpop.f32.mrf.mxu0
        %v1039 = vadd.f32 0.0, %v1038
        %v1040 = vpop.f32.mrf.mxu0
        %v1041 = vadd.f32 0.0, %v1040
        %1042 = vmatmul.bf16.gmra.mxu0 %v681
        %v1043 = vpop.f32.mrf.mxu0
        %v1044 = vadd.f32 0.0, %v1043
        %v1045 = vpop.f32.mrf.mxu0
        %v1046 = vadd.f32 0.0, %v1045
        %1047 = vmatmul.bf16.gmra.mxu0 %v684
        %v1048 = vpop.f32.mrf.mxu0
        %v1049 = vadd.f32 0.0, %v1048
        %v1050 = vpop.f32.mrf.mxu0
        %v1051 = vadd.f32 0.0, %v1050
        %1052 = vmatmul.bf16.gmra.mxu0 %v687
        %v1053 = vpop.f32.mrf.mxu0
        %v1054 = vadd.f32 0.0, %v1053
        %v1055 = vpop.f32.mrf.mxu0
        %v1056 = vadd.f32 0.0, %v1055
        %1057 = vmatmul.bf16.gmra.mxu0 %v690
        %v1058 = vpop.f32.mrf.mxu0
        %v1059 = vadd.f32 0.0, %v1058
        %v1060 = vpop.f32.mrf.mxu0
        %v1061 = vadd.f32 0.0, %v1060
        %1062 = vmatmul.bf16.gmra.mxu0 %v693
        %v1063 = vpop.f32.mrf.mxu0
        %v1064 = vadd.f32 0.0, %v1063
        %v1065 = vpop.f32.mrf.mxu0
        %v1066 = vadd.f32 0.0, %v1065
        %1067 = vmatmul.bf16.gmra.mxu0 %v696
        %v1068 = vpop.f32.mrf.mxu0
        %v1069 = vadd.f32 0.0, %v1068
        %v1070 = vpop.f32.mrf.mxu0
        %v1071 = vadd.f32 0.0, %v1070
        %1072 = vmatmul.bf16.gmra.mxu0 %v699
        %v1073 = vpop.f32.mrf.mxu0
        %v1074 = vadd.f32 0.0, %v1073
        %v1075 = vpop.f32.mrf.mxu0
        %v1076 = vadd.f32 0.0, %v1075
        %1077 = vmatmul.bf16.gmra.mxu0 %v702
        %v1078 = vpop.f32.mrf.mxu0
        %v1079 = vadd.f32 0.0, %v1078
        %v1080 = vpop.f32.mrf.mxu0
        %v1081 = vadd.f32 0.0, %v1080
        %1082 = vmatmul.bf16.gmra.mxu0 %v705
        %v1083 = vpop.f32.mrf.mxu0
        %v1084 = vadd.f32 0.0, %v1083
        %v1085 = vpop.f32.mrf.mxu0
        %v1086 = vadd.f32 0.0, %v1085
        %1087 = vmatmul.bf16.gmra.mxu0 %v708
        %v1088 = vpop.f32.mrf.mxu0
        %v1089 = vadd.f32 0.0, %v1088
        %v1090 = vpop.f32.mrf.mxu0
        %v1091 = vadd.f32 0.0, %v1090
        %1092 = vmatmul.bf16.gmra.mxu0 %v711
        %v1093 = vpop.f32.mrf.mxu0
        %v1094 = vadd.f32 0.0, %v1093
        %v1095 = vpop.f32.mrf.mxu0
        %v1096 = vadd.f32 0.0, %v1095
        %1097 = vmatmul.bf16.gmra.mxu0 %v714
        %v1098 = vpop.f32.mrf.mxu0
        %v1099 = vadd.f32 0.0, %v1098
        %v1100 = vpop.f32.mrf.mxu0
        %v1101 = vadd.f32 0.0, %v1100
        %1102 = vmatmul.bf16.gmra.mxu0 %v717
        %v1103 = vpop.f32.mrf.mxu0
        %v1104 = vadd.f32 0.0, %v1103
        %v1105 = vpop.f32.mrf.mxu0
        %v1106 = vadd.f32 0.0, %v1105
        %1107 = vdwg.mxu0
        %1108 = vmatpush.bf16.msra.mxu0 0
        %1109 = vmatpush.bf16.msra.mxu0 0
        %1110 = vmatpush.bf16.msra.mxu0 0
        %1111 = vmatpush.bf16.msra.mxu0 0
        %1112 = vmatpush.bf16.msra.mxu0 0
        %1113 = vmatpush.bf16.msra.mxu0 0
        %1114 = vmatpush.bf16.msra.mxu0 0
        %1115 = vmatpush.bf16.msra.mxu0 %v728
        %1116 = vmatmul.bf16.gmra.mxu0 %v672
        %v1117 = vpop.f32.mrf.mxu0
        %v1118 = vadd.f32 0.0, %v1117
        %v1119 = vpop.f32.mrf.mxu0
        %v1120 = vadd.f32 0.0, %v1119
        %1121 = vmatmul.bf16.gmra.mxu0 %v675
        %v1122 = vpop.f32.mrf.mxu0
        %v1123 = vadd.f32 0.0, %v1122
        %v1124 = vpop.f32.mrf.mxu0
        %v1125 = vadd.f32 0.0, %v1124
        %1126 = vmatmul.bf16.gmra.mxu0 %v678
        %v1127 = vpop.f32.mrf.mxu0
        %v1128 = vadd.f32 0.0, %v1127
        %v1129 = vpop.f32.mrf.mxu0
        %v1130 = vadd.f32 0.0, %v1129
        %1131 = vmatmul.bf16.gmra.mxu0 %v681
        %v1132 = vpop.f32.mrf.mxu0
        %v1133 = vadd.f32 0.0, %v1132
        %v1134 = vpop.f32.mrf.mxu0
        %v1135 = vadd.f32 0.0, %v1134
        %1136 = vmatmul.bf16.gmra.mxu0 %v684
        %v1137 = vpop.f32.mrf.mxu0
        %v1138 = vadd.f32 0.0, %v1137
        %v1139 = vpop.f32.mrf.mxu0
        %v1140 = vadd.f32 0.0, %v1139
        %1141 = vmatmul.bf16.gmra.mxu0 %v687
        %v1142 = vpop.f32.mrf.mxu0
        %v1143 = vadd.f32 0.0, %v1142
        %v1144 = vpop.f32.mrf.mxu0
        %v1145 = vadd.f32 0.0, %v1144
        %1146 = vmatmul.bf16.gmra.mxu0 %v690
        %v1147 = vpop.f32.mrf.mxu0
        %v1148 = vadd.f32 0.0, %v1147
        %v1149 = vpop.f32.mrf.mxu0
        %v1150 = vadd.f32 0.0, %v1149
        %1151 = vmatmul.bf16.gmra.mxu0 %v693
        %v1152 = vpop.f32.mrf.mxu0
        %v1153 = vadd.f32 0.0, %v1152
        %v1154 = vpop.f32.mrf.mxu0
        %v1155 = vadd.f32 0.0, %v1154
        %1156 = vmatmul.bf16.gmra.mxu0 %v696
        %v1157 = vpop.f32.mrf.mxu0
        %v1158 = vadd.f32 0.0, %v1157
        %v1159 = vpop.f32.mrf.mxu0
        %v1160 = vadd.f32 0.0, %v1159
        %1161 = vmatmul.bf16.gmra.mxu0 %v699
        %v1162 = vpop.f32.mrf.mxu0
        %v1163 = vadd.f32 0.0, %v1162
        %v1164 = vpop.f32.mrf.mxu0
        %v1165 = vadd.f32 0.0, %v1164
        %1166 = vmatmul.bf16.gmra.mxu0 %v702
        %v1167 = vpop.f32.mrf.mxu0
        %v1168 = vadd.f32 0.0, %v1167
        %v1169 = vpop.f32.mrf.mxu0
        %v1170 = vadd.f32 0.0, %v1169
        %1171 = vmatmul.bf16.gmra.mxu0 %v705
        %v1172 = vpop.f32.mrf.mxu0
        %v1173 = vadd.f32 0.0, %v1172
        %v1174 = vpop.f32.mrf.mxu0
        %v1175 = vadd.f32 0.0, %v1174
        %1176 = vmatmul.bf16.gmra.mxu0 %v708
        %v1177 = vpop.f32.mrf.mxu0
        %v1178 = vadd.f32 0.0, %v1177
        %v1179 = vpop.f32.mrf.mxu0
        %v1180 = vadd.f32 0.0, %v1179
        %1181 = vmatmul.bf16.gmra.mxu0 %v711
        %v1182 = vpop.f32.mrf.mxu0
        %v1183 = vadd.f32 0.0, %v1182
        %v1184 = vpop.f32.mrf.mxu0
        %v1185 = vadd.f32 0.0, %v1184
        %1186 = vmatmul.bf16.gmra.mxu0 %v714
        %v1187 = vpop.f32.mrf.mxu0
        %v1188 = vadd.f32 0.0, %v1187
        %v1189 = vpop.f32.mrf.mxu0
        %v1190 = vadd.f32 0.0, %v1189
        %1191 = vmatmul.bf16.gmra.mxu0 %v717
        %v1192 = vpop.f32.mrf.mxu0
        %v1193 = vadd.f32 0.0, %v1192
        %v1194 = vpop.f32.mrf.mxu0
        %v1195 = vadd.f32 0.0, %v1194
        %1196 = vdwg.mxu0
        %1197 = vmatpush.bf16.msra.mxu0 0
        %1198 = vmatpush.bf16.msra.mxu0 0
        %1199 = vmatpush.bf16.msra.mxu0 0
        %1200 = vmatpush.bf16.msra.mxu0 0
        %1201 = vmatpush.bf16.msra.mxu0 0
        %1202 = vmatpush.bf16.msra.mxu0 0
        %1203 = vmatpush.bf16.msra.mxu0 0
        %1204 = vmatpush.bf16.msra.mxu0 %v730
        %1205 = vmatmul.bf16.gmra.mxu0 %v672
        %v1206 = vpop.f32.mrf.mxu0
        %v1207 = vadd.f32 0.0, %v1206
        %v1208 = vpop.f32.mrf.mxu0
        %v1209 = vadd.f32 0.0, %v1208
        %1210 = vmatmul.bf16.gmra.mxu0 %v675
        %v1211 = vpop.f32.mrf.mxu0
        %v1212 = vadd.f32 0.0, %v1211
        %v1213 = vpop.f32.mrf.mxu0
        %v1214 = vadd.f32 0.0, %v1213
        %1215 = vmatmul.bf16.gmra.mxu0 %v678
        %v1216 = vpop.f32.mrf.mxu0
        %v1217 = vadd.f32 0.0, %v1216
        %v1218 = vpop.f32.mrf.mxu0
        %v1219 = vadd.f32 0.0, %v1218
        %1220 = vmatmul.bf16.gmra.mxu0 %v681
        %v1221 = vpop.f32.mrf.mxu0
        %v1222 = vadd.f32 0.0, %v1221
        %v1223 = vpop.f32.mrf.mxu0
        %v1224 = vadd.f32 0.0, %v1223
        %1225 = vmatmul.bf16.gmra.mxu0 %v684
        %v1226 = vpop.f32.mrf.mxu0
        %v1227 = vadd.f32 0.0, %v1226
        %v1228 = vpop.f32.mrf.mxu0
        %v1229 = vadd.f32 0.0, %v1228
        %1230 = vmatmul.bf16.gmra.mxu0 %v687
        %v1231 = vpop.f32.mrf.mxu0
        %v1232 = vadd.f32 0.0, %v1231
        %v1233 = vpop.f32.mrf.mxu0
        %v1234 = vadd.f32 0.0, %v1233
        %1235 = vmatmul.bf16.gmra.mxu0 %v690
        %v1236 = vpop.f32.mrf.mxu0
        %v1237 = vadd.f32 0.0, %v1236
        %v1238 = vpop.f32.mrf.mxu0
        %v1239 = vadd.f32 0.0, %v1238
        %1240 = vmatmul.bf16.gmra.mxu0 %v693
        %v1241 = vpop.f32.mrf.mxu0
        %v1242 = vadd.f32 0.0, %v1241
        %v1243 = vpop.f32.mrf.mxu0
        %v1244 = vadd.f32 0.0, %v1243
        %1245 = vmatmul.bf16.gmra.mxu0 %v696
        %v1246 = vpop.f32.mrf.mxu0
        %v1247 = vadd.f32 0.0, %v1246
        %v1248 = vpop.f32.mrf.mxu0
        %v1249 = vadd.f32 0.0, %v1248
        %1250 = vmatmul.bf16.gmra.mxu0 %v699
        %v1251 = vpop.f32.mrf.mxu0
        %v1252 = vadd.f32 0.0, %v1251
        %v1253 = vpop.f32.mrf.mxu0
        %v1254 = vadd.f32 0.0, %v1253
        %1255 = vmatmul.bf16.gmra.mxu0 %v702
        %v1256 = vpop.f32.mrf.mxu0
        %v1257 = vadd.f32 0.0, %v1256
        %v1258 = vpop.f32.mrf.mxu0
        %v1259 = vadd.f32 0.0, %v1258
        %1260 = vmatmul.bf16.gmra.mxu0 %v705
        %v1261 = vpop.f32.mrf.mxu0
        %v1262 = vadd.f32 0.0, %v1261
        %v1263 = vpop.f32.mrf.mxu0
        %v1264 = vadd.f32 0.0, %v1263
        %1265 = vmatmul.bf16.gmra.mxu0 %v708
        %v1266 = vpop.f32.mrf.mxu0
        %v1267 = vadd.f32 0.0, %v1266
        %v1268 = vpop.f32.mrf.mxu0
        %v1269 = vadd.f32 0.0, %v1268
        %1270 = vmatmul.bf16.gmra.mxu0 %v711
        %v1271 = vpop.f32.mrf.mxu0
        %v1272 = vadd.f32 0.0, %v1271
        %v1273 = vpop.f32.mrf.mxu0
        %v1274 = vadd.f32 0.0, %v1273
        %1275 = vmatmul.bf16.gmra.mxu0 %v714
        %v1276 = vpop.f32.mrf.mxu0
        %v1277 = vadd.f32 0.0, %v1276
        %v1278 = vpop.f32.mrf.mxu0
        %v1279 = vadd.f32 0.0, %v1278
        %1280 = vmatmul.bf16.gmra.mxu0 %v717
        %v1281 = vpop.f32.mrf.mxu0
        %v1282 = vadd.f32 0.0, %v1281
        %v1283 = vpop.f32.mrf.mxu0
        %v1284 = vadd.f32 0.0, %v1283
        %1285 = vdwg.mxu0
        %1286 = vmatpush.bf16.msra.mxu0 0
        %1287 = vmatpush.bf16.msra.mxu0 0
        %1288 = vmatpush.bf16.msra.mxu0 0
        %1289 = vmatpush.bf16.msra.mxu0 0
        %1290 = vmatpush.bf16.msra.mxu0 0
        %1291 = vmatpush.bf16.msra.mxu0 0
        %1292 = vmatpush.bf16.msra.mxu0 0
        %1293 = vmatpush.bf16.msra.mxu0 %v732
        %1294 = vmatmul.bf16.gmra.mxu0 %v672
        %v1295 = vpop.f32.mrf.mxu0
        %v1296 = vadd.f32 0.0, %v1295
        %v1297 = vpop.f32.mrf.mxu0
        %v1298 = vadd.f32 0.0, %v1297
        %1299 = vmatmul.bf16.gmra.mxu0 %v675
        %v1300 = vpop.f32.mrf.mxu0
        %v1301 = vadd.f32 0.0, %v1300
        %v1302 = vpop.f32.mrf.mxu0
        %v1303 = vadd.f32 0.0, %v1302
        %1304 = vmatmul.bf16.gmra.mxu0 %v678
        %v1305 = vpop.f32.mrf.mxu0
        %v1306 = vadd.f32 0.0, %v1305
        %v1307 = vpop.f32.mrf.mxu0
        %v1308 = vadd.f32 0.0, %v1307
        %1309 = vmatmul.bf16.gmra.mxu0 %v681
        %v1310 = vpop.f32.mrf.mxu0
        %v1311 = vadd.f32 0.0, %v1310
        %v1312 = vpop.f32.mrf.mxu0
        %v1313 = vadd.f32 0.0, %v1312
        %1314 = vmatmul.bf16.gmra.mxu0 %v684
        %v1315 = vpop.f32.mrf.mxu0
        %v1316 = vadd.f32 0.0, %v1315
        %v1317 = vpop.f32.mrf.mxu0
        %v1318 = vadd.f32 0.0, %v1317
        %1319 = vmatmul.bf16.gmra.mxu0 %v687
        %v1320 = vpop.f32.mrf.mxu0
        %v1321 = vadd.f32 0.0, %v1320
        %v1322 = vpop.f32.mrf.mxu0
        %v1323 = vadd.f32 0.0, %v1322
        %1324 = vmatmul.bf16.gmra.mxu0 %v690
        %v1325 = vpop.f32.mrf.mxu0
        %v1326 = vadd.f32 0.0, %v1325
        %v1327 = vpop.f32.mrf.mxu0
        %v1328 = vadd.f32 0.0, %v1327
        %1329 = vmatmul.bf16.gmra.mxu0 %v693
        %v1330 = vpop.f32.mrf.mxu0
        %v1331 = vadd.f32 0.0, %v1330
        %v1332 = vpop.f32.mrf.mxu0
        %v1333 = vadd.f32 0.0, %v1332
        %1334 = vmatmul.bf16.gmra.mxu0 %v696
        %v1335 = vpop.f32.mrf.mxu0
        %v1336 = vadd.f32 0.0, %v1335
        %v1337 = vpop.f32.mrf.mxu0
        %v1338 = vadd.f32 0.0, %v1337
        %1339 = vmatmul.bf16.gmra.mxu0 %v699
        %v1340 = vpop.f32.mrf.mxu0
        %v1341 = vadd.f32 0.0, %v1340
        %v1342 = vpop.f32.mrf.mxu0
        %v1343 = vadd.f32 0.0, %v1342
        %1344 = vmatmul.bf16.gmra.mxu0 %v702
        %v1345 = vpop.f32.mrf.mxu0
        %v1346 = vadd.f32 0.0, %v1345
        %v1347 = vpop.f32.mrf.mxu0
        %v1348 = vadd.f32 0.0, %v1347
        %1349 = vmatmul.bf16.gmra.mxu0 %v705
        %v1350 = vpop.f32.mrf.mxu0
        %v1351 = vadd.f32 0.0, %v1350
        %v1352 = vpop.f32.mrf.mxu0
        %v1353 = vadd.f32 0.0, %v1352
        %1354 = vmatmul.bf16.gmra.mxu0 %v708
        %v1355 = vpop.f32.mrf.mxu0
        %v1356 = vadd.f32 0.0, %v1355
        %v1357 = vpop.f32.mrf.mxu0
        %v1358 = vadd.f32 0.0, %v1357
        %1359 = vmatmul.bf16.gmra.mxu0 %v711
        %v1360 = vpop.f32.mrf.mxu0
        %v1361 = vadd.f32 0.0, %v1360
        %v1362 = vpop.f32.mrf.mxu0
        %v1363 = vadd.f32 0.0, %v1362
        %1364 = vmatmul.bf16.gmra.mxu0 %v714
        %v1365 = vpop.f32.mrf.mxu0
        %v1366 = vadd.f32 0.0, %v1365
        %v1367 = vpop.f32.mrf.mxu0
        %v1368 = vadd.f32 0.0, %v1367
        %1369 = vmatmul.bf16.gmra.mxu0 %v717
        %v1370 = vpop.f32.mrf.mxu0
        %v1371 = vadd.f32 0.0, %v1370
        %v1372 = vpop.f32.mrf.mxu0
        %v1373 = vadd.f32 0.0, %v1372
        %1374 = vdwg.mxu0
        %1375 = vmatpush.bf16.msra.mxu0 0
        %1376 = vmatpush.bf16.msra.mxu0 0
        %1377 = vmatpush.bf16.msra.mxu0 0
        %1378 = vmatpush.bf16.msra.mxu0 0
        %1379 = vmatpush.bf16.msra.mxu0 0
        %1380 = vmatpush.bf16.msra.mxu0 0
        %1381 = vmatpush.bf16.msra.mxu0 0
        %1382 = vmatpush.bf16.msra.mxu0 %v734
        %1383 = vmatmul.bf16.gmra.mxu0 %v672
        %v1384 = vpop.f32.mrf.mxu0
        %v1385 = vadd.f32 0.0, %v1384
        %v1386 = vpop.f32.mrf.mxu0
        %v1387 = vadd.f32 0.0, %v1386
        %1388 = vmatmul.bf16.gmra.mxu0 %v675
        %v1389 = vpop.f32.mrf.mxu0
        %v1390 = vadd.f32 0.0, %v1389
        %v1391 = vpop.f32.mrf.mxu0
        %v1392 = vadd.f32 0.0, %v1391
        %1393 = vmatmul.bf16.gmra.mxu0 %v678
        %v1394 = vpop.f32.mrf.mxu0
        %v1395 = vadd.f32 0.0, %v1394
        %v1396 = vpop.f32.mrf.mxu0
        %v1397 = vadd.f32 0.0, %v1396
        %1398 = vmatmul.bf16.gmra.mxu0 %v681
        %v1399 = vpop.f32.mrf.mxu0
        %v1400 = vadd.f32 0.0, %v1399
        %v1401 = vpop.f32.mrf.mxu0
        %v1402 = vadd.f32 0.0, %v1401
        %1403 = vmatmul.bf16.gmra.mxu0 %v684
        %v1404 = vpop.f32.mrf.mxu0
        %v1405 = vadd.f32 0.0, %v1404
        %v1406 = vpop.f32.mrf.mxu0
        %v1407 = vadd.f32 0.0, %v1406
        %1408 = vmatmul.bf16.gmra.mxu0 %v687
        %v1409 = vpop.f32.mrf.mxu0
        %v1410 = vadd.f32 0.0, %v1409
        %v1411 = vpop.f32.mrf.mxu0
        %v1412 = vadd.f32 0.0, %v1411
        %1413 = vmatmul.bf16.gmra.mxu0 %v690
        %v1414 = vpop.f32.mrf.mxu0
        %v1415 = vadd.f32 0.0, %v1414
        %v1416 = vpop.f32.mrf.mxu0
        %v1417 = vadd.f32 0.0, %v1416
        %1418 = vmatmul.bf16.gmra.mxu0 %v693
        %v1419 = vpop.f32.mrf.mxu0
        %v1420 = vadd.f32 0.0, %v1419
        %v1421 = vpop.f32.mrf.mxu0
        %v1422 = vadd.f32 0.0, %v1421
        %1423 = vmatmul.bf16.gmra.mxu0 %v696
        %v1424 = vpop.f32.mrf.mxu0
        %v1425 = vadd.f32 0.0, %v1424
        %v1426 = vpop.f32.mrf.mxu0
        %v1427 = vadd.f32 0.0, %v1426
        %1428 = vmatmul.bf16.gmra.mxu0 %v699
        %v1429 = vpop.f32.mrf.mxu0
        %v1430 = vadd.f32 0.0, %v1429
        %v1431 = vpop.f32.mrf.mxu0
        %v1432 = vadd.f32 0.0, %v1431
        %1433 = vmatmul.bf16.gmra.mxu0 %v702
        %v1434 = vpop.f32.mrf.mxu0
        %v1435 = vadd.f32 0.0, %v1434
        %v1436 = vpop.f32.mrf.mxu0
        %v1437 = vadd.f32 0.0, %v1436
        %1438 = vmatmul.bf16.gmra.mxu0 %v705
        %v1439 = vpop.f32.mrf.mxu0
        %v1440 = vadd.f32 0.0, %v1439
        %v1441 = vpop.f32.mrf.mxu0
        %v1442 = vadd.f32 0.0, %v1441
        %1443 = vmatmul.bf16.gmra.mxu0 %v708
        %v1444 = vpop.f32.mrf.mxu0
        %v1445 = vadd.f32 0.0, %v1444
        %v1446 = vpop.f32.mrf.mxu0
        %v1447 = vadd.f32 0.0, %v1446
        %1448 = vmatmul.bf16.gmra.mxu0 %v711
        %v1449 = vpop.f32.mrf.mxu0
        %v1450 = vadd.f32 0.0, %v1449
        %v1451 = vpop.f32.mrf.mxu0
        %v1452 = vadd.f32 0.0, %v1451
        %1453 = vmatmul.bf16.gmra.mxu0 %v714
        %v1454 = vpop.f32.mrf.mxu0
        %v1455 = vadd.f32 0.0, %v1454
        %v1456 = vpop.f32.mrf.mxu0
        %v1457 = vadd.f32 0.0, %v1456
        %1458 = vmatmul.bf16.gmra.mxu0 %v717
        %v1459 = vpop.f32.mrf.mxu0
        %v1460 = vadd.f32 0.0, %v1459
        %v1461 = vpop.f32.mrf.mxu0
        %v1462 = vadd.f32 0.0, %v1461
        %1463 = vdwg.mxu0
        %1464 = vmatpush.bf16.msra.mxu0 0
        %1465 = vmatpush.bf16.msra.mxu0 0
        %1466 = vmatpush.bf16.msra.mxu0 0
        %1467 = vmatpush.bf16.msra.mxu0 0
        %1468 = vmatpush.bf16.msra.mxu0 0
        %1469 = vmatpush.bf16.msra.mxu0 0
        %1470 = vmatpush.bf16.msra.mxu0 0
        %1471 = vmatpush.bf16.msra.mxu0 %v736
        %1472 = vmatmul.bf16.gmra.mxu0 %v672
        %v1473 = vpop.f32.mrf.mxu0
        %v1474 = vadd.f32 0.0, %v1473
        %v1475 = vpop.f32.mrf.mxu0
        %v1476 = vadd.f32 0.0, %v1475
        %1477 = vmatmul.bf16.gmra.mxu0 %v675
        %v1478 = vpop.f32.mrf.mxu0
        %v1479 = vadd.f32 0.0, %v1478
        %v1480 = vpop.f32.mrf.mxu0
        %v1481 = vadd.f32 0.0, %v1480
        %1482 = vmatmul.bf16.gmra.mxu0 %v678
        %v1483 = vpop.f32.mrf.mxu0
        %v1484 = vadd.f32 0.0, %v1483
        %v1485 = vpop.f32.mrf.mxu0
        %v1486 = vadd.f32 0.0, %v1485
        %1487 = vmatmul.bf16.gmra.mxu0 %v681
        %v1488 = vpop.f32.mrf.mxu0
        %v1489 = vadd.f32 0.0, %v1488
        %v1490 = vpop.f32.mrf.mxu0
        %v1491 = vadd.f32 0.0, %v1490
        %1492 = vmatmul.bf16.gmra.mxu0 %v684
        %v1493 = vpop.f32.mrf.mxu0
        %v1494 = vadd.f32 0.0, %v1493
        %v1495 = vpop.f32.mrf.mxu0
        %v1496 = vadd.f32 0.0, %v1495
        %1497 = vmatmul.bf16.gmra.mxu0 %v687
        %v1498 = vpop.f32.mrf.mxu0
        %v1499 = vadd.f32 0.0, %v1498
        %v1500 = vpop.f32.mrf.mxu0
        %v1501 = vadd.f32 0.0, %v1500
        %1502 = vmatmul.bf16.gmra.mxu0 %v690
        %v1503 = vpop.f32.mrf.mxu0
        %v1504 = vadd.f32 0.0, %v1503
        %v1505 = vpop.f32.mrf.mxu0
        %v1506 = vadd.f32 0.0, %v1505
        %1507 = vmatmul.bf16.gmra.mxu0 %v693
        %v1508 = vpop.f32.mrf.mxu0
        %v1509 = vadd.f32 0.0, %v1508
        %v1510 = vpop.f32.mrf.mxu0
        %v1511 = vadd.f32 0.0, %v1510
        %1512 = vmatmul.bf16.gmra.mxu0 %v696
        %v1513 = vpop.f32.mrf.mxu0
        %v1514 = vadd.f32 0.0, %v1513
        %v1515 = vpop.f32.mrf.mxu0
        %v1516 = vadd.f32 0.0, %v1515
        %1517 = vmatmul.bf16.gmra.mxu0 %v699
        %v1518 = vpop.f32.mrf.mxu0
        %v1519 = vadd.f32 0.0, %v1518
        %v1520 = vpop.f32.mrf.mxu0
        %v1521 = vadd.f32 0.0, %v1520
        %1522 = vmatmul.bf16.gmra.mxu0 %v702
        %v1523 = vpop.f32.mrf.mxu0
        %v1524 = vadd.f32 0.0, %v1523
        %v1525 = vpop.f32.mrf.mxu0
        %v1526 = vadd.f32 0.0, %v1525
        %1527 = vmatmul.bf16.gmra.mxu0 %v705
        %v1528 = vpop.f32.mrf.mxu0
        %v1529 = vadd.f32 0.0, %v1528
        %v1530 = vpop.f32.mrf.mxu0
        %v1531 = vadd.f32 0.0, %v1530
        %1532 = vmatmul.bf16.gmra.mxu0 %v708
        %v1533 = vpop.f32.mrf.mxu0
        %v1534 = vadd.f32 0.0, %v1533
        %v1535 = vpop.f32.mrf.mxu0
        %v1536 = vadd.f32 0.0, %v1535
        %1537 = vmatmul.bf16.gmra.mxu0 %v711
        %v1538 = vpop.f32.mrf.mxu0
        %v1539 = vadd.f32 0.0, %v1538
        %v1540 = vpop.f32.mrf.mxu0
        %v1541 = vadd.f32 0.0, %v1540
        %1542 = vmatmul.bf16.gmra.mxu0 %v714
        %v1543 = vpop.f32.mrf.mxu0
        %v1544 = vadd.f32 0.0, %v1543
        %v1545 = vpop.f32.mrf.mxu0
        %v1546 = vadd.f32 0.0, %v1545
        %1547 = vmatmul.bf16.gmra.mxu0 %v717
        %v1548 = vpop.f32.mrf.mxu0
        %v1549 = vadd.f32 0.0, %v1548
        %v1550 = vpop.f32.mrf.mxu0
        %v1551 = vadd.f32 0.0, %v1550
        %1552 = vdwg.mxu0
        %1553 = vmatpush.bf16.msra.mxu0 0
        %1554 = vmatpush.bf16.msra.mxu0 0
        %1555 = vmatpush.bf16.msra.mxu0 0
        %1556 = vmatpush.bf16.msra.mxu0 0
        %1557 = vmatpush.bf16.msra.mxu0 0
        %1558 = vmatpush.bf16.msra.mxu0 0
        %1559 = vmatpush.bf16.msra.mxu0 0
        %1560 = vmatpush.bf16.msra.mxu0 %v738
        %1561 = vmatmul.bf16.gmra.mxu0 %v672
        %v1562 = vpop.f32.mrf.mxu0
        %v1563 = vadd.f32 0.0, %v1562
        %v1564 = vpop.f32.mrf.mxu0
        %v1565 = vadd.f32 0.0, %v1564
        %1566 = vmatmul.bf16.gmra.mxu0 %v675
        %v1567 = vpop.f32.mrf.mxu0
        %v1568 = vadd.f32 0.0, %v1567
        %v1569 = vpop.f32.mrf.mxu0
        %v1570 = vadd.f32 0.0, %v1569
        %1571 = vmatmul.bf16.gmra.mxu0 %v678
        %v1572 = vpop.f32.mrf.mxu0
        %v1573 = vadd.f32 0.0, %v1572
        %v1574 = vpop.f32.mrf.mxu0
        %v1575 = vadd.f32 0.0, %v1574
        %1576 = vmatmul.bf16.gmra.mxu0 %v681
        %v1577 = vpop.f32.mrf.mxu0
        %v1578 = vadd.f32 0.0, %v1577
        %v1579 = vpop.f32.mrf.mxu0
        %v1580 = vadd.f32 0.0, %v1579
        %1581 = vmatmul.bf16.gmra.mxu0 %v684
        %v1582 = vpop.f32.mrf.mxu0
        %v1583 = vadd.f32 0.0, %v1582
        %v1584 = vpop.f32.mrf.mxu0
        %v1585 = vadd.f32 0.0, %v1584
        %1586 = vmatmul.bf16.gmra.mxu0 %v687
        %v1587 = vpop.f32.mrf.mxu0
        %v1588 = vadd.f32 0.0, %v1587
        %v1589 = vpop.f32.mrf.mxu0
        %v1590 = vadd.f32 0.0, %v1589
        %1591 = vmatmul.bf16.gmra.mxu0 %v690
        %v1592 = vpop.f32.mrf.mxu0
        %v1593 = vadd.f32 0.0, %v1592
        %v1594 = vpop.f32.mrf.mxu0
        %v1595 = vadd.f32 0.0, %v1594
        %1596 = vmatmul.bf16.gmra.mxu0 %v693
        %v1597 = vpop.f32.mrf.mxu0
        %v1598 = vadd.f32 0.0, %v1597
        %v1599 = vpop.f32.mrf.mxu0
        %v1600 = vadd.f32 0.0, %v1599
        %1601 = vmatmul.bf16.gmra.mxu0 %v696
        %v1602 = vpop.f32.mrf.mxu0
        %v1603 = vadd.f32 0.0, %v1602
        %v1604 = vpop.f32.mrf.mxu0
        %v1605 = vadd.f32 0.0, %v1604
        %1606 = vmatmul.bf16.gmra.mxu0 %v699
        %v1607 = vpop.f32.mrf.mxu0
        %v1608 = vadd.f32 0.0, %v1607
        %v1609 = vpop.f32.mrf.mxu0
        %v1610 = vadd.f32 0.0, %v1609
        %1611 = vmatmul.bf16.gmra.mxu0 %v702
        %v1612 = vpop.f32.mrf.mxu0
        %v1613 = vadd.f32 0.0, %v1612
        %v1614 = vpop.f32.mrf.mxu0
        %v1615 = vadd.f32 0.0, %v1614
        %1616 = vmatmul.bf16.gmra.mxu0 %v705
        %v1617 = vpop.f32.mrf.mxu0
        %v1618 = vadd.f32 0.0, %v1617
        %v1619 = vpop.f32.mrf.mxu0
        %v1620 = vadd.f32 0.0, %v1619
        %1621 = vmatmul.bf16.gmra.mxu0 %v708
        %v1622 = vpop.f32.mrf.mxu0
        %v1623 = vadd.f32 0.0, %v1622
        %v1624 = vpop.f32.mrf.mxu0
        %v1625 = vadd.f32 0.0, %v1624
        %1626 = vmatmul.bf16.gmra.mxu0 %v711
        %v1627 = vpop.f32.mrf.mxu0
        %v1628 = vadd.f32 0.0, %v1627
        %v1629 = vpop.f32.mrf.mxu0
        %v1630 = vadd.f32 0.0, %v1629
        %1631 = vmatmul.bf16.gmra.mxu0 %v714
        %v1632 = vpop.f32.mrf.mxu0
        %v1633 = vadd.f32 0.0, %v1632
        %v1634 = vpop.f32.mrf.mxu0
        %v1635 = vadd.f32 0.0, %v1634
        %1636 = vmatmul.bf16.gmra.mxu0 %v717
        %v1637 = vpop.f32.mrf.mxu0
        %v1638 = vadd.f32 0.0, %v1637
        %v1639 = vpop.f32.mrf.mxu0
        %v1640 = vadd.f32 0.0, %v1639
        %1641 = vdwg.mxu0
        %1642 = vmatpush.bf16.msra.mxu0 0
        %1643 = vmatpush.bf16.msra.mxu0 0
        %1644 = vmatpush.bf16.msra.mxu0 0
        %1645 = vmatpush.bf16.msra.mxu0 0
        %1646 = vmatpush.bf16.msra.mxu0 0
        %1647 = vmatpush.bf16.msra.mxu0 0
        %1648 = vmatpush.bf16.msra.mxu0 0
        %1649 = vmatpush.bf16.msra.mxu0 %v740
        %1650 = vmatmul.bf16.gmra.mxu0 %v672
        %v1651 = vpop.f32.mrf.mxu0
        %v1652 = vadd.f32 0.0, %v1651
        %v1653 = vpop.f32.mrf.mxu0
        %v1654 = vadd.f32 0.0, %v1653
        %1655 = vmatmul.bf16.gmra.mxu0 %v675
        %v1656 = vpop.f32.mrf.mxu0
        %v1657 = vadd.f32 0.0, %v1656
        %v1658 = vpop.f32.mrf.mxu0
        %v1659 = vadd.f32 0.0, %v1658
        %1660 = vmatmul.bf16.gmra.mxu0 %v678
        %v1661 = vpop.f32.mrf.mxu0
        %v1662 = vadd.f32 0.0, %v1661
        %v1663 = vpop.f32.mrf.mxu0
        %v1664 = vadd.f32 0.0, %v1663
        %1665 = vmatmul.bf16.gmra.mxu0 %v681
        %v1666 = vpop.f32.mrf.mxu0
        %v1667 = vadd.f32 0.0, %v1666
        %v1668 = vpop.f32.mrf.mxu0
        %v1669 = vadd.f32 0.0, %v1668
        %1670 = vmatmul.bf16.gmra.mxu0 %v684
        %v1671 = vpop.f32.mrf.mxu0
        %v1672 = vadd.f32 0.0, %v1671
        %v1673 = vpop.f32.mrf.mxu0
        %v1674 = vadd.f32 0.0, %v1673
        %1675 = vmatmul.bf16.gmra.mxu0 %v687
        %v1676 = vpop.f32.mrf.mxu0
        %v1677 = vadd.f32 0.0, %v1676
        %v1678 = vpop.f32.mrf.mxu0
        %v1679 = vadd.f32 0.0, %v1678
        %1680 = vmatmul.bf16.gmra.mxu0 %v690
        %v1681 = vpop.f32.mrf.mxu0
        %v1682 = vadd.f32 0.0, %v1681
        %v1683 = vpop.f32.mrf.mxu0
        %v1684 = vadd.f32 0.0, %v1683
        %1685 = vmatmul.bf16.gmra.mxu0 %v693
        %v1686 = vpop.f32.mrf.mxu0
        %v1687 = vadd.f32 0.0, %v1686
        %v1688 = vpop.f32.mrf.mxu0
        %v1689 = vadd.f32 0.0, %v1688
        %1690 = vmatmul.bf16.gmra.mxu0 %v696
        %v1691 = vpop.f32.mrf.mxu0
        %v1692 = vadd.f32 0.0, %v1691
        %v1693 = vpop.f32.mrf.mxu0
        %v1694 = vadd.f32 0.0, %v1693
        %1695 = vmatmul.bf16.gmra.mxu0 %v699
        %v1696 = vpop.f32.mrf.mxu0
        %v1697 = vadd.f32 0.0, %v1696
        %v1698 = vpop.f32.mrf.mxu0
        %v1699 = vadd.f32 0.0, %v1698
        %1700 = vmatmul.bf16.gmra.mxu0 %v702
        %v1701 = vpop.f32.mrf.mxu0
        %v1702 = vadd.f32 0.0, %v1701
        %v1703 = vpop.f32.mrf.mxu0
        %v1704 = vadd.f32 0.0, %v1703
        %1705 = vmatmul.bf16.gmra.mxu0 %v705
        %v1706 = vpop.f32.mrf.mxu0
        %v1707 = vadd.f32 0.0, %v1706
        %v1708 = vpop.f32.mrf.mxu0
        %v1709 = vadd.f32 0.0, %v1708
        %1710 = vmatmul.bf16.gmra.mxu0 %v708
        %v1711 = vpop.f32.mrf.mxu0
        %v1712 = vadd.f32 0.0, %v1711
        %v1713 = vpop.f32.mrf.mxu0
        %v1714 = vadd.f32 0.0, %v1713
        %1715 = vmatmul.bf16.gmra.mxu0 %v711
        %v1716 = vpop.f32.mrf.mxu0
        %v1717 = vadd.f32 0.0, %v1716
        %v1718 = vpop.f32.mrf.mxu0
        %v1719 = vadd.f32 0.0, %v1718
        %1720 = vmatmul.bf16.gmra.mxu0 %v714
        %v1721 = vpop.f32.mrf.mxu0
        %v1722 = vadd.f32 0.0, %v1721
        %v1723 = vpop.f32.mrf.mxu0
        %v1724 = vadd.f32 0.0, %v1723
        %1725 = vmatmul.bf16.gmra.mxu0 %v717
        %v1726 = vpop.f32.mrf.mxu0
        %v1727 = vadd.f32 0.0, %v1726
        %v1728 = vpop.f32.mrf.mxu0
        %v1729 = vadd.f32 0.0, %v1728
        %1730 = vdwg.mxu0
        %1731 = vmatpush.bf16.msra.mxu0 0
        %1732 = vmatpush.bf16.msra.mxu0 0
        %1733 = vmatpush.bf16.msra.mxu0 0
        %1734 = vmatpush.bf16.msra.mxu0 0
        %1735 = vmatpush.bf16.msra.mxu0 0
        %1736 = vmatpush.bf16.msra.mxu0 0
        %1737 = vmatpush.bf16.msra.mxu0 0
        %1738 = vmatpush.bf16.msra.mxu0 %v742
        %1739 = vmatmul.bf16.gmra.mxu0 %v672
        %v1740 = vpop.f32.mrf.mxu0
        %v1741 = vadd.f32 0.0, %v1740
        %v1742 = vpop.f32.mrf.mxu0
        %v1743 = vadd.f32 0.0, %v1742
        %1744 = vmatmul.bf16.gmra.mxu0 %v675
        %v1745 = vpop.f32.mrf.mxu0
        %v1746 = vadd.f32 0.0, %v1745
        %v1747 = vpop.f32.mrf.mxu0
        %v1748 = vadd.f32 0.0, %v1747
        %1749 = vmatmul.bf16.gmra.mxu0 %v678
        %v1750 = vpop.f32.mrf.mxu0
        %v1751 = vadd.f32 0.0, %v1750
        %v1752 = vpop.f32.mrf.mxu0
        %v1753 = vadd.f32 0.0, %v1752
        %1754 = vmatmul.bf16.gmra.mxu0 %v681
        %v1755 = vpop.f32.mrf.mxu0
        %v1756 = vadd.f32 0.0, %v1755
        %v1757 = vpop.f32.mrf.mxu0
        %v1758 = vadd.f32 0.0, %v1757
        %1759 = vmatmul.bf16.gmra.mxu0 %v684
        %v1760 = vpop.f32.mrf.mxu0
        %v1761 = vadd.f32 0.0, %v1760
        %v1762 = vpop.f32.mrf.mxu0
        %v1763 = vadd.f32 0.0, %v1762
        %1764 = vmatmul.bf16.gmra.mxu0 %v687
        %v1765 = vpop.f32.mrf.mxu0
        %v1766 = vadd.f32 0.0, %v1765
        %v1767 = vpop.f32.mrf.mxu0
        %v1768 = vadd.f32 0.0, %v1767
        %1769 = vmatmul.bf16.gmra.mxu0 %v690
        %v1770 = vpop.f32.mrf.mxu0
        %v1771 = vadd.f32 0.0, %v1770
        %v1772 = vpop.f32.mrf.mxu0
        %v1773 = vadd.f32 0.0, %v1772
        %1774 = vmatmul.bf16.gmra.mxu0 %v693
        %v1775 = vpop.f32.mrf.mxu0
        %v1776 = vadd.f32 0.0, %v1775
        %v1777 = vpop.f32.mrf.mxu0
        %v1778 = vadd.f32 0.0, %v1777
        %1779 = vmatmul.bf16.gmra.mxu0 %v696
        %v1780 = vpop.f32.mrf.mxu0
        %v1781 = vadd.f32 0.0, %v1780
        %v1782 = vpop.f32.mrf.mxu0
        %v1783 = vadd.f32 0.0, %v1782
        %1784 = vmatmul.bf16.gmra.mxu0 %v699
        %v1785 = vpop.f32.mrf.mxu0
        %v1786 = vadd.f32 0.0, %v1785
        %v1787 = vpop.f32.mrf.mxu0
        %v1788 = vadd.f32 0.0, %v1787
        %1789 = vmatmul.bf16.gmra.mxu0 %v702
        %v1790 = vpop.f32.mrf.mxu0
        %v1791 = vadd.f32 0.0, %v1790
        %v1792 = vpop.f32.mrf.mxu0
        %v1793 = vadd.f32 0.0, %v1792
        %1794 = vmatmul.bf16.gmra.mxu0 %v705
        %v1795 = vpop.f32.mrf.mxu0
        %v1796 = vadd.f32 0.0, %v1795
        %v1797 = vpop.f32.mrf.mxu0
        %v1798 = vadd.f32 0.0, %v1797
        %1799 = vmatmul.bf16.gmra.mxu0 %v708
        %v1800 = vpop.f32.mrf.mxu0
        %v1801 = vadd.f32 0.0, %v1800
        %v1802 = vpop.f32.mrf.mxu0
        %v1803 = vadd.f32 0.0, %v1802
        %1804 = vmatmul.bf16.gmra.mxu0 %v711
        %v1805 = vpop.f32.mrf.mxu0
        %v1806 = vadd.f32 0.0, %v1805
        %v1807 = vpop.f32.mrf.mxu0
        %v1808 = vadd.f32 0.0, %v1807
        %1809 = vmatmul.bf16.gmra.mxu0 %v714
        %v1810 = vpop.f32.mrf.mxu0
        %v1811 = vadd.f32 0.0, %v1810
        %v1812 = vpop.f32.mrf.mxu0
        %v1813 = vadd.f32 0.0, %v1812
        %1814 = vmatmul.bf16.gmra.mxu0 %v717
        %v1815 = vpop.f32.mrf.mxu0
        %v1816 = vadd.f32 0.0, %v1815
        %v1817 = vpop.f32.mrf.mxu0
        %v1818 = vadd.f32 0.0, %v1817
        %1819 = vdwg.mxu0
        %1820 = vmatpush.bf16.msra.mxu0 0
        %1821 = vmatpush.bf16.msra.mxu0 0
        %1822 = vmatpush.bf16.msra.mxu0 0
        %1823 = vmatpush.bf16.msra.mxu0 0
        %1824 = vmatpush.bf16.msra.mxu0 0
        %1825 = vmatpush.bf16.msra.mxu0 0
        %1826 = vmatpush.bf16.msra.mxu0 0
        %1827 = vmatpush.bf16.msra.mxu0 %v744
        %1828 = vmatmul.bf16.gmra.mxu0 %v672
        %v1829 = vpop.f32.mrf.mxu0
        %v1830 = vadd.f32 0.0, %v1829
        %v1831 = vpop.f32.mrf.mxu0
        %v1832 = vadd.f32 0.0, %v1831
        %1833 = vmatmul.bf16.gmra.mxu0 %v675
        %v1834 = vpop.f32.mrf.mxu0
        %v1835 = vadd.f32 0.0, %v1834
        %v1836 = vpop.f32.mrf.mxu0
        %v1837 = vadd.f32 0.0, %v1836
        %1838 = vmatmul.bf16.gmra.mxu0 %v678
        %v1839 = vpop.f32.mrf.mxu0
        %v1840 = vadd.f32 0.0, %v1839
        %v1841 = vpop.f32.mrf.mxu0
        %v1842 = vadd.f32 0.0, %v1841
        %1843 = vmatmul.bf16.gmra.mxu0 %v681
        %v1844 = vpop.f32.mrf.mxu0
        %v1845 = vadd.f32 0.0, %v1844
        %v1846 = vpop.f32.mrf.mxu0
        %v1847 = vadd.f32 0.0, %v1846
        %1848 = vmatmul.bf16.gmra.mxu0 %v684
        %v1849 = vpop.f32.mrf.mxu0
        %v1850 = vadd.f32 0.0, %v1849
        %v1851 = vpop.f32.mrf.mxu0
        %v1852 = vadd.f32 0.0, %v1851
        %1853 = vmatmul.bf16.gmra.mxu0 %v687
        %v1854 = vpop.f32.mrf.mxu0
        %v1855 = vadd.f32 0.0, %v1854
        %v1856 = vpop.f32.mrf.mxu0
        %v1857 = vadd.f32 0.0, %v1856
        %1858 = vmatmul.bf16.gmra.mxu0 %v690
        %v1859 = vpop.f32.mrf.mxu0
        %v1860 = vadd.f32 0.0, %v1859
        %v1861 = vpop.f32.mrf.mxu0
        %v1862 = vadd.f32 0.0, %v1861
        %1863 = vmatmul.bf16.gmra.mxu0 %v693
        %v1864 = vpop.f32.mrf.mxu0
        %v1865 = vadd.f32 0.0, %v1864
        %v1866 = vpop.f32.mrf.mxu0
        %v1867 = vadd.f32 0.0, %v1866
        %1868 = vmatmul.bf16.gmra.mxu0 %v696
        %v1869 = vpop.f32.mrf.mxu0
        %v1870 = vadd.f32 0.0, %v1869
        %v1871 = vpop.f32.mrf.mxu0
        %v1872 = vadd.f32 0.0, %v1871
        %1873 = vmatmul.bf16.gmra.mxu0 %v699
        %v1874 = vpop.f32.mrf.mxu0
        %v1875 = vadd.f32 0.0, %v1874
        %v1876 = vpop.f32.mrf.mxu0
        %v1877 = vadd.f32 0.0, %v1876
        %1878 = vmatmul.bf16.gmra.mxu0 %v702
        %v1879 = vpop.f32.mrf.mxu0
        %v1880 = vadd.f32 0.0, %v1879
        %v1881 = vpop.f32.mrf.mxu0
        %v1882 = vadd.f32 0.0, %v1881
        %1883 = vmatmul.bf16.gmra.mxu0 %v705
        %v1884 = vpop.f32.mrf.mxu0
        %v1885 = vadd.f32 0.0, %v1884
        %v1886 = vpop.f32.mrf.mxu0
        %v1887 = vadd.f32 0.0, %v1886
        %1888 = vmatmul.bf16.gmra.mxu0 %v708
        %v1889 = vpop.f32.mrf.mxu0
        %v1890 = vadd.f32 0.0, %v1889
        %v1891 = vpop.f32.mrf.mxu0
        %v1892 = vadd.f32 0.0, %v1891
        %1893 = vmatmul.bf16.gmra.mxu0 %v711
        %v1894 = vpop.f32.mrf.mxu0
        %v1895 = vadd.f32 0.0, %v1894
        %v1896 = vpop.f32.mrf.mxu0
        %v1897 = vadd.f32 0.0, %v1896
        %1898 = vmatmul.bf16.gmra.mxu0 %v714
        %v1899 = vpop.f32.mrf.mxu0
        %v1900 = vadd.f32 0.0, %v1899
        %v1901 = vpop.f32.mrf.mxu0
        %v1902 = vadd.f32 0.0, %v1901
        %1903 = vmatmul.bf16.gmra.mxu0 %v717
        %v1904 = vpop.f32.mrf.mxu0
        %v1905 = vadd.f32 0.0, %v1904
        %v1906 = vpop.f32.mrf.mxu0
        %v1907 = vadd.f32 0.0, %v1906
        %1908 = vdwg.mxu0
        %1909 = vmatpush.bf16.msra.mxu0 0
        %1910 = vmatpush.bf16.msra.mxu0 0
        %1911 = vmatpush.bf16.msra.mxu0 0
        %1912 = vmatpush.bf16.msra.mxu0 0
        %1913 = vmatpush.bf16.msra.mxu0 0
        %1914 = vmatpush.bf16.msra.mxu0 0
        %1915 = vmatpush.bf16.msra.mxu0 0
        %1916 = vmatpush.bf16.msra.mxu0 %v746
        %1917 = vmatmul.bf16.gmra.mxu0 %v672
        %v1918 = vpop.f32.mrf.mxu0
        %v1919 = vadd.f32 0.0, %v1918
        %v1920 = vpop.f32.mrf.mxu0
        %v1921 = vadd.f32 0.0, %v1920
        %1922 = vmatmul.bf16.gmra.mxu0 %v675
        %v1923 = vpop.f32.mrf.mxu0
        %v1924 = vadd.f32 0.0, %v1923
        %v1925 = vpop.f32.mrf.mxu0
        %v1926 = vadd.f32 0.0, %v1925
        %1927 = vmatmul.bf16.gmra.mxu0 %v678
        %v1928 = vpop.f32.mrf.mxu0
        %v1929 = vadd.f32 0.0, %v1928
        %v1930 = vpop.f32.mrf.mxu0
        %v1931 = vadd.f32 0.0, %v1930
        %1932 = vmatmul.bf16.gmra.mxu0 %v681
        %v1933 = vpop.f32.mrf.mxu0
        %v1934 = vadd.f32 0.0, %v1933
        %v1935 = vpop.f32.mrf.mxu0
        %v1936 = vadd.f32 0.0, %v1935
        %1937 = vmatmul.bf16.gmra.mxu0 %v684
        %v1938 = vpop.f32.mrf.mxu0
        %v1939 = vadd.f32 0.0, %v1938
        %v1940 = vpop.f32.mrf.mxu0
        %v1941 = vadd.f32 0.0, %v1940
        %1942 = vmatmul.bf16.gmra.mxu0 %v687
        %v1943 = vpop.f32.mrf.mxu0
        %v1944 = vadd.f32 0.0, %v1943
        %v1945 = vpop.f32.mrf.mxu0
        %v1946 = vadd.f32 0.0, %v1945
        %1947 = vmatmul.bf16.gmra.mxu0 %v690
        %v1948 = vpop.f32.mrf.mxu0
        %v1949 = vadd.f32 0.0, %v1948
        %v1950 = vpop.f32.mrf.mxu0
        %v1951 = vadd.f32 0.0, %v1950
        %1952 = vmatmul.bf16.gmra.mxu0 %v693
        %v1953 = vpop.f32.mrf.mxu0
        %v1954 = vadd.f32 0.0, %v1953
        %v1955 = vpop.f32.mrf.mxu0
        %v1956 = vadd.f32 0.0, %v1955
        %1957 = vmatmul.bf16.gmra.mxu0 %v696
        %v1958 = vpop.f32.mrf.mxu0
        %v1959 = vadd.f32 0.0, %v1958
        %v1960 = vpop.f32.mrf.mxu0
        %v1961 = vadd.f32 0.0, %v1960
        %1962 = vmatmul.bf16.gmra.mxu0 %v699
        %v1963 = vpop.f32.mrf.mxu0
        %v1964 = vadd.f32 0.0, %v1963
        %v1965 = vpop.f32.mrf.mxu0
        %v1966 = vadd.f32 0.0, %v1965
        %1967 = vmatmul.bf16.gmra.mxu0 %v702
        %v1968 = vpop.f32.mrf.mxu0
        %v1969 = vadd.f32 0.0, %v1968
        %v1970 = vpop.f32.mrf.mxu0
        %v1971 = vadd.f32 0.0, %v1970
        %1972 = vmatmul.bf16.gmra.mxu0 %v705
        %v1973 = vpop.f32.mrf.mxu0
        %v1974 = vadd.f32 0.0, %v1973
        %v1975 = vpop.f32.mrf.mxu0
        %v1976 = vadd.f32 0.0, %v1975
        %1977 = vmatmul.bf16.gmra.mxu0 %v708
        %v1978 = vpop.f32.mrf.mxu0
        %v1979 = vadd.f32 0.0, %v1978
        %v1980 = vpop.f32.mrf.mxu0
        %v1981 = vadd.f32 0.0, %v1980
        %1982 = vmatmul.bf16.gmra.mxu0 %v711
        %v1983 = vpop.f32.mrf.mxu0
        %v1984 = vadd.f32 0.0, %v1983
        %v1985 = vpop.f32.mrf.mxu0
        %v1986 = vadd.f32 0.0, %v1985
        %1987 = vmatmul.bf16.gmra.mxu0 %v714
        %v1988 = vpop.f32.mrf.mxu0
        %v1989 = vadd.f32 0.0, %v1988
        %v1990 = vpop.f32.mrf.mxu0
        %v1991 = vadd.f32 0.0, %v1990
        %1992 = vmatmul.bf16.gmra.mxu0 %v717
        %v1993 = vpop.f32.mrf.mxu0
        %v1994 = vadd.f32 0.0, %v1993
        %v1995 = vpop.f32.mrf.mxu0
        %v1996 = vadd.f32 0.0, %v1995
        %1997 = vdwg.mxu0
        %1998 = vmatpush.bf16.msra.mxu0 0
        %1999 = vmatpush.bf16.msra.mxu0 0
        %2000 = vmatpush.bf16.msra.mxu0 0
        %2001 = vmatpush.bf16.msra.mxu0 0
        %2002 = vmatpush.bf16.msra.mxu0 0
        %2003 = vmatpush.bf16.msra.mxu0 0
        %2004 = vmatpush.bf16.msra.mxu0 0
        %2005 = vmatpush.bf16.msra.mxu0 %v748
        %2006 = vmatmul.bf16.gmra.mxu0 %v672
        %v2007 = vpop.f32.mrf.mxu0
        %v2008 = vadd.f32 0.0, %v2007
        %v2009 = vpop.f32.mrf.mxu0
        %v2010 = vadd.f32 0.0, %v2009
        %2011 = vmatmul.bf16.gmra.mxu0 %v675
        %v2012 = vpop.f32.mrf.mxu0
        %v2013 = vadd.f32 0.0, %v2012
        %v2014 = vpop.f32.mrf.mxu0
        %v2015 = vadd.f32 0.0, %v2014
        %2016 = vmatmul.bf16.gmra.mxu0 %v678
        %v2017 = vpop.f32.mrf.mxu0
        %v2018 = vadd.f32 0.0, %v2017
        %v2019 = vpop.f32.mrf.mxu0
        %v2020 = vadd.f32 0.0, %v2019
        %2021 = vmatmul.bf16.gmra.mxu0 %v681
        %v2022 = vpop.f32.mrf.mxu0
        %v2023 = vadd.f32 0.0, %v2022
        %v2024 = vpop.f32.mrf.mxu0
        %v2025 = vadd.f32 0.0, %v2024
        %2026 = vmatmul.bf16.gmra.mxu0 %v684
        %v2027 = vpop.f32.mrf.mxu0
        %v2028 = vadd.f32 0.0, %v2027
        %v2029 = vpop.f32.mrf.mxu0
        %v2030 = vadd.f32 0.0, %v2029
        %2031 = vmatmul.bf16.gmra.mxu0 %v687
        %v2032 = vpop.f32.mrf.mxu0
        %v2033 = vadd.f32 0.0, %v2032
        %v2034 = vpop.f32.mrf.mxu0
        %v2035 = vadd.f32 0.0, %v2034
        %2036 = vmatmul.bf16.gmra.mxu0 %v690
        %v2037 = vpop.f32.mrf.mxu0
        %v2038 = vadd.f32 0.0, %v2037
        %v2039 = vpop.f32.mrf.mxu0
        %v2040 = vadd.f32 0.0, %v2039
        %2041 = vmatmul.bf16.gmra.mxu0 %v693
        %v2042 = vpop.f32.mrf.mxu0
        %v2043 = vadd.f32 0.0, %v2042
        %v2044 = vpop.f32.mrf.mxu0
        %v2045 = vadd.f32 0.0, %v2044
        %2046 = vmatmul.bf16.gmra.mxu0 %v696
        %v2047 = vpop.f32.mrf.mxu0
        %v2048 = vadd.f32 0.0, %v2047
        %v2049 = vpop.f32.mrf.mxu0
        %v2050 = vadd.f32 0.0, %v2049
        %2051 = vmatmul.bf16.gmra.mxu0 %v699
        %v2052 = vpop.f32.mrf.mxu0
        %v2053 = vadd.f32 0.0, %v2052
        %v2054 = vpop.f32.mrf.mxu0
        %v2055 = vadd.f32 0.0, %v2054
        %2056 = vmatmul.bf16.gmra.mxu0 %v702
        %v2057 = vpop.f32.mrf.mxu0
        %v2058 = vadd.f32 0.0, %v2057
        %v2059 = vpop.f32.mrf.mxu0
        %v2060 = vadd.f32 0.0, %v2059
        %2061 = vmatmul.bf16.gmra.mxu0 %v705
        %v2062 = vpop.f32.mrf.mxu0
        %v2063 = vadd.f32 0.0, %v2062
        %v2064 = vpop.f32.mrf.mxu0
        %v2065 = vadd.f32 0.0, %v2064
        %2066 = vmatmul.bf16.gmra.mxu0 %v708
        %v2067 = vpop.f32.mrf.mxu0
        %v2068 = vadd.f32 0.0, %v2067
        %v2069 = vpop.f32.mrf.mxu0
        %v2070 = vadd.f32 0.0, %v2069
        %2071 = vmatmul.bf16.gmra.mxu0 %v711
        %v2072 = vpop.f32.mrf.mxu0
        %v2073 = vadd.f32 0.0, %v2072
        %v2074 = vpop.f32.mrf.mxu0
        %v2075 = vadd.f32 0.0, %v2074
        %2076 = vmatmul.bf16.gmra.mxu0 %v714
        %v2077 = vpop.f32.mrf.mxu0
        %v2078 = vadd.f32 0.0, %v2077
        %v2079 = vpop.f32.mrf.mxu0
        %v2080 = vadd.f32 0.0, %v2079
        %2081 = vmatmul.bf16.gmra.mxu0 %v717
        %v2082 = vpop.f32.mrf.mxu0
        %v2083 = vadd.f32 0.0, %v2082
        %v2084 = vpop.f32.mrf.mxu0
        %v2085 = vadd.f32 0.0, %v2084
        %2086 = vdwg.mxu0
        %2087 = vmatpush.bf16.msra.mxu0 0
        %2088 = vmatpush.bf16.msra.mxu0 0
        %2089 = vmatpush.bf16.msra.mxu0 0
        %2090 = vmatpush.bf16.msra.mxu0 0
        %2091 = vmatpush.bf16.msra.mxu0 0
        %2092 = vmatpush.bf16.msra.mxu0 0
        %2093 = vmatpush.bf16.msra.mxu0 0
        %2094 = vmatpush.bf16.msra.mxu0 %v750
        %2095 = vmatmul.bf16.gmra.mxu0 %v672
        %v2096 = vpop.f32.mrf.mxu0
        %v2097 = vadd.f32 0.0, %v2096
        %v2098 = vpop.f32.mrf.mxu0
        %v2099 = vadd.f32 0.0, %v2098
        %2100 = vmatmul.bf16.gmra.mxu0 %v675
        %v2101 = vpop.f32.mrf.mxu0
        %v2102 = vadd.f32 0.0, %v2101
        %v2103 = vpop.f32.mrf.mxu0
        %v2104 = vadd.f32 0.0, %v2103
        %2105 = vmatmul.bf16.gmra.mxu0 %v678
        %v2106 = vpop.f32.mrf.mxu0
        %v2107 = vadd.f32 0.0, %v2106
        %v2108 = vpop.f32.mrf.mxu0
        %v2109 = vadd.f32 0.0, %v2108
        %2110 = vmatmul.bf16.gmra.mxu0 %v681
        %v2111 = vpop.f32.mrf.mxu0
        %v2112 = vadd.f32 0.0, %v2111
        %v2113 = vpop.f32.mrf.mxu0
        %v2114 = vadd.f32 0.0, %v2113
        %2115 = vmatmul.bf16.gmra.mxu0 %v684
        %v2116 = vpop.f32.mrf.mxu0
        %v2117 = vadd.f32 0.0, %v2116
        %v2118 = vpop.f32.mrf.mxu0
        %v2119 = vadd.f32 0.0, %v2118
        %2120 = vmatmul.bf16.gmra.mxu0 %v687
        %v2121 = vpop.f32.mrf.mxu0
        %v2122 = vadd.f32 0.0, %v2121
        %v2123 = vpop.f32.mrf.mxu0
        %v2124 = vadd.f32 0.0, %v2123
        %2125 = vmatmul.bf16.gmra.mxu0 %v690
        %v2126 = vpop.f32.mrf.mxu0
        %v2127 = vadd.f32 0.0, %v2126
        %v2128 = vpop.f32.mrf.mxu0
        %v2129 = vadd.f32 0.0, %v2128
        %2130 = vmatmul.bf16.gmra.mxu0 %v693
        %v2131 = vpop.f32.mrf.mxu0
        %v2132 = vadd.f32 0.0, %v2131
        %v2133 = vpop.f32.mrf.mxu0
        %v2134 = vadd.f32 0.0, %v2133
        %2135 = vmatmul.bf16.gmra.mxu0 %v696
        %v2136 = vpop.f32.mrf.mxu0
        %v2137 = vadd.f32 0.0, %v2136
        %v2138 = vpop.f32.mrf.mxu0
        %v2139 = vadd.f32 0.0, %v2138
        %2140 = vmatmul.bf16.gmra.mxu0 %v699
        %v2141 = vpop.f32.mrf.mxu0
        %v2142 = vadd.f32 0.0, %v2141
        %v2143 = vpop.f32.mrf.mxu0
        %v2144 = vadd.f32 0.0, %v2143
        %2145 = vmatmul.bf16.gmra.mxu0 %v702
        %v2146 = vpop.f32.mrf.mxu0
        %v2147 = vadd.f32 0.0, %v2146
        %v2148 = vpop.f32.mrf.mxu0
        %v2149 = vadd.f32 0.0, %v2148
        %2150 = vmatmul.bf16.gmra.mxu0 %v705
        %v2151 = vpop.f32.mrf.mxu0
        %v2152 = vadd.f32 0.0, %v2151
        %v2153 = vpop.f32.mrf.mxu0
        %v2154 = vadd.f32 0.0, %v2153
        %2155 = vmatmul.bf16.gmra.mxu0 %v708
        %v2156 = vpop.f32.mrf.mxu0
        %v2157 = vadd.f32 0.0, %v2156
        %v2158 = vpop.f32.mrf.mxu0
        %v2159 = vadd.f32 0.0, %v2158
        %2160 = vmatmul.bf16.gmra.mxu0 %v711
        %v2161 = vpop.f32.mrf.mxu0
        %v2162 = vadd.f32 0.0, %v2161
        %v2163 = vpop.f32.mrf.mxu0
        %v2164 = vadd.f32 0.0, %v2163
        %2165 = vmatmul.bf16.gmra.mxu0 %v714
        %v2166 = vpop.f32.mrf.mxu0
        %v2167 = vadd.f32 0.0, %v2166
        %v2168 = vpop.f32.mrf.mxu0
        %v2169 = vadd.f32 0.0, %v2168
        %2170 = vmatmul.bf16.gmra.mxu0 %v717
        %v2171 = vpop.f32.mrf.mxu0
        %v2172 = vadd.f32 0.0, %v2171
        %v2173 = vpop.f32.mrf.mxu0
        %v2174 = vadd.f32 0.0, %v2173
        %2175 = vdwg.mxu0
        %v2176 = vmax.f32 %v762, 0.0
        %v2177 = vmax.f32 %v851, 0.0
        %v2178 = vmax.f32 %v940, 0.0
        %v2179 = vmax.f32 %v1029, 0.0
        %v2180 = vmax.f32 %v1118, 0.0
        %v2181 = vmax.f32 %v1207, 0.0
        %v2182 = vmax.f32 %v1296, 0.0
        %v2183 = vmax.f32 %v1385, 0.0
        %v2184 = vmax.f32 %v1474, 0.0
        %v2185 = vmax.f32 %v1563, 0.0
        %v2186 = vmax.f32 %v1652, 0.0
        %v2187 = vmax.f32 %v1741, 0.0
        %v2188 = vmax.f32 %v1830, 0.0
        %v2189 = vmax.f32 %v1919, 0.0
        %v2190 = vmax.f32 %v2008, 0.0
        %v2191 = vmax.f32 %v2097, 0.0
        %v2192 = vmax.f32 %v764, 0.0
        %v2193 = vmax.f32 %v853, 0.0
        %v2194 = vmax.f32 %v942, 0.0
        %v2195 = vmax.f32 %v1031, 0.0
        %v2196 = vmax.f32 %v1120, 0.0
        %v2197 = vmax.f32 %v1209, 0.0
        %v2198 = vmax.f32 %v1298, 0.0
        %v2199 = vmax.f32 %v1387, 0.0
        %v2200 = vmax.f32 %v1476, 0.0
        %v2201 = vmax.f32 %v1565, 0.0
        %v2202 = vmax.f32 %v1654, 0.0
        %v2203 = vmax.f32 %v1743, 0.0
        %v2204 = vmax.f32 %v1832, 0.0
        %v2205 = vmax.f32 %v1921, 0.0
        %v2206 = vmax.f32 %v2010, 0.0
        %v2207 = vmax.f32 %v2099, 0.0
        %v2208 = vmax.f32 %v767, 0.0
        %v2209 = vmax.f32 %v856, 0.0
        %v2210 = vmax.f32 %v945, 0.0
        %v2211 = vmax.f32 %v1034, 0.0
        %v2212 = vmax.f32 %v1123, 0.0
        %v2213 = vmax.f32 %v1212, 0.0
        %v2214 = vmax.f32 %v1301, 0.0
        %v2215 = vmax.f32 %v1390, 0.0
        %v2216 = vmax.f32 %v1479, 0.0
        %v2217 = vmax.f32 %v1568, 0.0
        %v2218 = vmax.f32 %v1657, 0.0
        %v2219 = vmax.f32 %v1746, 0.0
        %v2220 = vmax.f32 %v1835, 0.0
        %v2221 = vmax.f32 %v1924, 0.0
        %v2222 = vmax.f32 %v2013, 0.0
        %v2223 = vmax.f32 %v2102, 0.0
        %v2224 = vmax.f32 %v769, 0.0
        %v2225 = vmax.f32 %v858, 0.0
        %v2226 = vmax.f32 %v947, 0.0
        %v2227 = vmax.f32 %v1036, 0.0
        %v2228 = vmax.f32 %v1125, 0.0
        %v2229 = vmax.f32 %v1214, 0.0
        %v2230 = vmax.f32 %v1303, 0.0
        %v2231 = vmax.f32 %v1392, 0.0
        %v2232 = vmax.f32 %v1481, 0.0
        %v2233 = vmax.f32 %v1570, 0.0
        %v2234 = vmax.f32 %v1659, 0.0
        %v2235 = vmax.f32 %v1748, 0.0
        %v2236 = vmax.f32 %v1837, 0.0
        %v2237 = vmax.f32 %v1926, 0.0
        %v2238 = vmax.f32 %v2015, 0.0
        %v2239 = vmax.f32 %v2104, 0.0
        %v2240 = vmax.f32 %v772, 0.0
        %v2241 = vmax.f32 %v861, 0.0
        %v2242 = vmax.f32 %v950, 0.0
        %v2243 = vmax.f32 %v1039, 0.0
        %v2244 = vmax.f32 %v1128, 0.0
        %v2245 = vmax.f32 %v1217, 0.0
        %v2246 = vmax.f32 %v1306, 0.0
        %v2247 = vmax.f32 %v1395, 0.0
        %v2248 = vmax.f32 %v1484, 0.0
        %v2249 = vmax.f32 %v1573, 0.0
        %v2250 = vmax.f32 %v1662, 0.0
        %v2251 = vmax.f32 %v1751, 0.0
        %v2252 = vmax.f32 %v1840, 0.0
        %v2253 = vmax.f32 %v1929, 0.0
        %v2254 = vmax.f32 %v2018, 0.0
        %v2255 = vmax.f32 %v2107, 0.0
        %v2256 = vmax.f32 %v774, 0.0
        %v2257 = vmax.f32 %v863, 0.0
        %v2258 = vmax.f32 %v952, 0.0
        %v2259 = vmax.f32 %v1041, 0.0
        %v2260 = vmax.f32 %v1130, 0.0
        %v2261 = vmax.f32 %v1219, 0.0
        %v2262 = vmax.f32 %v1308, 0.0
        %v2263 = vmax.f32 %v1397, 0.0
        %v2264 = vmax.f32 %v1486, 0.0
        %v2265 = vmax.f32 %v1575, 0.0
        %v2266 = vmax.f32 %v1664, 0.0
        %v2267 = vmax.f32 %v1753, 0.0
        %v2268 = vmax.f32 %v1842, 0.0
        %v2269 = vmax.f32 %v1931, 0.0
        %v2270 = vmax.f32 %v2020, 0.0
        %v2271 = vmax.f32 %v2109, 0.0
        %v2272 = vmax.f32 %v777, 0.0
        %v2273 = vmax.f32 %v866, 0.0
        %v2274 = vmax.f32 %v955, 0.0
        %v2275 = vmax.f32 %v1044, 0.0
        %v2276 = vmax.f32 %v1133, 0.0
        %v2277 = vmax.f32 %v1222, 0.0
        %v2278 = vmax.f32 %v1311, 0.0
        %v2279 = vmax.f32 %v1400, 0.0
        %v2280 = vmax.f32 %v1489, 0.0
        %v2281 = vmax.f32 %v1578, 0.0
        %v2282 = vmax.f32 %v1667, 0.0
        %v2283 = vmax.f32 %v1756, 0.0
        %v2284 = vmax.f32 %v1845, 0.0
        %v2285 = vmax.f32 %v1934, 0.0
        %v2286 = vmax.f32 %v2023, 0.0
        %v2287 = vmax.f32 %v2112, 0.0
        %v2288 = vmax.f32 %v779, 0.0
        %v2289 = vmax.f32 %v868, 0.0
        %v2290 = vmax.f32 %v957, 0.0
        %v2291 = vmax.f32 %v1046, 0.0
        %v2292 = vmax.f32 %v1135, 0.0
        %v2293 = vmax.f32 %v1224, 0.0
        %v2294 = vmax.f32 %v1313, 0.0
        %v2295 = vmax.f32 %v1402, 0.0
        %v2296 = vmax.f32 %v1491, 0.0
        %v2297 = vmax.f32 %v1580, 0.0
        %v2298 = vmax.f32 %v1669, 0.0
        %v2299 = vmax.f32 %v1758, 0.0
        %v2300 = vmax.f32 %v1847, 0.0
        %v2301 = vmax.f32 %v1936, 0.0
        %v2302 = vmax.f32 %v2025, 0.0
        %v2303 = vmax.f32 %v2114, 0.0
        %v2304 = vmax.f32 %v782, 0.0
        %v2305 = vmax.f32 %v871, 0.0
        %v2306 = vmax.f32 %v960, 0.0
        %v2307 = vmax.f32 %v1049, 0.0
        %v2308 = vmax.f32 %v1138, 0.0
        %v2309 = vmax.f32 %v1227, 0.0
        %v2310 = vmax.f32 %v1316, 0.0
        %v2311 = vmax.f32 %v1405, 0.0
        %v2312 = vmax.f32 %v1494, 0.0
        %v2313 = vmax.f32 %v1583, 0.0
        %v2314 = vmax.f32 %v1672, 0.0
        %v2315 = vmax.f32 %v1761, 0.0
        %v2316 = vmax.f32 %v1850, 0.0
        %v2317 = vmax.f32 %v1939, 0.0
        %v2318 = vmax.f32 %v2028, 0.0
        %v2319 = vmax.f32 %v2117, 0.0
        %v2320 = vmax.f32 %v784, 0.0
        %v2321 = vmax.f32 %v873, 0.0
        %v2322 = vmax.f32 %v962, 0.0
        %v2323 = vmax.f32 %v1051, 0.0
        %v2324 = vmax.f32 %v1140, 0.0
        %v2325 = vmax.f32 %v1229, 0.0
        %v2326 = vmax.f32 %v1318, 0.0
        %v2327 = vmax.f32 %v1407, 0.0
        %v2328 = vmax.f32 %v1496, 0.0
        %v2329 = vmax.f32 %v1585, 0.0
        %v2330 = vmax.f32 %v1674, 0.0
        %v2331 = vmax.f32 %v1763, 0.0
        %v2332 = vmax.f32 %v1852, 0.0
        %v2333 = vmax.f32 %v1941, 0.0
        %v2334 = vmax.f32 %v2030, 0.0
        %v2335 = vmax.f32 %v2119, 0.0
        %v2336 = vmax.f32 %v787, 0.0
        %v2337 = vmax.f32 %v876, 0.0
        %v2338 = vmax.f32 %v965, 0.0
        %v2339 = vmax.f32 %v1054, 0.0
        %v2340 = vmax.f32 %v1143, 0.0
        %v2341 = vmax.f32 %v1232, 0.0
        %v2342 = vmax.f32 %v1321, 0.0
        %v2343 = vmax.f32 %v1410, 0.0
        %v2344 = vmax.f32 %v1499, 0.0
        %v2345 = vmax.f32 %v1588, 0.0
        %v2346 = vmax.f32 %v1677, 0.0
        %v2347 = vmax.f32 %v1766, 0.0
        %v2348 = vmax.f32 %v1855, 0.0
        %v2349 = vmax.f32 %v1944, 0.0
        %v2350 = vmax.f32 %v2033, 0.0
        %v2351 = vmax.f32 %v2122, 0.0
        %v2352 = vmax.f32 %v789, 0.0
        %v2353 = vmax.f32 %v878, 0.0
        %v2354 = vmax.f32 %v967, 0.0
        %v2355 = vmax.f32 %v1056, 0.0
        %v2356 = vmax.f32 %v1145, 0.0
        %v2357 = vmax.f32 %v1234, 0.0
        %v2358 = vmax.f32 %v1323, 0.0
        %v2359 = vmax.f32 %v1412, 0.0
        %v2360 = vmax.f32 %v1501, 0.0
        %v2361 = vmax.f32 %v1590, 0.0
        %v2362 = vmax.f32 %v1679, 0.0
        %v2363 = vmax.f32 %v1768, 0.0
        %v2364 = vmax.f32 %v1857, 0.0
        %v2365 = vmax.f32 %v1946, 0.0
        %v2366 = vmax.f32 %v2035, 0.0
        %v2367 = vmax.f32 %v2124, 0.0
        %v2368 = vmax.f32 %v792, 0.0
        %v2369 = vmax.f32 %v881, 0.0
        %v2370 = vmax.f32 %v970, 0.0
        %v2371 = vmax.f32 %v1059, 0.0
        %v2372 = vmax.f32 %v1148, 0.0
        %v2373 = vmax.f32 %v1237, 0.0
        %v2374 = vmax.f32 %v1326, 0.0
        %v2375 = vmax.f32 %v1415, 0.0
        %v2376 = vmax.f32 %v1504, 0.0
        %v2377 = vmax.f32 %v1593, 0.0
        %v2378 = vmax.f32 %v1682, 0.0
        %v2379 = vmax.f32 %v1771, 0.0
        %v2380 = vmax.f32 %v1860, 0.0
        %v2381 = vmax.f32 %v1949, 0.0
        %v2382 = vmax.f32 %v2038, 0.0
        %v2383 = vmax.f32 %v2127, 0.0
        %v2384 = vmax.f32 %v794, 0.0
        %v2385 = vmax.f32 %v883, 0.0
        %v2386 = vmax.f32 %v972, 0.0
        %v2387 = vmax.f32 %v1061, 0.0
        %v2388 = vmax.f32 %v1150, 0.0
        %v2389 = vmax.f32 %v1239, 0.0
        %v2390 = vmax.f32 %v1328, 0.0
        %v2391 = vmax.f32 %v1417, 0.0
        %v2392 = vmax.f32 %v1506, 0.0
        %v2393 = vmax.f32 %v1595, 0.0
        %v2394 = vmax.f32 %v1684, 0.0
        %v2395 = vmax.f32 %v1773, 0.0
        %v2396 = vmax.f32 %v1862, 0.0
        %v2397 = vmax.f32 %v1951, 0.0
        %v2398 = vmax.f32 %v2040, 0.0
        %v2399 = vmax.f32 %v2129, 0.0
        %v2400 = vmax.f32 %v797, 0.0
        %v2401 = vmax.f32 %v886, 0.0
        %v2402 = vmax.f32 %v975, 0.0
        %v2403 = vmax.f32 %v1064, 0.0
        %v2404 = vmax.f32 %v1153, 0.0
        %v2405 = vmax.f32 %v1242, 0.0
        %v2406 = vmax.f32 %v1331, 0.0
        %v2407 = vmax.f32 %v1420, 0.0
        %v2408 = vmax.f32 %v1509, 0.0
        %v2409 = vmax.f32 %v1598, 0.0
        %v2410 = vmax.f32 %v1687, 0.0
        %v2411 = vmax.f32 %v1776, 0.0
        %v2412 = vmax.f32 %v1865, 0.0
        %v2413 = vmax.f32 %v1954, 0.0
        %v2414 = vmax.f32 %v2043, 0.0
        %v2415 = vmax.f32 %v2132, 0.0
        %v2416 = vmax.f32 %v799, 0.0
        %v2417 = vmax.f32 %v888, 0.0
        %v2418 = vmax.f32 %v977, 0.0
        %v2419 = vmax.f32 %v1066, 0.0
        %v2420 = vmax.f32 %v1155, 0.0
        %v2421 = vmax.f32 %v1244, 0.0
        %v2422 = vmax.f32 %v1333, 0.0
        %v2423 = vmax.f32 %v1422, 0.0
        %v2424 = vmax.f32 %v1511, 0.0
        %v2425 = vmax.f32 %v1600, 0.0
        %v2426 = vmax.f32 %v1689, 0.0
        %v2427 = vmax.f32 %v1778, 0.0
        %v2428 = vmax.f32 %v1867, 0.0
        %v2429 = vmax.f32 %v1956, 0.0
        %v2430 = vmax.f32 %v2045, 0.0
        %v2431 = vmax.f32 %v2134, 0.0
        %v2432 = vmax.f32 %v802, 0.0
        %v2433 = vmax.f32 %v891, 0.0
        %v2434 = vmax.f32 %v980, 0.0
        %v2435 = vmax.f32 %v1069, 0.0
        %v2436 = vmax.f32 %v1158, 0.0
        %v2437 = vmax.f32 %v1247, 0.0
        %v2438 = vmax.f32 %v1336, 0.0
        %v2439 = vmax.f32 %v1425, 0.0
        %v2440 = vmax.f32 %v1514, 0.0
        %v2441 = vmax.f32 %v1603, 0.0
        %v2442 = vmax.f32 %v1692, 0.0
        %v2443 = vmax.f32 %v1781, 0.0
        %v2444 = vmax.f32 %v1870, 0.0
        %v2445 = vmax.f32 %v1959, 0.0
        %v2446 = vmax.f32 %v2048, 0.0
        %v2447 = vmax.f32 %v2137, 0.0
        %v2448 = vmax.f32 %v804, 0.0
        %v2449 = vmax.f32 %v893, 0.0
        %v2450 = vmax.f32 %v982, 0.0
        %v2451 = vmax.f32 %v1071, 0.0
        %v2452 = vmax.f32 %v1160, 0.0
        %v2453 = vmax.f32 %v1249, 0.0
        %v2454 = vmax.f32 %v1338, 0.0
        %v2455 = vmax.f32 %v1427, 0.0
        %v2456 = vmax.f32 %v1516, 0.0
        %v2457 = vmax.f32 %v1605, 0.0
        %v2458 = vmax.f32 %v1694, 0.0
        %v2459 = vmax.f32 %v1783, 0.0
        %v2460 = vmax.f32 %v1872, 0.0
        %v2461 = vmax.f32 %v1961, 0.0
        %v2462 = vmax.f32 %v2050, 0.0
        %v2463 = vmax.f32 %v2139, 0.0
        %v2464 = vmax.f32 %v807, 0.0
        %v2465 = vmax.f32 %v896, 0.0
        %v2466 = vmax.f32 %v985, 0.0
        %v2467 = vmax.f32 %v1074, 0.0
        %v2468 = vmax.f32 %v1163, 0.0
        %v2469 = vmax.f32 %v1252, 0.0
        %v2470 = vmax.f32 %v1341, 0.0
        %v2471 = vmax.f32 %v1430, 0.0
        %v2472 = vmax.f32 %v1519, 0.0
        %v2473 = vmax.f32 %v1608, 0.0
        %v2474 = vmax.f32 %v1697, 0.0
        %v2475 = vmax.f32 %v1786, 0.0
        %v2476 = vmax.f32 %v1875, 0.0
        %v2477 = vmax.f32 %v1964, 0.0
        %v2478 = vmax.f32 %v2053, 0.0
        %v2479 = vmax.f32 %v2142, 0.0
        %v2480 = vmax.f32 %v809, 0.0
        %v2481 = vmax.f32 %v898, 0.0
        %v2482 = vmax.f32 %v987, 0.0
        %v2483 = vmax.f32 %v1076, 0.0
        %v2484 = vmax.f32 %v1165, 0.0
        %v2485 = vmax.f32 %v1254, 0.0
        %v2486 = vmax.f32 %v1343, 0.0
        %v2487 = vmax.f32 %v1432, 0.0
        %v2488 = vmax.f32 %v1521, 0.0
        %v2489 = vmax.f32 %v1610, 0.0
        %v2490 = vmax.f32 %v1699, 0.0
        %v2491 = vmax.f32 %v1788, 0.0
        %v2492 = vmax.f32 %v1877, 0.0
        %v2493 = vmax.f32 %v1966, 0.0
        %v2494 = vmax.f32 %v2055, 0.0
        %v2495 = vmax.f32 %v2144, 0.0
        %v2496 = vmax.f32 %v812, 0.0
        %v2497 = vmax.f32 %v901, 0.0
        %v2498 = vmax.f32 %v990, 0.0
        %v2499 = vmax.f32 %v1079, 0.0
        %v2500 = vmax.f32 %v1168, 0.0
        %v2501 = vmax.f32 %v1257, 0.0
        %v2502 = vmax.f32 %v1346, 0.0
        %v2503 = vmax.f32 %v1435, 0.0
        %v2504 = vmax.f32 %v1524, 0.0
        %v2505 = vmax.f32 %v1613, 0.0
        %v2506 = vmax.f32 %v1702, 0.0
        %v2507 = vmax.f32 %v1791, 0.0
        %v2508 = vmax.f32 %v1880, 0.0
        %v2509 = vmax.f32 %v1969, 0.0
        %v2510 = vmax.f32 %v2058, 0.0
        %v2511 = vmax.f32 %v2147, 0.0
        %v2512 = vmax.f32 %v814, 0.0
        %v2513 = vmax.f32 %v903, 0.0
        %v2514 = vmax.f32 %v992, 0.0
        %v2515 = vmax.f32 %v1081, 0.0
        %v2516 = vmax.f32 %v1170, 0.0
        %v2517 = vmax.f32 %v1259, 0.0
        %v2518 = vmax.f32 %v1348, 0.0
        %v2519 = vmax.f32 %v1437, 0.0
        %v2520 = vmax.f32 %v1526, 0.0
        %v2521 = vmax.f32 %v1615, 0.0
        %v2522 = vmax.f32 %v1704, 0.0
        %v2523 = vmax.f32 %v1793, 0.0
        %v2524 = vmax.f32 %v1882, 0.0
        %v2525 = vmax.f32 %v1971, 0.0
        %v2526 = vmax.f32 %v2060, 0.0
        %v2527 = vmax.f32 %v2149, 0.0
        %v2528 = vmax.f32 %v817, 0.0
        %v2529 = vmax.f32 %v906, 0.0
        %v2530 = vmax.f32 %v995, 0.0
        %v2531 = vmax.f32 %v1084, 0.0
        %v2532 = vmax.f32 %v1173, 0.0
        %v2533 = vmax.f32 %v1262, 0.0
        %v2534 = vmax.f32 %v1351, 0.0
        %v2535 = vmax.f32 %v1440, 0.0
        %v2536 = vmax.f32 %v1529, 0.0
        %v2537 = vmax.f32 %v1618, 0.0
        %v2538 = vmax.f32 %v1707, 0.0
        %v2539 = vmax.f32 %v1796, 0.0
        %v2540 = vmax.f32 %v1885, 0.0
        %v2541 = vmax.f32 %v1974, 0.0
        %v2542 = vmax.f32 %v2063, 0.0
        %v2543 = vmax.f32 %v2152, 0.0
        %v2544 = vmax.f32 %v819, 0.0
        %v2545 = vmax.f32 %v908, 0.0
        %v2546 = vmax.f32 %v997, 0.0
        %v2547 = vmax.f32 %v1086, 0.0
        %v2548 = vmax.f32 %v1175, 0.0
        %v2549 = vmax.f32 %v1264, 0.0
        %v2550 = vmax.f32 %v1353, 0.0
        %v2551 = vmax.f32 %v1442, 0.0
        %v2552 = vmax.f32 %v1531, 0.0
        %v2553 = vmax.f32 %v1620, 0.0
        %v2554 = vmax.f32 %v1709, 0.0
        %v2555 = vmax.f32 %v1798, 0.0
        %v2556 = vmax.f32 %v1887, 0.0
        %v2557 = vmax.f32 %v1976, 0.0
        %v2558 = vmax.f32 %v2065, 0.0
        %v2559 = vmax.f32 %v2154, 0.0
        %v2560 = vmax.f32 %v822, 0.0
        %v2561 = vmax.f32 %v911, 0.0
        %v2562 = vmax.f32 %v1000, 0.0
        %v2563 = vmax.f32 %v1089, 0.0
        %v2564 = vmax.f32 %v1178, 0.0
        %v2565 = vmax.f32 %v1267, 0.0
        %v2566 = vmax.f32 %v1356, 0.0
        %v2567 = vmax.f32 %v1445, 0.0
        %v2568 = vmax.f32 %v1534, 0.0
        %v2569 = vmax.f32 %v1623, 0.0
        %v2570 = vmax.f32 %v1712, 0.0
        %v2571 = vmax.f32 %v1801, 0.0
        %v2572 = vmax.f32 %v1890, 0.0
        %v2573 = vmax.f32 %v1979, 0.0
        %v2574 = vmax.f32 %v2068, 0.0
        %v2575 = vmax.f32 %v2157, 0.0
        %v2576 = vmax.f32 %v824, 0.0
        %v2577 = vmax.f32 %v913, 0.0
        %v2578 = vmax.f32 %v1002, 0.0
        %v2579 = vmax.f32 %v1091, 0.0
        %v2580 = vmax.f32 %v1180, 0.0
        %v2581 = vmax.f32 %v1269, 0.0
        %v2582 = vmax.f32 %v1358, 0.0
        %v2583 = vmax.f32 %v1447, 0.0
        %v2584 = vmax.f32 %v1536, 0.0
        %v2585 = vmax.f32 %v1625, 0.0
        %v2586 = vmax.f32 %v1714, 0.0
        %v2587 = vmax.f32 %v1803, 0.0
        %v2588 = vmax.f32 %v1892, 0.0
        %v2589 = vmax.f32 %v1981, 0.0
        %v2590 = vmax.f32 %v2070, 0.0
        %v2591 = vmax.f32 %v2159, 0.0
        %v2592 = vmax.f32 %v827, 0.0
        %v2593 = vmax.f32 %v916, 0.0
        %v2594 = vmax.f32 %v1005, 0.0
        %v2595 = vmax.f32 %v1094, 0.0
        %v2596 = vmax.f32 %v1183, 0.0
        %v2597 = vmax.f32 %v1272, 0.0
        %v2598 = vmax.f32 %v1361, 0.0
        %v2599 = vmax.f32 %v1450, 0.0
        %v2600 = vmax.f32 %v1539, 0.0
        %v2601 = vmax.f32 %v1628, 0.0
        %v2602 = vmax.f32 %v1717, 0.0
        %v2603 = vmax.f32 %v1806, 0.0
        %v2604 = vmax.f32 %v1895, 0.0
        %v2605 = vmax.f32 %v1984, 0.0
        %v2606 = vmax.f32 %v2073, 0.0
        %v2607 = vmax.f32 %v2162, 0.0
        %v2608 = vmax.f32 %v829, 0.0
        %v2609 = vmax.f32 %v918, 0.0
        %v2610 = vmax.f32 %v1007, 0.0
        %v2611 = vmax.f32 %v1096, 0.0
        %v2612 = vmax.f32 %v1185, 0.0
        %v2613 = vmax.f32 %v1274, 0.0
        %v2614 = vmax.f32 %v1363, 0.0
        %v2615 = vmax.f32 %v1452, 0.0
        %v2616 = vmax.f32 %v1541, 0.0
        %v2617 = vmax.f32 %v1630, 0.0
        %v2618 = vmax.f32 %v1719, 0.0
        %v2619 = vmax.f32 %v1808, 0.0
        %v2620 = vmax.f32 %v1897, 0.0
        %v2621 = vmax.f32 %v1986, 0.0
        %v2622 = vmax.f32 %v2075, 0.0
        %v2623 = vmax.f32 %v2164, 0.0
        %v2624 = vmax.f32 %v832, 0.0
        %v2625 = vmax.f32 %v921, 0.0
        %v2626 = vmax.f32 %v1010, 0.0
        %v2627 = vmax.f32 %v1099, 0.0
        %v2628 = vmax.f32 %v1188, 0.0
        %v2629 = vmax.f32 %v1277, 0.0
        %v2630 = vmax.f32 %v1366, 0.0
        %v2631 = vmax.f32 %v1455, 0.0
        %v2632 = vmax.f32 %v1544, 0.0
        %v2633 = vmax.f32 %v1633, 0.0
        %v2634 = vmax.f32 %v1722, 0.0
        %v2635 = vmax.f32 %v1811, 0.0
        %v2636 = vmax.f32 %v1900, 0.0
        %v2637 = vmax.f32 %v1989, 0.0
        %v2638 = vmax.f32 %v2078, 0.0
        %v2639 = vmax.f32 %v2167, 0.0
        %v2640 = vmax.f32 %v834, 0.0
        %v2641 = vmax.f32 %v923, 0.0
        %v2642 = vmax.f32 %v1012, 0.0
        %v2643 = vmax.f32 %v1101, 0.0
        %v2644 = vmax.f32 %v1190, 0.0
        %v2645 = vmax.f32 %v1279, 0.0
        %v2646 = vmax.f32 %v1368, 0.0
        %v2647 = vmax.f32 %v1457, 0.0
        %v2648 = vmax.f32 %v1546, 0.0
        %v2649 = vmax.f32 %v1635, 0.0
        %v2650 = vmax.f32 %v1724, 0.0
        %v2651 = vmax.f32 %v1813, 0.0
        %v2652 = vmax.f32 %v1902, 0.0
        %v2653 = vmax.f32 %v1991, 0.0
        %v2654 = vmax.f32 %v2080, 0.0
        %v2655 = vmax.f32 %v2169, 0.0
        %v2656 = vmax.f32 %v837, 0.0
        %v2657 = vmax.f32 %v926, 0.0
        %v2658 = vmax.f32 %v1015, 0.0
        %v2659 = vmax.f32 %v1104, 0.0
        %v2660 = vmax.f32 %v1193, 0.0
        %v2661 = vmax.f32 %v1282, 0.0
        %v2662 = vmax.f32 %v1371, 0.0
        %v2663 = vmax.f32 %v1460, 0.0
        %v2664 = vmax.f32 %v1549, 0.0
        %v2665 = vmax.f32 %v1638, 0.0
        %v2666 = vmax.f32 %v1727, 0.0
        %v2667 = vmax.f32 %v1816, 0.0
        %v2668 = vmax.f32 %v1905, 0.0
        %v2669 = vmax.f32 %v1994, 0.0
        %v2670 = vmax.f32 %v2083, 0.0
        %v2671 = vmax.f32 %v2172, 0.0
        %v2672 = vmax.f32 %v839, 0.0
        %v2673 = vmax.f32 %v928, 0.0
        %v2674 = vmax.f32 %v1017, 0.0
        %v2675 = vmax.f32 %v1106, 0.0
        %v2676 = vmax.f32 %v1195, 0.0
        %v2677 = vmax.f32 %v1284, 0.0
        %v2678 = vmax.f32 %v1373, 0.0
        %v2679 = vmax.f32 %v1462, 0.0
        %v2680 = vmax.f32 %v1551, 0.0
        %v2681 = vmax.f32 %v1640, 0.0
        %v2682 = vmax.f32 %v1729, 0.0
        %v2683 = vmax.f32 %v1818, 0.0
        %v2684 = vmax.f32 %v1907, 0.0
        %v2685 = vmax.f32 %v1996, 0.0
        %v2686 = vmax.f32 %v2085, 0.0
        %v2687 = vmax.f32 %v2174, 0.0
        %v2688 = vadd.f32 %v2176, %v2177
        %v2689 = vadd.f32 %v2192, %v2193
        %v2690 = vadd.f32 %v2208, %v2209
        %v2691 = vadd.f32 %v2224, %v2225
        %v2692 = vadd.f32 %v2240, %v2241
        %v2693 = vadd.f32 %v2256, %v2257
        %v2694 = vadd.f32 %v2272, %v2273
        %v2695 = vadd.f32 %v2288, %v2289
        %v2696 = vadd.f32 %v2304, %v2305
        %v2697 = vadd.f32 %v2320, %v2321
        %v2698 = vadd.f32 %v2336, %v2337
        %v2699 = vadd.f32 %v2352, %v2353
        %v2700 = vadd.f32 %v2368, %v2369
        %v2701 = vadd.f32 %v2384, %v2385
        %v2702 = vadd.f32 %v2400, %v2401
        %v2703 = vadd.f32 %v2416, %v2417
        %v2704 = vadd.f32 %v2432, %v2433
        %v2705 = vadd.f32 %v2448, %v2449
        %v2706 = vadd.f32 %v2464, %v2465
        %v2707 = vadd.f32 %v2480, %v2481
        %v2708 = vadd.f32 %v2496, %v2497
        %v2709 = vadd.f32 %v2512, %v2513
        %v2710 = vadd.f32 %v2528, %v2529
        %v2711 = vadd.f32 %v2544, %v2545
        %v2712 = vadd.f32 %v2560, %v2561
        %v2713 = vadd.f32 %v2576, %v2577
        %v2714 = vadd.f32 %v2592, %v2593
        %v2715 = vadd.f32 %v2608, %v2609
        %v2716 = vadd.f32 %v2624, %v2625
        %v2717 = vadd.f32 %v2640, %v2641
        %v2718 = vadd.f32 %v2656, %v2657
        %v2719 = vadd.f32 %v2672, %v2673
        %v2720 = vadd.f32 %v2688, %v2178
        %v2721 = vadd.f32 %v2689, %v2194
        %v2722 = vadd.f32 %v2690, %v2210
        %v2723 = vadd.f32 %v2691, %v2226
        %v2724 = vadd.f32 %v2692, %v2242
        %v2725 = vadd.f32 %v2693, %v2258
        %v2726 = vadd.f32 %v2694, %v2274
        %v2727 = vadd.f32 %v2695, %v2290
        %v2728 = vadd.f32 %v2696, %v2306
        %v2729 = vadd.f32 %v2697, %v2322
        %v2730 = vadd.f32 %v2698, %v2338
        %v2731 = vadd.f32 %v2699, %v2354
        %v2732 = vadd.f32 %v2700, %v2370
        %v2733 = vadd.f32 %v2701, %v2386
        %v2734 = vadd.f32 %v2702, %v2402
        %v2735 = vadd.f32 %v2703, %v2418
        %v2736 = vadd.f32 %v2704, %v2434
        %v2737 = vadd.f32 %v2705, %v2450
        %v2738 = vadd.f32 %v2706, %v2466
        %v2739 = vadd.f32 %v2707, %v2482
        %v2740 = vadd.f32 %v2708, %v2498
        %v2741 = vadd.f32 %v2709, %v2514
        %v2742 = vadd.f32 %v2710, %v2530
        %v2743 = vadd.f32 %v2711, %v2546
        %v2744 = vadd.f32 %v2712, %v2562
        %v2745 = vadd.f32 %v2713, %v2578
        %v2746 = vadd.f32 %v2714, %v2594
        %v2747 = vadd.f32 %v2715, %v2610
        %v2748 = vadd.f32 %v2716, %v2626
        %v2749 = vadd.f32 %v2717, %v2642
        %v2750 = vadd.f32 %v2718, %v2658
        %v2751 = vadd.f32 %v2719, %v2674
        %v2752 = vadd.f32 %v2720, %v2179
        %v2753 = vadd.f32 %v2721, %v2195
        %v2754 = vadd.f32 %v2722, %v2211
        %v2755 = vadd.f32 %v2723, %v2227
        %v2756 = vadd.f32 %v2724, %v2243
        %v2757 = vadd.f32 %v2725, %v2259
        %v2758 = vadd.f32 %v2726, %v2275
        %v2759 = vadd.f32 %v2727, %v2291
        %v2760 = vadd.f32 %v2728, %v2307
        %v2761 = vadd.f32 %v2729, %v2323
        %v2762 = vadd.f32 %v2730, %v2339
        %v2763 = vadd.f32 %v2731, %v2355
        %v2764 = vadd.f32 %v2732, %v2371
        %v2765 = vadd.f32 %v2733, %v2387
        %v2766 = vadd.f32 %v2734, %v2403
        %v2767 = vadd.f32 %v2735, %v2419
        %v2768 = vadd.f32 %v2736, %v2435
        %v2769 = vadd.f32 %v2737, %v2451
        %v2770 = vadd.f32 %v2738, %v2467
        %v2771 = vadd.f32 %v2739, %v2483
        %v2772 = vadd.f32 %v2740, %v2499
        %v2773 = vadd.f32 %v2741, %v2515
        %v2774 = vadd.f32 %v2742, %v2531
        %v2775 = vadd.f32 %v2743, %v2547
        %v2776 = vadd.f32 %v2744, %v2563
        %v2777 = vadd.f32 %v2745, %v2579
        %v2778 = vadd.f32 %v2746, %v2595
        %v2779 = vadd.f32 %v2747, %v2611
        %v2780 = vadd.f32 %v2748, %v2627
        %v2781 = vadd.f32 %v2749, %v2643
        %v2782 = vadd.f32 %v2750, %v2659
        %v2783 = vadd.f32 %v2751, %v2675
        %v2784 = vadd.f32 %v2752, %v2180
        %v2785 = vadd.f32 %v2753, %v2196
        %v2786 = vadd.f32 %v2754, %v2212
        %v2787 = vadd.f32 %v2755, %v2228
        %v2788 = vadd.f32 %v2756, %v2244
        %v2789 = vadd.f32 %v2757, %v2260
        %v2790 = vadd.f32 %v2758, %v2276
        %v2791 = vadd.f32 %v2759, %v2292
        %v2792 = vadd.f32 %v2760, %v2308
        %v2793 = vadd.f32 %v2761, %v2324
        %v2794 = vadd.f32 %v2762, %v2340
        %v2795 = vadd.f32 %v2763, %v2356
        %v2796 = vadd.f32 %v2764, %v2372
        %v2797 = vadd.f32 %v2765, %v2388
        %v2798 = vadd.f32 %v2766, %v2404
        %v2799 = vadd.f32 %v2767, %v2420
        %v2800 = vadd.f32 %v2768, %v2436
        %v2801 = vadd.f32 %v2769, %v2452
        %v2802 = vadd.f32 %v2770, %v2468
        %v2803 = vadd.f32 %v2771, %v2484
        %v2804 = vadd.f32 %v2772, %v2500
        %v2805 = vadd.f32 %v2773, %v2516
        %v2806 = vadd.f32 %v2774, %v2532
        %v2807 = vadd.f32 %v2775, %v2548
        %v2808 = vadd.f32 %v2776, %v2564
        %v2809 = vadd.f32 %v2777, %v2580
        %v2810 = vadd.f32 %v2778, %v2596
        %v2811 = vadd.f32 %v2779, %v2612
        %v2812 = vadd.f32 %v2780, %v2628
        %v2813 = vadd.f32 %v2781, %v2644
        %v2814 = vadd.f32 %v2782, %v2660
        %v2815 = vadd.f32 %v2783, %v2676
        %v2816 = vadd.f32 %v2784, %v2181
        %v2817 = vadd.f32 %v2785, %v2197
        %v2818 = vadd.f32 %v2786, %v2213
        %v2819 = vadd.f32 %v2787, %v2229
        %v2820 = vadd.f32 %v2788, %v2245
        %v2821 = vadd.f32 %v2789, %v2261
        %v2822 = vadd.f32 %v2790, %v2277
        %v2823 = vadd.f32 %v2791, %v2293
        %v2824 = vadd.f32 %v2792, %v2309
        %v2825 = vadd.f32 %v2793, %v2325
        %v2826 = vadd.f32 %v2794, %v2341
        %v2827 = vadd.f32 %v2795, %v2357
        %v2828 = vadd.f32 %v2796, %v2373
        %v2829 = vadd.f32 %v2797, %v2389
        %v2830 = vadd.f32 %v2798, %v2405
        %v2831 = vadd.f32 %v2799, %v2421
        %v2832 = vadd.f32 %v2800, %v2437
        %v2833 = vadd.f32 %v2801, %v2453
        %v2834 = vadd.f32 %v2802, %v2469
        %v2835 = vadd.f32 %v2803, %v2485
        %v2836 = vadd.f32 %v2804, %v2501
        %v2837 = vadd.f32 %v2805, %v2517
        %v2838 = vadd.f32 %v2806, %v2533
        %v2839 = vadd.f32 %v2807, %v2549
        %v2840 = vadd.f32 %v2808, %v2565
        %v2841 = vadd.f32 %v2809, %v2581
        %v2842 = vadd.f32 %v2810, %v2597
        %v2843 = vadd.f32 %v2811, %v2613
        %v2844 = vadd.f32 %v2812, %v2629
        %v2845 = vadd.f32 %v2813, %v2645
        %v2846 = vadd.f32 %v2814, %v2661
        %v2847 = vadd.f32 %v2815, %v2677
        %v2848 = vadd.f32 %v2816, %v2182
        %v2849 = vadd.f32 %v2817, %v2198
        %v2850 = vadd.f32 %v2818, %v2214
        %v2851 = vadd.f32 %v2819, %v2230
        %v2852 = vadd.f32 %v2820, %v2246
        %v2853 = vadd.f32 %v2821, %v2262
        %v2854 = vadd.f32 %v2822, %v2278
        %v2855 = vadd.f32 %v2823, %v2294
        %v2856 = vadd.f32 %v2824, %v2310
        %v2857 = vadd.f32 %v2825, %v2326
        %v2858 = vadd.f32 %v2826, %v2342
        %v2859 = vadd.f32 %v2827, %v2358
        %v2860 = vadd.f32 %v2828, %v2374
        %v2861 = vadd.f32 %v2829, %v2390
        %v2862 = vadd.f32 %v2830, %v2406
        %v2863 = vadd.f32 %v2831, %v2422
        %v2864 = vadd.f32 %v2832, %v2438
        %v2865 = vadd.f32 %v2833, %v2454
        %v2866 = vadd.f32 %v2834, %v2470
        %v2867 = vadd.f32 %v2835, %v2486
        %v2868 = vadd.f32 %v2836, %v2502
        %v2869 = vadd.f32 %v2837, %v2518
        %v2870 = vadd.f32 %v2838, %v2534
        %v2871 = vadd.f32 %v2839, %v2550
        %v2872 = vadd.f32 %v2840, %v2566
        %v2873 = vadd.f32 %v2841, %v2582
        %v2874 = vadd.f32 %v2842, %v2598
        %v2875 = vadd.f32 %v2843, %v2614
        %v2876 = vadd.f32 %v2844, %v2630
        %v2877 = vadd.f32 %v2845, %v2646
        %v2878 = vadd.f32 %v2846, %v2662
        %v2879 = vadd.f32 %v2847, %v2678
        %v2880 = vadd.f32 %v2848, %v2183
        %v2881 = vadd.f32 %v2849, %v2199
        %v2882 = vadd.f32 %v2850, %v2215
        %v2883 = vadd.f32 %v2851, %v2231
        %v2884 = vadd.f32 %v2852, %v2247
        %v2885 = vadd.f32 %v2853, %v2263
        %v2886 = vadd.f32 %v2854, %v2279
        %v2887 = vadd.f32 %v2855, %v2295
        %v2888 = vadd.f32 %v2856, %v2311
        %v2889 = vadd.f32 %v2857, %v2327
        %v2890 = vadd.f32 %v2858, %v2343
        %v2891 = vadd.f32 %v2859, %v2359
        %v2892 = vadd.f32 %v2860, %v2375
        %v2893 = vadd.f32 %v2861, %v2391
        %v2894 = vadd.f32 %v2862, %v2407
        %v2895 = vadd.f32 %v2863, %v2423
        %v2896 = vadd.f32 %v2864, %v2439
        %v2897 = vadd.f32 %v2865, %v2455
        %v2898 = vadd.f32 %v2866, %v2471
        %v2899 = vadd.f32 %v2867, %v2487
        %v2900 = vadd.f32 %v2868, %v2503
        %v2901 = vadd.f32 %v2869, %v2519
        %v2902 = vadd.f32 %v2870, %v2535
        %v2903 = vadd.f32 %v2871, %v2551
        %v2904 = vadd.f32 %v2872, %v2567
        %v2905 = vadd.f32 %v2873, %v2583
        %v2906 = vadd.f32 %v2874, %v2599
        %v2907 = vadd.f32 %v2875, %v2615
        %v2908 = vadd.f32 %v2876, %v2631
        %v2909 = vadd.f32 %v2877, %v2647
        %v2910 = vadd.f32 %v2878, %v2663
        %v2911 = vadd.f32 %v2879, %v2679
        %v2912 = vadd.f32 %v2880, %v2184
        %v2913 = vadd.f32 %v2881, %v2200
        %v2914 = vadd.f32 %v2882, %v2216
        %v2915 = vadd.f32 %v2883, %v2232
        %v2916 = vadd.f32 %v2884, %v2248
        %v2917 = vadd.f32 %v2885, %v2264
        %v2918 = vadd.f32 %v2886, %v2280
        %v2919 = vadd.f32 %v2887, %v2296
        %v2920 = vadd.f32 %v2888, %v2312
        %v2921 = vadd.f32 %v2889, %v2328
        %v2922 = vadd.f32 %v2890, %v2344
        %v2923 = vadd.f32 %v2891, %v2360
        %v2924 = vadd.f32 %v2892, %v2376
        %v2925 = vadd.f32 %v2893, %v2392
        %v2926 = vadd.f32 %v2894, %v2408
        %v2927 = vadd.f32 %v2895, %v2424
        %v2928 = vadd.f32 %v2896, %v2440
        %v2929 = vadd.f32 %v2897, %v2456
        %v2930 = vadd.f32 %v2898, %v2472
        %v2931 = vadd.f32 %v2899, %v2488
        %v2932 = vadd.f32 %v2900, %v2504
        %v2933 = vadd.f32 %v2901, %v2520
        %v2934 = vadd.f32 %v2902, %v2536
        %v2935 = vadd.f32 %v2903, %v2552
        %v2936 = vadd.f32 %v2904, %v2568
        %v2937 = vadd.f32 %v2905, %v2584
        %v2938 = vadd.f32 %v2906, %v2600
        %v2939 = vadd.f32 %v2907, %v2616
        %v2940 = vadd.f32 %v2908, %v2632
        %v2941 = vadd.f32 %v2909, %v2648
        %v2942 = vadd.f32 %v2910, %v2664
        %v2943 = vadd.f32 %v2911, %v2680
        %v2944 = vadd.f32 %v2912, %v2185
        %v2945 = vadd.f32 %v2913, %v2201
        %v2946 = vadd.f32 %v2914, %v2217
        %v2947 = vadd.f32 %v2915, %v2233
        %v2948 = vadd.f32 %v2916, %v2249
        %v2949 = vadd.f32 %v2917, %v2265
        %v2950 = vadd.f32 %v2918, %v2281
        %v2951 = vadd.f32 %v2919, %v2297
        %v2952 = vadd.f32 %v2920, %v2313
        %v2953 = vadd.f32 %v2921, %v2329
        %v2954 = vadd.f32 %v2922, %v2345
        %v2955 = vadd.f32 %v2923, %v2361
        %v2956 = vadd.f32 %v2924, %v2377
        %v2957 = vadd.f32 %v2925, %v2393
        %v2958 = vadd.f32 %v2926, %v2409
        %v2959 = vadd.f32 %v2927, %v2425
        %v2960 = vadd.f32 %v2928, %v2441
        %v2961 = vadd.f32 %v2929, %v2457
        %v2962 = vadd.f32 %v2930, %v2473
        %v2963 = vadd.f32 %v2931, %v2489
        %v2964 = vadd.f32 %v2932, %v2505
        %v2965 = vadd.f32 %v2933, %v2521
        %v2966 = vadd.f32 %v2934, %v2537
        %v2967 = vadd.f32 %v2935, %v2553
        %v2968 = vadd.f32 %v2936, %v2569
        %v2969 = vadd.f32 %v2937, %v2585
        %v2970 = vadd.f32 %v2938, %v2601
        %v2971 = vadd.f32 %v2939, %v2617
        %v2972 = vadd.f32 %v2940, %v2633
        %v2973 = vadd.f32 %v2941, %v2649
        %v2974 = vadd.f32 %v2942, %v2665
        %v2975 = vadd.f32 %v2943, %v2681
        %v2976 = vadd.f32 %v2944, %v2186
        %v2977 = vadd.f32 %v2945, %v2202
        %v2978 = vadd.f32 %v2946, %v2218
        %v2979 = vadd.f32 %v2947, %v2234
        %v2980 = vadd.f32 %v2948, %v2250
        %v2981 = vadd.f32 %v2949, %v2266
        %v2982 = vadd.f32 %v2950, %v2282
        %v2983 = vadd.f32 %v2951, %v2298
        %v2984 = vadd.f32 %v2952, %v2314
        %v2985 = vadd.f32 %v2953, %v2330
        %v2986 = vadd.f32 %v2954, %v2346
        %v2987 = vadd.f32 %v2955, %v2362
        %v2988 = vadd.f32 %v2956, %v2378
        %v2989 = vadd.f32 %v2957, %v2394
        %v2990 = vadd.f32 %v2958, %v2410
        %v2991 = vadd.f32 %v2959, %v2426
        %v2992 = vadd.f32 %v2960, %v2442
        %v2993 = vadd.f32 %v2961, %v2458
        %v2994 = vadd.f32 %v2962, %v2474
        %v2995 = vadd.f32 %v2963, %v2490
        %v2996 = vadd.f32 %v2964, %v2506
        %v2997 = vadd.f32 %v2965, %v2522
        %v2998 = vadd.f32 %v2966, %v2538
        %v2999 = vadd.f32 %v2967, %v2554
        %v3000 = vadd.f32 %v2968, %v2570
        %v3001 = vadd.f32 %v2969, %v2586
        %v3002 = vadd.f32 %v2970, %v2602
        %v3003 = vadd.f32 %v2971, %v2618
        %v3004 = vadd.f32 %v2972, %v2634
        %v3005 = vadd.f32 %v2973, %v2650
        %v3006 = vadd.f32 %v2974, %v2666
        %v3007 = vadd.f32 %v2975, %v2682
        %v3008 = vadd.f32 %v2976, %v2187
        %v3009 = vadd.f32 %v2977, %v2203
        %v3010 = vadd.f32 %v2978, %v2219
        %v3011 = vadd.f32 %v2979, %v2235
        %v3012 = vadd.f32 %v2980, %v2251
        %v3013 = vadd.f32 %v2981, %v2267
        %v3014 = vadd.f32 %v2982, %v2283
        %v3015 = vadd.f32 %v2983, %v2299
        %v3016 = vadd.f32 %v2984, %v2315
        %v3017 = vadd.f32 %v2985, %v2331
        %v3018 = vadd.f32 %v2986, %v2347
        %v3019 = vadd.f32 %v2987, %v2363
        %v3020 = vadd.f32 %v2988, %v2379
        %v3021 = vadd.f32 %v2989, %v2395
        %v3022 = vadd.f32 %v2990, %v2411
        %v3023 = vadd.f32 %v2991, %v2427
        %v3024 = vadd.f32 %v2992, %v2443
        %v3025 = vadd.f32 %v2993, %v2459
        %v3026 = vadd.f32 %v2994, %v2475
        %v3027 = vadd.f32 %v2995, %v2491
        %v3028 = vadd.f32 %v2996, %v2507
        %v3029 = vadd.f32 %v2997, %v2523
        %v3030 = vadd.f32 %v2998, %v2539
        %v3031 = vadd.f32 %v2999, %v2555
        %v3032 = vadd.f32 %v3000, %v2571
        %v3033 = vadd.f32 %v3001, %v2587
        %v3034 = vadd.f32 %v3002, %v2603
        %v3035 = vadd.f32 %v3003, %v2619
        %v3036 = vadd.f32 %v3004, %v2635
        %v3037 = vadd.f32 %v3005, %v2651
        %v3038 = vadd.f32 %v3006, %v2667
        %v3039 = vadd.f32 %v3007, %v2683
        %v3040 = vadd.f32 %v3008, %v2188
        %v3041 = vadd.f32 %v3009, %v2204
        %v3042 = vadd.f32 %v3010, %v2220
        %v3043 = vadd.f32 %v3011, %v2236
        %v3044 = vadd.f32 %v3012, %v2252
        %v3045 = vadd.f32 %v3013, %v2268
        %v3046 = vadd.f32 %v3014, %v2284
        %v3047 = vadd.f32 %v3015, %v2300
        %v3048 = vadd.f32 %v3016, %v2316
        %v3049 = vadd.f32 %v3017, %v2332
        %v3050 = vadd.f32 %v3018, %v2348
        %v3051 = vadd.f32 %v3019, %v2364
        %v3052 = vadd.f32 %v3020, %v2380
        %v3053 = vadd.f32 %v3021, %v2396
        %v3054 = vadd.f32 %v3022, %v2412
        %v3055 = vadd.f32 %v3023, %v2428
        %v3056 = vadd.f32 %v3024, %v2444
        %v3057 = vadd.f32 %v3025, %v2460
        %v3058 = vadd.f32 %v3026, %v2476
        %v3059 = vadd.f32 %v3027, %v2492
        %v3060 = vadd.f32 %v3028, %v2508
        %v3061 = vadd.f32 %v3029, %v2524
        %v3062 = vadd.f32 %v3030, %v2540
        %v3063 = vadd.f32 %v3031, %v2556
        %v3064 = vadd.f32 %v3032, %v2572
        %v3065 = vadd.f32 %v3033, %v2588
        %v3066 = vadd.f32 %v3034, %v2604
        %v3067 = vadd.f32 %v3035, %v2620
        %v3068 = vadd.f32 %v3036, %v2636
        %v3069 = vadd.f32 %v3037, %v2652
        %v3070 = vadd.f32 %v3038, %v2668
        %v3071 = vadd.f32 %v3039, %v2684
        %v3072 = vadd.f32 %v3040, %v2189
        %v3073 = vadd.f32 %v3041, %v2205
        %v3074 = vadd.f32 %v3042, %v2221
        %v3075 = vadd.f32 %v3043, %v2237
        %v3076 = vadd.f32 %v3044, %v2253
        %v3077 = vadd.f32 %v3045, %v2269
        %v3078 = vadd.f32 %v3046, %v2285
        %v3079 = vadd.f32 %v3047, %v2301
        %v3080 = vadd.f32 %v3048, %v2317
        %v3081 = vadd.f32 %v3049, %v2333
        %v3082 = vadd.f32 %v3050, %v2349
        %v3083 = vadd.f32 %v3051, %v2365
        %v3084 = vadd.f32 %v3052, %v2381
        %v3085 = vadd.f32 %v3053, %v2397
        %v3086 = vadd.f32 %v3054, %v2413
        %v3087 = vadd.f32 %v3055, %v2429
        %v3088 = vadd.f32 %v3056, %v2445
        %v3089 = vadd.f32 %v3057, %v2461
        %v3090 = vadd.f32 %v3058, %v2477
        %v3091 = vadd.f32 %v3059, %v2493
        %v3092 = vadd.f32 %v3060, %v2509
        %v3093 = vadd.f32 %v3061, %v2525
        %v3094 = vadd.f32 %v3062, %v2541
        %v3095 = vadd.f32 %v3063, %v2557
        %v3096 = vadd.f32 %v3064, %v2573
        %v3097 = vadd.f32 %v3065, %v2589
        %v3098 = vadd.f32 %v3066, %v2605
        %v3099 = vadd.f32 %v3067, %v2621
        %v3100 = vadd.f32 %v3068, %v2637
        %v3101 = vadd.f32 %v3069, %v2653
        %v3102 = vadd.f32 %v3070, %v2669
        %v3103 = vadd.f32 %v3071, %v2685
        %v3104 = vadd.f32 %v3072, %v2190
        %v3105 = vadd.f32 %v3073, %v2206
        %v3106 = vadd.f32 %v3074, %v2222
        %v3107 = vadd.f32 %v3075, %v2238
        %v3108 = vadd.f32 %v3076, %v2254
        %v3109 = vadd.f32 %v3077, %v2270
        %v3110 = vadd.f32 %v3078, %v2286
        %v3111 = vadd.f32 %v3079, %v2302
        %v3112 = vadd.f32 %v3080, %v2318
        %v3113 = vadd.f32 %v3081, %v2334
        %v3114 = vadd.f32 %v3082, %v2350
        %v3115 = vadd.f32 %v3083, %v2366
        %v3116 = vadd.f32 %v3084, %v2382
        %v3117 = vadd.f32 %v3085, %v2398
        %v3118 = vadd.f32 %v3086, %v2414
        %v3119 = vadd.f32 %v3087, %v2430
        %v3120 = vadd.f32 %v3088, %v2446
        %v3121 = vadd.f32 %v3089, %v2462
        %v3122 = vadd.f32 %v3090, %v2478
        %v3123 = vadd.f32 %v3091, %v2494
        %v3124 = vadd.f32 %v3092, %v2510
        %v3125 = vadd.f32 %v3093, %v2526
        %v3126 = vadd.f32 %v3094, %v2542
        %v3127 = vadd.f32 %v3095, %v2558
        %v3128 = vadd.f32 %v3096, %v2574
        %v3129 = vadd.f32 %v3097, %v2590
        %v3130 = vadd.f32 %v3098, %v2606
        %v3131 = vadd.f32 %v3099, %v2622
        %v3132 = vadd.f32 %v3100, %v2638
        %v3133 = vadd.f32 %v3101, %v2654
        %v3134 = vadd.f32 %v3102, %v2670
        %v3135 = vadd.f32 %v3103, %v2686
        %v3136 = vadd.f32 %v3104, %v2191
        %v3137 = vadd.f32 %v3105, %v2207
        %v3138 = vadd.f32 %v3106, %v2223
        %v3139 = vadd.f32 %v3107, %v2239
        %v3140 = vadd.f32 %v3108, %v2255
        %v3141 = vadd.f32 %v3109, %v2271
        %v3142 = vadd.f32 %v3110, %v2287
        %v3143 = vadd.f32 %v3111, %v2303
        %v3144 = vadd.f32 %v3112, %v2319
        %v3145 = vadd.f32 %v3113, %v2335
        %v3146 = vadd.f32 %v3114, %v2351
        %v3147 = vadd.f32 %v3115, %v2367
        %v3148 = vadd.f32 %v3116, %v2383
        %v3149 = vadd.f32 %v3117, %v2399
        %v3150 = vadd.f32 %v3118, %v2415
        %v3151 = vadd.f32 %v3119, %v2431
        %v3152 = vadd.f32 %v3120, %v2447
        %v3153 = vadd.f32 %v3121, %v2463
        %v3154 = vadd.f32 %v3122, %v2479
        %v3155 = vadd.f32 %v3123, %v2495
        %v3156 = vadd.f32 %v3124, %v2511
        %v3157 = vadd.f32 %v3125, %v2527
        %v3158 = vadd.f32 %v3126, %v2543
        %v3159 = vadd.f32 %v3127, %v2559
        %v3160 = vadd.f32 %v3128, %v2575
        %v3161 = vadd.f32 %v3129, %v2591
        %v3162 = vadd.f32 %v3130, %v2607
        %v3163 = vadd.f32 %v3131, %v2623
        %v3164 = vadd.f32 %v3132, %v2639
        %v3165 = vadd.f32 %v3133, %v2655
        %v3166 = vadd.f32 %v3134, %v2671
        %v3167 = vadd.f32 %v3135, %v2687
        %v3168 = vld [vmem:[%s230] sm:$0xff]
        %v3169 = vld [vmem:[%s230 + $0x8] sm:$0xff]
        %v3170 = vld [vmem:[%s230 + $0x10] sm:$0xff]
        %v3171 = vld [vmem:[%s230 + $0x18] sm:$0xff]
        %v3172 = vld [vmem:[%s230 + $0x20] sm:$0xff]
        %v3173 = vld [vmem:[%s230 + $0x28] sm:$0xff]
        %v3174 = vld [vmem:[%s230 + $0x30] sm:$0xff]
        %v3175 = vld [vmem:[%s230 + $0x38] sm:$0xff]
        %v3176 = vld [vmem:[%s230 + $0x40] sm:$0xff]
        %v3177 = vld [vmem:[%s230 + $0x48] sm:$0xff]
        %v3178 = vld [vmem:[%s230 + $0x50] sm:$0xff]
        %v3179 = vld [vmem:[%s230 + $0x58] sm:$0xff]
        %v3180 = vld [vmem:[%s230 + $0x60] sm:$0xff]
        %v3181 = vld [vmem:[%s230 + $0x68] sm:$0xff]
        %v3182 = vld [vmem:[%s230 + $0x70] sm:$0xff]
        %v3183 = vld [vmem:[%s230 + $0x78] sm:$0xff]
        %v3184 = vld [vmem:[%s230 + $0x80] sm:$0xff]
        %v3185 = vld [vmem:[%s230 + $0x88] sm:$0xff]
        %v3186 = vld [vmem:[%s230 + $0x90] sm:$0xff]
        %v3187 = vld [vmem:[%s230 + $0x98] sm:$0xff]
        %v3188 = vld [vmem:[%s230 + $0xa0] sm:$0xff]
        %v3189 = vld [vmem:[%s230 + $0xa8] sm:$0xff]
        %v3190 = vld [vmem:[%s230 + $0xb0] sm:$0xff]
        %v3191 = vld [vmem:[%s230 + $0xb8] sm:$0xff]
        %v3192 = vld [vmem:[%s230 + $0xc0] sm:$0xff]
        %v3193 = vld [vmem:[%s230 + $0xc8] sm:$0xff]
        %v3194 = vld [vmem:[%s230 + $0xd0] sm:$0xff]
        %v3195 = vld [vmem:[%s230 + $0xd8] sm:$0xff]
        %v3196 = vld [vmem:[%s230 + $0xe0] sm:$0xff]
        %v3197 = vld [vmem:[%s230 + $0xe8] sm:$0xff]
        %v3198 = vld [vmem:[%s230 + $0xf0] sm:$0xff]
        %v3199 = vld [vmem:[%s230 + $0xf8] sm:$0xff]
        %v3200 = vadd.f32 %v3168, %v3136
        %v3201 = vadd.f32 %v3169, %v3137
        %v3202 = vadd.f32 %v3170, %v3138
        %v3203 = vadd.f32 %v3171, %v3139
        %v3204 = vadd.f32 %v3172, %v3140
        %v3205 = vadd.f32 %v3173, %v3141
        %v3206 = vadd.f32 %v3174, %v3142
        %v3207 = vadd.f32 %v3175, %v3143
        %v3208 = vadd.f32 %v3176, %v3144
        %v3209 = vadd.f32 %v3177, %v3145
        %v3210 = vadd.f32 %v3178, %v3146
        %v3211 = vadd.f32 %v3179, %v3147
        %v3212 = vadd.f32 %v3180, %v3148
        %v3213 = vadd.f32 %v3181, %v3149
        %v3214 = vadd.f32 %v3182, %v3150
        %v3215 = vadd.f32 %v3183, %v3151
        %v3216 = vadd.f32 %v3184, %v3152
        %v3217 = vadd.f32 %v3185, %v3153
        %v3218 = vadd.f32 %v3186, %v3154
        %v3219 = vadd.f32 %v3187, %v3155
        %v3220 = vadd.f32 %v3188, %v3156
        %v3221 = vadd.f32 %v3189, %v3157
        %v3222 = vadd.f32 %v3190, %v3158
        %v3223 = vadd.f32 %v3191, %v3159
        %v3224 = vadd.f32 %v3192, %v3160
        %v3225 = vadd.f32 %v3193, %v3161
        %v3226 = vadd.f32 %v3194, %v3162
        %v3227 = vadd.f32 %v3195, %v3163
        %v3228 = vadd.f32 %v3196, %v3164
        %v3229 = vadd.f32 %v3197, %v3165
        %v3230 = vadd.f32 %v3198, %v3166
        %v3231 = vadd.f32 %v3199, %v3167
        %3232 = vst [vmem:[%s230] sm:$0xff] %v3200
        %3233 = vst [vmem:[%s230 + $0x8] sm:$0xff] %v3201
        %3234 = vst [vmem:[%s230 + $0x10] sm:$0xff] %v3202
        %3235 = vst [vmem:[%s230 + $0x18] sm:$0xff] %v3203
        %3236 = vst [vmem:[%s230 + $0x20] sm:$0xff] %v3204
        %3237 = vst [vmem:[%s230 + $0x28] sm:$0xff] %v3205
        %3238 = vst [vmem:[%s230 + $0x30] sm:$0xff] %v3206
        %3239 = vst [vmem:[%s230 + $0x38] sm:$0xff] %v3207
        %3240 = vst [vmem:[%s230 + $0x40] sm:$0xff] %v3208
        %3241 = vst [vmem:[%s230 + $0x48] sm:$0xff] %v3209
        %3242 = vst [vmem:[%s230 + $0x50] sm:$0xff] %v3210
        %3243 = vst [vmem:[%s230 + $0x58] sm:$0xff] %v3211
        %3244 = vst [vmem:[%s230 + $0x60] sm:$0xff] %v3212
        %3245 = vst [vmem:[%s230 + $0x68] sm:$0xff] %v3213
        %3246 = vst [vmem:[%s230 + $0x70] sm:$0xff] %v3214
        %3247 = vst [vmem:[%s230 + $0x78] sm:$0xff] %v3215
        %3248 = vst [vmem:[%s230 + $0x80] sm:$0xff] %v3216
        %3249 = vst [vmem:[%s230 + $0x88] sm:$0xff] %v3217
        %3250 = vst [vmem:[%s230 + $0x90] sm:$0xff] %v3218
        %3251 = vst [vmem:[%s230 + $0x98] sm:$0xff] %v3219
        %3252 = vst [vmem:[%s230 + $0xa0] sm:$0xff] %v3220
        %3253 = vst [vmem:[%s230 + $0xa8] sm:$0xff] %v3221
        %3254 = vst [vmem:[%s230 + $0xb0] sm:$0xff] %v3222
        %3255 = vst [vmem:[%s230 + $0xb8] sm:$0xff] %v3223
        %3256 = vst [vmem:[%s230 + $0xc0] sm:$0xff] %v3224
        %3257 = vst [vmem:[%s230 + $0xc8] sm:$0xff] %v3225
        %3258 = vst [vmem:[%s230 + $0xd0] sm:$0xff] %v3226
        %3259 = vst [vmem:[%s230 + $0xd8] sm:$0xff] %v3227
        %3260 = vst [vmem:[%s230 + $0xe0] sm:$0xff] %v3228
        %3261 = vst [vmem:[%s230 + $0xe8] sm:$0xff] %v3229
        %3262 = vst [vmem:[%s230 + $0xf0] sm:$0xff] %v3230
        %3263 = vst [vmem:[%s230 + $0xf8] sm:$0xff] %v3231
        %s3264 = sand.u32 %s117, 1
        %s3265 = scalar_lea.sflag [#allocation4], %s3264
        %s3266 = sand.u32 %s117, 1
        %s3267 = smul.addr %s3266, 256
        %s3268 = scalar_lea.vmem [#allocation5], %s3267
        // Predicated region
        $region41: #{tpu_custom_call.1} parent=31 // pred_check
          %p3269 = pneg %p127
        $region42: #{tpu_custom_call.1} parent=31 // pred_check_branch
          %3271 = sbr.rel (%p3269) target = $region44
        $region43: #{tpu_custom_call.1} parent=31 // pred_region
          %3273 = vsyncadd %s3265, 0
          %s3274 = smul.addr %s24, 32
          %s3275 = smul.addr %s3274, 8
          %s3276 = scalar_lea.hbm %s3, %s3275
          %s3277 = sshll.u32 %s3268, 4
          %s3278 = int_to_ptr.vmem [resolvable:$true] %s3277
          %s3279 = sshll.u32 %s3276, 4
          %s3280 = int_to_ptr.hbm [resolvable:$true] %s3279
          %3285 = dma.vmem_to_hbm [thread:$0]  %s3278, 4096, %s3280, %s3265, 128, 128, 8
        $region44: #{tpu_custom_call.1} parent=31 // pred_fallthru
          _
      $region32: #{tpu_custom_call.1} parent=5 // pred_fallthru
        _
      %p3286 = scmp.le.s32.totalorder 2, %s15
      // Predicated region
      $region45: #{tpu_custom_call.1} parent=5 // pred_check
        %p3287 = pneg %p3286
      $region46: #{tpu_custom_call.1} parent=5 // pred_check_branch
        %3289 = sbr.rel (%p3287) target = $region48
      $region47: #{tpu_custom_call.1} parent=5 // pred_region
        %s3290 = ssub.s32 %s15, 2
        // Predicated region
        $region49: #{tpu_custom_call.1} parent=47 // pred_check
          %p3291 = pneg %p133
        $region50: #{tpu_custom_call.1} parent=47 // pred_check_branch
          %3293 = sbr.rel (%p3291) target = $region52
        $region51: #{tpu_custom_call.1} parent=47 // pred_region
          %s3294 = sand.u32 %s118, 1
          %s3295 = scalar_lea.sflag [#allocation4], %s3294
          %s3296 = sand.u32 %s118, 1
          %s3297 = smul.addr %s3296, 256
          %s3298 = scalar_lea.vmem [#allocation5], %s3297
          %3300 = dma.done %s3295, 4096
        $region52: #{tpu_custom_call.1} parent=47 // pred_fallthru
          _
      $region48: #{tpu_custom_call.1} parent=5 // pred_fallthru
        _
    $region6: #{tpu_custom_call.1} parent=1 // loop_footer
      %s19 = sadd.s32 1, %s15
    $region7: #{tpu_custom_call.1} parent=1 // loop_footer_branch
      %14 = sbr.rel target = $region3
    $region8: #{tpu_custom_call.1} parent=1 // loop_exit
      _
    %3301 = vsyncpa [#allocation3], 1
    %s3302 = scalar_lea.sflag [#allocation3], 1
    %3303 = vsyncpa %s3302, 1
    %3304 = vsyncpa [#allocation4], 1
    %s3305 = scalar_lea.sflag [#allocation4], 1
    %3306 = vsyncpa %s3305, 1

</llo_original>
